<compile_context>
chip_gen: v7x
topology: tpu7x:2x2x1
jax: 0.10.0
libtpu: 0.0.40
codegen_flags: <defaults>
</compile_context>

<pallas_src>
import jax
import jax.numpy as jnp
from jax.experimental import pallas as pl
from jax.experimental.pallas import tpu as pltpu

EPS = 1e-5
LANES = 128


def _round_up(v, m):
    return (v + m - 1) // m * m


# --------------------------------------------------------------------------- #
# host-side weight re-layout                                                    #
# --------------------------------------------------------------------------- #
def _down_group_weights(w_down, kd_pad, ci_pad):
    """w_down: [inner, cin, 4, 4] (OIHW).  Conv2d(k4,s2,p1) on the space-to-
    depth input z decomposes into 4 tap-group matmuls (by, bx in {0,1}).
    Returns [4, kd_pad, ci_pad]; K index = (ry*2+rx)*cin + c matches z's
    channel packing."""
    inner, cin = w_down.shape[0], w_down.shape[1]
    w = w_down.reshape(inner, cin, 2, 2, 2, 2)          # [f, c, by, ry, bx, rx]
    w = jnp.transpose(w, (2, 4, 3, 5, 1, 0))            # [by, bx, ry, rx, c, f]
    w = w.reshape(4, 4 * cin, inner)
    w = jnp.pad(w, ((0, 0), (0, kd_pad - 4 * cin), (0, ci_pad - inner)))
    return w.astype(jnp.bfloat16)


def _up_phase_tap_weights(w_up, ci_pad, co_pad):
    """w_up: [inner, outer, 4, 4] (PyTorch ConvTranspose2d layout).
    Output phase (r, c), tap (dy, dx) uses w_up[:, :, 3-r-2*dy, 3-c-2*dx].
    Returns [16, ci_pad, co_pad] with index (r*2+c)*4 + dy*2+dx."""
    inner, outer = w_up.shape[0], w_up.shape[1]
    mats = []
    for r in range(2):
        for c in range(2):
            for dy in range(2):
                for dx in range(2):
                    mats.append(w_up[:, :, 3 - r - 2 * dy, 3 - c - 2 * dx])
    w = jnp.stack(mats, axis=0)                          # [16, inner, outer]
    w = jnp.pad(w, ((0, 0), (0, ci_pad - inner), (0, co_pad - outer)))
    return w.astype(jnp.bfloat16)


# --------------------------------------------------------------------------- #
# fused per-image kernel                                                        #
# --------------------------------------------------------------------------- #
def _unet_inner_kernel(z_ref, wd_ref, wu_ref, t_ref, s_ref, upad_ref):
    """Per image:
         d = Conv2d(k4,s2,p1)(LeakyReLU(x))   (4 tap-group matmuls on z)
         u = ReLU(d)                           (VMEM only, never hits HBM)
         t = ConvT2d(k4,s2,p1)(u)              (4 phases x 4 tap matmuls)
       + per-image BatchNorm partial sums taken from the f32 accumulator.

    z_ref   : (ho+1, wo+1, kd)  bf16  space-to-depth of padded LeakyReLU(x)
    wd_ref  : (4, kd, ci)       bf16  down-conv tap-group weights
    wu_ref  : (16, ci, co)      bf16  up-conv (phase, tap) weights
    t_ref   : (4, ho*wo, co)    bf16  OUT pre-BN up-conv output per phase
    s_ref   : (8, co)           f32   OUT row0 = sum(t), row1 = sum(t*t)
    upad_ref: (ho+2, wo+2, ci)  bf16  scratch: zero-padded u
    """
    ho = z_ref.shape[0] - 1
    wo = z_ref.shape[1] - 1
    kd = z_ref.shape[2]
    ci = wd_ref.shape[2]
    co = wu_ref.shape[2]
    m = ho * wo

    # ---- down path: 4 accumulated tap-group matmuls, ReLU fused ------------
    acc = jnp.zeros((m, ci), jnp.float32)
    for by in range(2):
        for bx in range(2):
            patch = z_ref[by:by + ho, bx:bx + wo, :].reshape(m, kd)
            acc = acc + jnp.dot(patch, wd_ref[2 * by + bx],
                                preferred_element_type=jnp.float32)
    u = jnp.maximum(acc, 0.0).astype(jnp.bfloat16)

    # stage ReLU(d) with a 1-pixel zero halo for the transposed-conv windows
    upad_ref[...] = jnp.zeros(upad_ref.shape, upad_ref.dtype)
    upad_ref[1:1 + ho, 1:1 + wo, :] = u.reshape(ho, wo, ci)

    # ---- up path: 4 output phases, each a 2x2 conv over u ------------------
    ssum = jnp.zeros((1, co), jnp.float32)
    ssq = jnp.zeros((1, co), jnp.float32)
    for p in range(4):
        r, c = p // 2, p % 2
        acc_t = jnp.zeros((m, co), jnp.float32)
        for tap in range(4):
            dy, dx = tap // 2, tap % 2
            win = upad_ref[r + dy:r + dy + ho, c + dx:c + dx + wo, :]
            acc_t = acc_t + jnp.dot(win.reshape(m, ci), wu_ref[4 * p + tap],
                                    preferred_element_type=jnp.float32)
        t_ref[p] = acc_t.astype(t_ref.dtype)             # bf16 to HBM
        ssum = ssum + jnp.sum(acc_t, axis=0, keepdims=True)
        ssq = ssq + jnp.sum(acc_t * acc_t, axis=0, keepdims=True)

    # lane-dense (8, co) partial-stat block (rows 2..7 unused)
    s_ref[...] = jnp.zeros(s_ref.shape, s_ref.dtype)
    s_ref[0:1, :] = ssum
    s_ref[1:2, :] = ssq


# --------------------------------------------------------------------------- #
# wrapper                                                                       #
# --------------------------------------------------------------------------- #
def unet_innermost_block(x, w_down, w_up, gamma, beta):
    """x: [N, Cin, H, W] f32; w_down: [inner, Cin, 4, 4] (OIHW);
       w_up: [inner, outer, 4, 4] (PyTorch ConvTranspose2d layout)."""
    n, cin, h, w = x.shape
    inner_nc = w_down.shape[0]
    outer_nc = w_up.shape[1]
    ho, wo = h // 2, w // 2
    m = ho * wo

    kd = _round_up(4 * cin, LANES)
    ci = _round_up(inner_nc, LANES)
    co = _round_up(outer_nc, LANES)
    # TODO(synk): on v6e/v7x, channel configs > 128 should round ci/co/kd up to
    # multiples of 256 to fill the 256x256 MXU (keep 128 on v5e).

    # ---- prologue (XLA, fused copies): NHWC, LeakyReLU, bf16, pad, s2d ------
    x_nhwc = jnp.transpose(x, (0, 2, 3, 1))
    x_act = jnp.where(x_nhwc >= 0, x_nhwc, 0.2 * x_nhwc).astype(jnp.bfloat16)
    x_pad = jnp.pad(x_act, ((0, 0), (1, 1), (1, 1), (0, 0)))
    z = x_pad.reshape(n, ho + 1, 2, wo + 1, 2, cin)
    z = jnp.transpose(z, (0, 1, 3, 2, 4, 5)).reshape(n, ho + 1, wo + 1, 4 * cin)
    z = jnp.pad(z, ((0, 0), (0, 0), (0, 0), (0, kd - 4 * cin)))

    wd = _down_group_weights(w_down, kd, ci)             # [4, kd, ci]
    wu = _up_phase_tap_weights(w_up, ci, co)             # [16, ci, co]

    # explicit scoped-VMEM budget: double-buffered blocks + scratch + slack
    need = (2 * ((ho + 1) * (wo + 1) * kd * 2 + 4 * kd * ci * 2
                 + 16 * ci * co * 2 + 4 * m * co * 2 + 8 * co * 4)
            + (ho + 2) * (wo + 2) * ci * 2 + (8 << 20))
    vmem_limit = int(min(max(need, 32 << 20), 64 << 20))

    t_all, partial = pl.pallas_call(
        _unet_inner_kernel,
        out_shape=(jax.ShapeDtypeStruct((n, 4, m, co), jnp.bfloat16),
                   jax.ShapeDtypeStruct((n, 8, co), jnp.float32)),
        grid=(n,),
        in_specs=[pl.BlockSpec((None, ho + 1, wo + 1, kd),
                               lambda i: (i, 0, 0, 0)),
                  pl.BlockSpec((4, kd, ci), lambda i: (0, 0, 0)),
                  pl.BlockSpec((16, ci, co), lambda i: (0, 0, 0))],
        out_specs=(pl.BlockSpec((None, 4, m, co), lambda i: (i, 0, 0, 0)),
                   pl.BlockSpec((None, 8, co), lambda i: (i, 0, 0))),
        scratch_shapes=[pltpu.VMEM((ho + 2, wo + 2, ci), jnp.bfloat16)],
        compiler_params=pltpu.CompilerParams(
            dimension_semantics=("parallel",),
            vmem_limit_bytes=vmem_limit),
    )(z, wd, wu)

    # ---- BatchNorm stats (training mode, biased var) from f32 partials ------
    cnt = jnp.float32(n * h * w)
    ssum = jnp.sum(partial[:, 0, :], axis=0)
    ssq = jnp.sum(partial[:, 1, :], axis=0)
    mean = ssum / cnt
    var = ssq / cnt - mean * mean
    gamma_p = jnp.pad(gamma.astype(jnp.float32), (0, co - outer_nc))
    beta_p = jnp.pad(beta.astype(jnp.float32), (0, co - outer_nc))
    scale = gamma_p * jax.lax.rsqrt(var + EPS)
    shift = beta_p - mean * scale

    # ---- epilogue (XLA): BN scale/shift fused into the single pixel-shuffle
    # transpose; NHWC skip concat; one NCHW transpose.
    # TODO(synk): the stride-2 phase interleave + channel concat are not
    # BlockSpec-expressible, so this one fused pass over y stays in XLA.
    t6 = t_all.reshape(n, 2, 2, ho, wo, co).astype(jnp.float32)
    y6 = t6 * scale + shift                              # (n, r, c, oy, ox, ch)
    y = jnp.transpose(y6, (0, 3, 1, 4, 2, 5)).reshape(n, h, w, co)
    y = y[..., :outer_nc]
    out_nhwc = jnp.concatenate([x_nhwc, y], axis=-1)
    return jnp.transpose(out_nhwc, (0, 3, 1, 2))         # NCHW


# --------------------------------------------------------------------------- #
# pure-JAX reference (f32, lax convs)                                           #
# --------------------------------------------------------------------------- #
def _reference(x, w_down, w_up, gamma, beta):
    hp = jnp.where(x >= 0, x, 0.2 * x)
    d = jax.lax.conv_general_dilated(
        hp, w_down, window_strides=(2, 2), padding=((1, 1), (1, 1)),
        dimension_numbers=("NCHW", "OIHW", "NCHW"),
        precision=jax.lax.Precision.HIGHEST)
    u = jnp.maximum(d, 0.0)
    w_up_conv = jnp.flip(jnp.transpose(w_up, (1, 0, 2, 3)), axis=(2, 3))
    t = jax.lax.conv_general_dilated(
        u, w_up_conv, window_strides=(1, 1), padding=((2, 2), (2, 2)),
        lhs_dilation=(2, 2), dimension_numbers=("NCHW", "OIHW", "NCHW"),
        precision=jax.lax.Precision.HIGHEST)
    mean = jnp.mean(t, axis=(0, 2, 3), keepdims=True)
    var = jnp.mean((t - mean) ** 2, axis=(0, 2, 3), keepdims=True)
    y = (t - mean) * jax.lax.rsqrt(var + EPS)
    y = y * gamma.reshape(1, -1, 1, 1) + beta.reshape(1, -1, 1, 1)
    return jnp.concatenate([x, y], axis=1)


if __name__ == "__main__":
    # TODO(synk): outermost / middle variants need an external `submodule`
    # (plus Tanh / Dropout); only the self-contained innermost block is built.
    key = jax.random.PRNGKey(0)
    k0, k1, k2, k3, k4 = jax.random.split(key, 5)
    N, outer_nc, inner_nc, H, W = 2, 4, 8, 16, 16

    x = jax.random.normal(k0, (N, outer_nc, H, W), jnp.float32)
    w_down = 0.1 * jax.random.normal(k1, (inner_nc, outer_nc, 4, 4), jnp.float32)
    w_up = 0.1 * jax.random.normal(k2, (inner_nc, outer_nc, 4, 4), jnp.float32)
    gamma = 1.0 + 0.1 * jax.random.normal(k3, (outer_nc,), jnp.float32)
    beta = 0.1 * jax.random.normal(k4, (outer_nc,), jnp.float32)

    out = jax.jit(unet_innermost_block)(x, w_down, w_up, gamma, beta)
    out = jax.block_until_ready(out)

    ref = _reference(x, w_down, w_up, gamma, beta)
    assert out.shape == (N, 2 * outer_nc, H, W), out.shape
    max_err = float(jnp.max(jnp.abs(out - ref)))
    # bf16 MXU inputs, bf16-staged u and t, f32 accumulation -> loose but
    # bug-catching tolerance.
    assert jnp.allclose(out, ref, atol=1e-1, rtol=1e-1), max_err
    print("KERNEL_OK")
</pallas_src>

<mosaic_0001>
module attributes {stable_mosaic.version = 11 : i64} {
  func.func @_unet_inner_kernel(%arg0: i32, %arg1: memref<1x9x9x128xbf16, #tpu.memory_space<vmem>>, %arg2: memref<4x128x128xbf16, #tpu.memory_space<vmem>>, %arg3: memref<16x128x128xbf16, #tpu.memory_space<vmem>>, %arg4: memref<1x4x64x128xbf16, #tpu.memory_space<vmem>>, %arg5: memref<1x8x128xf32, #tpu.memory_space<vmem>>, %arg6: memref<10x10x128xbf16, #tpu.memory_space<vmem>>) attributes {dimension_semantics = [#tpu.dimension_semantics<parallel>], iteration_bounds = array<i64: 2>, scalar_prefetch = 0 : i64, scratch_operands = 1 : i64, tpu.core_type = #tpu.core_type<tc>, window_params = [{transform_indices = @transform_0, window_bounds = array<i64: 1, 9, 9, 128>}, {pipeline_mode = #tpu.pipeline_mode<synchronous>, transform_indices = @transform_1, window_bounds = array<i64: 4, 128, 128>}, {pipeline_mode = #tpu.pipeline_mode<synchronous>, transform_indices = @transform_2, window_bounds = array<i64: 16, 128, 128>}, {transform_indices = @transform_3, window_bounds = array<i64: 1, 4, 64, 128>}, {transform_indices = @transform_4, window_bounds = array<i64: 1, 8, 128>}]} {
    %cst = arith.constant 0.000000e+00 : f32
    %0 = vector.broadcast %cst : f32 to vector<64x128xf32>
    %c0 = arith.constant 0 : index
    %c0_0 = arith.constant 0 : index
    %c0_1 = arith.constant 0 : index
    %c0_2 = arith.constant 0 : index
    %1 = vector.load %arg1[%c0, %c0_0, %c0_1, %c0_2] : memref<1x9x9x128xbf16, #tpu.memory_space<vmem>>, vector<1x8x8x128xbf16>
    %2 = vector.shape_cast %1 : vector<1x8x8x128xbf16> to vector<8x8x128xbf16>
    %3 = vector.shape_cast %2 : vector<8x8x128xbf16> to vector<64x128xbf16>
    %c0_3 = arith.constant 0 : index
    %c0_4 = arith.constant 0 : index
    %c0_5 = arith.constant 0 : index
    %4 = vector.load %arg2[%c0_3, %c0_4, %c0_5] : memref<4x128x128xbf16, #tpu.memory_space<vmem>>, vector<1x128x128xbf16>
    %5 = vector.shape_cast %4 : vector<1x128x128xbf16> to vector<128x128xbf16>
    %cst_6 = arith.constant dense<0.000000e+00> : vector<64x128xf32>
    %6 = tpu.matmul %3, %5, %cst_6 {dimension_numbers = #tpu.dot_dimension_numbers<[1], [0], [0], [1], [0, 0, 1, 1], [], []>} : vector<64x128xbf16>, vector<128x128xbf16>, vector<64x128xf32> -> vector<64x128xf32>
    %7 = arith.addf %0, %6 : vector<64x128xf32>
    %c0_7 = arith.constant 0 : index
    %c0_8 = arith.constant 0 : index
    %c1 = arith.constant 1 : index
    %c0_9 = arith.constant 0 : index
    %8 = vector.load %arg1[%c0_7, %c0_8, %c1, %c0_9] : memref<1x9x9x128xbf16, #tpu.memory_space<vmem>>, vector<1x8x8x128xbf16>
    %9 = vector.shape_cast %8 : vector<1x8x8x128xbf16> to vector<8x8x128xbf16>
    %10 = vector.shape_cast %9 : vector<8x8x128xbf16> to vector<64x128xbf16>
    %c1_10 = arith.constant 1 : index
    %c0_11 = arith.constant 0 : index
    %c0_12 = arith.constant 0 : index
    %11 = vector.load %arg2[%c1_10, %c0_11, %c0_12] : memref<4x128x128xbf16, #tpu.memory_space<vmem>>, vector<1x128x128xbf16>
    %12 = vector.shape_cast %11 : vector<1x128x128xbf16> to vector<128x128xbf16>
    %cst_13 = arith.constant dense<0.000000e+00> : vector<64x128xf32>
    %13 = tpu.matmul %10, %12, %cst_13 {dimension_numbers = #tpu.dot_dimension_numbers<[1], [0], [0], [1], [0, 0, 1, 1], [], []>} : vector<64x128xbf16>, vector<128x128xbf16>, vector<64x128xf32> -> vector<64x128xf32>
    %14 = arith.addf %7, %13 : vector<64x128xf32>
    %c0_14 = arith.constant 0 : index
    %c1_15 = arith.constant 1 : index
    %c0_16 = arith.constant 0 : index
    %c0_17 = arith.constant 0 : index
    %15 = vector.load %arg1[%c0_14, %c1_15, %c0_16, %c0_17] : memref<1x9x9x128xbf16, #tpu.memory_space<vmem>>, vector<1x8x8x128xbf16>
    %16 = vector.shape_cast %15 : vector<1x8x8x128xbf16> to vector<8x8x128xbf16>
    %17 = vector.shape_cast %16 : vector<8x8x128xbf16> to vector<64x128xbf16>
    %c2 = arith.constant 2 : index
    %c0_18 = arith.constant 0 : index
    %c0_19 = arith.constant 0 : index
    %18 = vector.load %arg2[%c2, %c0_18, %c0_19] : memref<4x128x128xbf16, #tpu.memory_space<vmem>>, vector<1x128x128xbf16>
    %19 = vector.shape_cast %18 : vector<1x128x128xbf16> to vector<128x128xbf16>
    %cst_20 = arith.constant dense<0.000000e+00> : vector<64x128xf32>
    %20 = tpu.matmul %17, %19, %cst_20 {dimension_numbers = #tpu.dot_dimension_numbers<[1], [0], [0], [1], [0, 0, 1, 1], [], []>} : vector<64x128xbf16>, vector<128x128xbf16>, vector<64x128xf32> -> vector<64x128xf32>
    %21 = arith.addf %14, %20 : vector<64x128xf32>
    %c0_21 = arith.constant 0 : index
    %c1_22 = arith.constant 1 : index
    %c1_23 = arith.constant 1 : index
    %c0_24 = arith.constant 0 : index
    %22 = vector.load %arg1[%c0_21, %c1_22, %c1_23, %c0_24] : memref<1x9x9x128xbf16, #tpu.memory_space<vmem>>, vector<1x8x8x128xbf16>
    %23 = vector.shape_cast %22 : vector<1x8x8x128xbf16> to vector<8x8x128xbf16>
    %24 = vector.shape_cast %23 : vector<8x8x128xbf16> to vector<64x128xbf16>
    %c3 = arith.constant 3 : index
    %c0_25 = arith.constant 0 : index
    %c0_26 = arith.constant 0 : index
    %25 = vector.load %arg2[%c3, %c0_25, %c0_26] : memref<4x128x128xbf16, #tpu.memory_space<vmem>>, vector<1x128x128xbf16>
    %26 = vector.shape_cast %25 : vector<1x128x128xbf16> to vector<128x128xbf16>
    %cst_27 = arith.constant dense<0.000000e+00> : vector<64x128xf32>
    %27 = tpu.matmul %24, %26, %cst_27 {dimension_numbers = #tpu.dot_dimension_numbers<[1], [0], [0], [1], [0, 0, 1, 1], [], []>} : vector<64x128xbf16>, vector<128x128xbf16>, vector<64x128xf32> -> vector<64x128xf32>
    %28 = arith.addf %21, %27 : vector<64x128xf32>
    %cst_28 = arith.constant 0.000000e+00 : f32
    %29 = vector.broadcast %cst_28 : f32 to vector<64x128xf32>
    %30 = arith.maximumf %28, %29 : vector<64x128xf32>
    %31 = arith.truncf %30 : vector<64x128xf32> to vector<64x128xbf16>
    %cst_29 = arith.constant 0.000000e+00 : bf16
    %32 = vector.broadcast %cst_29 : bf16 to vector<10x10x128xbf16>
    %c0_30 = arith.constant 0 : index
    %c0_31 = arith.constant 0 : index
    %c0_32 = arith.constant 0 : index
    %33 = vector.load %arg6[%c0_30, %c0_31, %c0_32] : memref<10x10x128xbf16, #tpu.memory_space<vmem>>, vector<10x10x128xbf16>
    tpu.vector_store %arg6[%c0_30, %c0_31, %c0_32], %32 {strides = array<i32>} : memref<10x10x128xbf16, #tpu.memory_space<vmem>>, vector<10x10x128xbf16>,
    %34 = vector.shape_cast %31 : vector<64x128xbf16> to vector<8x8x128xbf16>
    %c1_33 = arith.constant 1 : index
    %c1_34 = arith.constant 1 : index
    %c0_35 = arith.constant 0 : index
    %35 = vector.load %arg6[%c1_33, %c1_34, %c0_35] : memref<10x10x128xbf16, #tpu.memory_space<vmem>>, vector<8x8x128xbf16>
    tpu.vector_store %arg6[%c1_33, %c1_34, %c0_35], %34 {strides = array<i32>} : memref<10x10x128xbf16, #tpu.memory_space<vmem>>, vector<8x8x128xbf16>,
    %cst_36 = arith.constant 0.000000e+00 : f32
    %36 = vector.broadcast %cst_36 : f32 to vector<1x128xf32>
    %cst_37 = arith.constant 0.000000e+00 : f32
    %37 = vector.broadcast %cst_37 : f32 to vector<1x128xf32>
    %cst_38 = arith.constant 0.000000e+00 : f32
    %38 = vector.broadcast %cst_38 : f32 to vector<64x128xf32>
    %c0_39 = arith.constant 0 : index
    %c0_40 = arith.constant 0 : index
    %c0_41 = arith.constant 0 : index
    %39 = vector.load %arg6[%c0_39, %c0_40, %c0_41] : memref<10x10x128xbf16, #tpu.memory_space<vmem>>, vector<8x8x128xbf16>
    %40 = vector.shape_cast %39 : vector<8x8x128xbf16> to vector<64x128xbf16>
    %c0_42 = arith.constant 0 : index
    %c0_43 = arith.constant 0 : index
    %c0_44 = arith.constant 0 : index
    %41 = vector.load %arg3[%c0_42, %c0_43, %c0_44] : memref<16x128x128xbf16, #tpu.memory_space<vmem>>, vector<1x128x128xbf16>
    %42 = vector.shape_cast %41 : vector<1x128x128xbf16> to vector<128x128xbf16>
    %cst_45 = arith.constant dense<0.000000e+00> : vector<64x128xf32>
    %43 = tpu.matmul %40, %42, %cst_45 {dimension_numbers = #tpu.dot_dimension_numbers<[1], [0], [0], [1], [0, 0, 1, 1], [], []>} : vector<64x128xbf16>, vector<128x128xbf16>, vector<64x128xf32> -> vector<64x128xf32>
    %44 = arith.addf %38, %43 : vector<64x128xf32>
    %c0_46 = arith.constant 0 : index
    %c1_47 = arith.constant 1 : index
    %c0_48 = arith.constant 0 : index
    %45 = vector.load %arg6[%c0_46, %c1_47, %c0_48] : memref<10x10x128xbf16, #tpu.memory_space<vmem>>, vector<8x8x128xbf16>
    %46 = vector.shape_cast %45 : vector<8x8x128xbf16> to vector<64x128xbf16>
    %c1_49 = arith.constant 1 : index
    %c0_50 = arith.constant 0 : index
    %c0_51 = arith.constant 0 : index
    %47 = vector.load %arg3[%c1_49, %c0_50, %c0_51] : memref<16x128x128xbf16, #tpu.memory_space<vmem>>, vector<1x128x128xbf16>
    %48 = vector.shape_cast %47 : vector<1x128x128xbf16> to vector<128x128xbf16>
    %cst_52 = arith.constant dense<0.000000e+00> : vector<64x128xf32>
    %49 = tpu.matmul %46, %48, %cst_52 {dimension_numbers = #tpu.dot_dimension_numbers<[1], [0], [0], [1], [0, 0, 1, 1], [], []>} : vector<64x128xbf16>, vector<128x128xbf16>, vector<64x128xf32> -> vector<64x128xf32>
    %50 = arith.addf %44, %49 : vector<64x128xf32>
    %c1_53 = arith.constant 1 : index
    %c0_54 = arith.constant 0 : index
    %c0_55 = arith.constant 0 : index
    %51 = vector.load %arg6[%c1_53, %c0_54, %c0_55] : memref<10x10x128xbf16, #tpu.memory_space<vmem>>, vector<8x8x128xbf16>
    %52 = vector.shape_cast %51 : vector<8x8x128xbf16> to vector<64x128xbf16>
    %c2_56 = arith.constant 2 : index
    %c0_57 = arith.constant 0 : index
    %c0_58 = arith.constant 0 : index
    %53 = vector.load %arg3[%c2_56, %c0_57, %c0_58] : memref<16x128x128xbf16, #tpu.memory_space<vmem>>, vector<1x128x128xbf16>
    %54 = vector.shape_cast %53 : vector<1x128x128xbf16> to vector<128x128xbf16>
    %cst_59 = arith.constant dense<0.000000e+00> : vector<64x128xf32>
    %55 = tpu.matmul %52, %54, %cst_59 {dimension_numbers = #tpu.dot_dimension_numbers<[1], [0], [0], [1], [0, 0, 1, 1], [], []>} : vector<64x128xbf16>, vector<128x128xbf16>, vector<64x128xf32> -> vector<64x128xf32>
    %56 = arith.addf %50, %55 : vector<64x128xf32>
    %c1_60 = arith.constant 1 : index
    %c1_61 = arith.constant 1 : index
    %c0_62 = arith.constant 0 : index
    %57 = vector.load %arg6[%c1_60, %c1_61, %c0_62] : memref<10x10x128xbf16, #tpu.memory_space<vmem>>, vector<8x8x128xbf16>
    %58 = vector.shape_cast %57 : vector<8x8x128xbf16> to vector<64x128xbf16>
    %c3_63 = arith.constant 3 : index
    %c0_64 = arith.constant 0 : index
    %c0_65 = arith.constant 0 : index
    %59 = vector.load %arg3[%c3_63, %c0_64, %c0_65] : memref<16x128x128xbf16, #tpu.memory_space<vmem>>, vector<1x128x128xbf16>
    %60 = vector.shape_cast %59 : vector<1x128x128xbf16> to vector<128x128xbf16>
    %cst_66 = arith.constant dense<0.000000e+00> : vector<64x128xf32>
    %61 = tpu.matmul %58, %60, %cst_66 {dimension_numbers = #tpu.dot_dimension_numbers<[1], [0], [0], [1], [0, 0, 1, 1], [], []>} : vector<64x128xbf16>, vector<128x128xbf16>, vector<64x128xf32> -> vector<64x128xf32>
    %62 = arith.addf %56, %61 : vector<64x128xf32>
    %63 = arith.truncf %62 : vector<64x128xf32> to vector<64x128xbf16>
    %c0_67 = arith.constant 0 : index
    %c0_68 = arith.constant 0 : index
    %c0_69 = arith.constant 0 : index
    %c0_70 = arith.constant 0 : index
    %64 = vector.load %arg4[%c0_67, %c0_68, %c0_69, %c0_70] : memref<1x4x64x128xbf16, #tpu.memory_space<vmem>>, vector<1x1x64x128xbf16>
    %65 = vector.shape_cast %64 : vector<1x1x64x128xbf16> to vector<64x128xbf16>
    %66 = vector.shape_cast %63 : vector<64x128xbf16> to vector<1x1x64x128xbf16>
    tpu.vector_store %arg4[%c0_67, %c0_68, %c0_69, %c0_70], %66 {strides = array<i32>} : memref<1x4x64x128xbf16, #tpu.memory_space<vmem>>, vector<1x1x64x128xbf16>,
    %cst_71 = arith.constant dense<0.000000e+00> : vector<128xf32>
    %67 = vector.multi_reduction <add>, %62, %cst_71 [0] : vector<64x128xf32> to vector<128xf32>
    %68 = vector.shape_cast %67 : vector<128xf32> to vector<1x128xf32>
    %69 = arith.addf %36, %68 : vector<1x128xf32>
    %70 = arith.mulf %62, %62 : vector<64x128xf32>
    %cst_72 = arith.constant dense<0.000000e+00> : vector<128xf32>
    %71 = vector.multi_reduction <add>, %70, %cst_72 [0] : vector<64x128xf32> to vector<128xf32>
    %72 = vector.shape_cast %71 : vector<128xf32> to vector<1x128xf32>
    %73 = arith.addf %37, %72 : vector<1x128xf32>
    %cst_73 = arith.constant 0.000000e+00 : f32
    %74 = vector.broadcast %cst_73 : f32 to vector<64x128xf32>
    %c0_74 = arith.constant 0 : index
    %c1_75 = arith.constant 1 : index
    %c0_76 = arith.constant 0 : index
    %75 = vector.load %arg6[%c0_74, %c1_75, %c0_76] : memref<10x10x128xbf16, #tpu.memory_space<vmem>>, vector<8x8x128xbf16>
    %76 = vector.shape_cast %75 : vector<8x8x128xbf16> to vector<64x128xbf16>
    %c4 = arith.constant 4 : index
    %c0_77 = arith.constant 0 : index
    %c0_78 = arith.constant 0 : index
    %77 = vector.load %arg3[%c4, %c0_77, %c0_78] : memref<16x128x128xbf16, #tpu.memory_space<vmem>>, vector<1x128x128xbf16>
    %78 = vector.shape_cast %77 : vector<1x128x128xbf16> to vector<128x128xbf16>
    %cst_79 = arith.constant dense<0.000000e+00> : vector<64x128xf32>
    %79 = tpu.matmul %76, %78, %cst_79 {dimension_numbers = #tpu.dot_dimension_numbers<[1], [0], [0], [1], [0, 0, 1, 1], [], []>} : vector<64x128xbf16>, vector<128x128xbf16>, vector<64x128xf32> -> vector<64x128xf32>
    %80 = arith.addf %74, %79 : vector<64x128xf32>
    %c0_80 = arith.constant 0 : index
    %c2_81 = arith.constant 2 : index
    %c0_82 = arith.constant 0 : index
    %81 = vector.load %arg6[%c0_80, %c2_81, %c0_82] : memref<10x10x128xbf16, #tpu.memory_space<vmem>>, vector<8x8x128xbf16>
    %82 = vector.shape_cast %81 : vector<8x8x128xbf16> to vector<64x128xbf16>
    %c5 = arith.constant 5 : index
    %c0_83 = arith.constant 0 : index
    %c0_84 = arith.constant 0 : index
    %83 = vector.load %arg3[%c5, %c0_83, %c0_84] : memref<16x128x128xbf16, #tpu.memory_space<vmem>>, vector<1x128x128xbf16>
    %84 = vector.shape_cast %83 : vector<1x128x128xbf16> to vector<128x128xbf16>
    %cst_85 = arith.constant dense<0.000000e+00> : vector<64x128xf32>
    %85 = tpu.matmul %82, %84, %cst_85 {dimension_numbers = #tpu.dot_dimension_numbers<[1], [0], [0], [1], [0, 0, 1, 1], [], []>} : vector<64x128xbf16>, vector<128x128xbf16>, vector<64x128xf32> -> vector<64x128xf32>
    %86 = arith.addf %80, %85 : vector<64x128xf32>
    %c1_86 = arith.constant 1 : index
    %c1_87 = arith.constant 1 : index
    %c0_88 = arith.constant 0 : index
    %87 = vector.load %arg6[%c1_86, %c1_87, %c0_88] : memref<10x10x128xbf16, #tpu.memory_space<vmem>>, vector<8x8x128xbf16>
    %88 = vector.shape_cast %87 : vector<8x8x128xbf16> to vector<64x128xbf16>
    %c6 = arith.constant 6 : index
    %c0_89 = arith.constant 0 : index
    %c0_90 = arith.constant 0 : index
    %89 = vector.load %arg3[%c6, %c0_89, %c0_90] : memref<16x128x128xbf16, #tpu.memory_space<vmem>>, vector<1x128x128xbf16>
    %90 = vector.shape_cast %89 : vector<1x128x128xbf16> to vector<128x128xbf16>
    %cst_91 = arith.constant dense<0.000000e+00> : vector<64x128xf32>
    %91 = tpu.matmul %88, %90, %cst_91 {dimension_numbers = #tpu.dot_dimension_numbers<[1], [0], [0], [1], [0, 0, 1, 1], [], []>} : vector<64x128xbf16>, vector<128x128xbf16>, vector<64x128xf32> -> vector<64x128xf32>
    %92 = arith.addf %86, %91 : vector<64x128xf32>
    %c1_92 = arith.constant 1 : index
    %c2_93 = arith.constant 2 : index
    %c0_94 = arith.constant 0 : index
    %93 = vector.load %arg6[%c1_92, %c2_93, %c0_94] : memref<10x10x128xbf16, #tpu.memory_space<vmem>>, vector<8x8x128xbf16>
    %94 = vector.shape_cast %93 : vector<8x8x128xbf16> to vector<64x128xbf16>
    %c7 = arith.constant 7 : index
    %c0_95 = arith.constant 0 : index
    %c0_96 = arith.constant 0 : index
    %95 = vector.load %arg3[%c7, %c0_95, %c0_96] : memref<16x128x128xbf16, #tpu.memory_space<vmem>>, vector<1x128x128xbf16>
    %96 = vector.shape_cast %95 : vector<1x128x128xbf16> to vector<128x128xbf16>
    %cst_97 = arith.constant dense<0.000000e+00> : vector<64x128xf32>
    %97 = tpu.matmul %94, %96, %cst_97 {dimension_numbers = #tpu.dot_dimension_numbers<[1], [0], [0], [1], [0, 0, 1, 1], [], []>} : vector<64x128xbf16>, vector<128x128xbf16>, vector<64x128xf32> -> vector<64x128xf32>
    %98 = arith.addf %92, %97 : vector<64x128xf32>
    %99 = arith.truncf %98 : vector<64x128xf32> to vector<64x128xbf16>
    %c0_98 = arith.constant 0 : index
    %c1_99 = arith.constant 1 : index
    %c0_100 = arith.constant 0 : index
    %c0_101 = arith.constant 0 : index
    %100 = vector.load %arg4[%c0_98, %c1_99, %c0_100, %c0_101] : memref<1x4x64x128xbf16, #tpu.memory_space<vmem>>, vector<1x1x64x128xbf16>
    %101 = vector.shape_cast %100 : vector<1x1x64x128xbf16> to vector<64x128xbf16>
    %102 = vector.shape_cast %99 : vector<64x128xbf16> to vector<1x1x64x128xbf16>
    tpu.vector_store %arg4[%c0_98, %c1_99, %c0_100, %c0_101], %102 {strides = array<i32>} : memref<1x4x64x128xbf16, #tpu.memory_space<vmem>>, vector<1x1x64x128xbf16>,
    %cst_102 = arith.constant dense<0.000000e+00> : vector<128xf32>
    %103 = vector.multi_reduction <add>, %98, %cst_102 [0] : vector<64x128xf32> to vector<128xf32>
    %104 = vector.shape_cast %103 : vector<128xf32> to vector<1x128xf32>
    %105 = arith.addf %69, %104 : vector<1x128xf32>
    %106 = arith.mulf %98, %98 : vector<64x128xf32>
    %cst_103 = arith.constant dense<0.000000e+00> : vector<128xf32>
    %107 = vector.multi_reduction <add>, %106, %cst_103 [0] : vector<64x128xf32> to vector<128xf32>
    %108 = vector.shape_cast %107 : vector<128xf32> to vector<1x128xf32>
    %109 = arith.addf %73, %108 : vector<1x128xf32>
    %cst_104 = arith.constant 0.000000e+00 : f32
    %110 = vector.broadcast %cst_104 : f32 to vector<64x128xf32>
    %c1_105 = arith.constant 1 : index
    %c0_106 = arith.constant 0 : index
    %c0_107 = arith.constant 0 : index
    %111 = vector.load %arg6[%c1_105, %c0_106, %c0_107] : memref<10x10x128xbf16, #tpu.memory_space<vmem>>, vector<8x8x128xbf16>
    %112 = vector.shape_cast %111 : vector<8x8x128xbf16> to vector<64x128xbf16>
    %c8 = arith.constant 8 : index
    %c0_108 = arith.constant 0 : index
    %c0_109 = arith.constant 0 : index
    %113 = vector.load %arg3[%c8, %c0_108, %c0_109] : memref<16x128x128xbf16, #tpu.memory_space<vmem>>, vector<1x128x128xbf16>
    %114 = vector.shape_cast %113 : vector<1x128x128xbf16> to vector<128x128xbf16>
    %cst_110 = arith.constant dense<0.000000e+00> : vector<64x128xf32>
    %115 = tpu.matmul %112, %114, %cst_110 {dimension_numbers = #tpu.dot_dimension_numbers<[1], [0], [0], [1], [0, 0, 1, 1], [], []>} : vector<64x128xbf16>, vector<128x128xbf16>, vector<64x128xf32> -> vector<64x128xf32>
    %116 = arith.addf %110, %115 : vector<64x128xf32>
    %c1_111 = arith.constant 1 : index
    %c1_112 = arith.constant 1 : index
    %c0_113 = arith.constant 0 : index
    %117 = vector.load %arg6[%c1_111, %c1_112, %c0_113] : memref<10x10x128xbf16, #tpu.memory_space<vmem>>, vector<8x8x128xbf16>
    %118 = vector.shape_cast %117 : vector<8x8x128xbf16> to vector<64x128xbf16>
    %c9 = arith.constant 9 : index
    %c0_114 = arith.constant 0 : index
    %c0_115 = arith.constant 0 : index
    %119 = vector.load %arg3[%c9, %c0_114, %c0_115] : memref<16x128x128xbf16, #tpu.memory_space<vmem>>, vector<1x128x128xbf16>
    %120 = vector.shape_cast %119 : vector<1x128x128xbf16> to vector<128x128xbf16>
    %cst_116 = arith.constant dense<0.000000e+00> : vector<64x128xf32>
    %121 = tpu.matmul %118, %120, %cst_116 {dimension_numbers = #tpu.dot_dimension_numbers<[1], [0], [0], [1], [0, 0, 1, 1], [], []>} : vector<64x128xbf16>, vector<128x128xbf16>, vector<64x128xf32> -> vector<64x128xf32>
    %122 = arith.addf %116, %121 : vector<64x128xf32>
    %c2_117 = arith.constant 2 : index
    %c0_118 = arith.constant 0 : index
    %c0_119 = arith.constant 0 : index
    %123 = vector.load %arg6[%c2_117, %c0_118, %c0_119] : memref<10x10x128xbf16, #tpu.memory_space<vmem>>, vector<8x8x128xbf16>
    %124 = vector.shape_cast %123 : vector<8x8x128xbf16> to vector<64x128xbf16>
    %c10 = arith.constant 10 : index
    %c0_120 = arith.constant 0 : index
    %c0_121 = arith.constant 0 : index
    %125 = vector.load %arg3[%c10, %c0_120, %c0_121] : memref<16x128x128xbf16, #tpu.memory_space<vmem>>, vector<1x128x128xbf16>
    %126 = vector.shape_cast %125 : vector<1x128x128xbf16> to vector<128x128xbf16>
    %cst_122 = arith.constant dense<0.000000e+00> : vector<64x128xf32>
    %127 = tpu.matmul %124, %126, %cst_122 {dimension_numbers = #tpu.dot_dimension_numbers<[1], [0], [0], [1], [0, 0, 1, 1], [], []>} : vector<64x128xbf16>, vector<128x128xbf16>, vector<64x128xf32> -> vector<64x128xf32>
    %128 = arith.addf %122, %127 : vector<64x128xf32>
    %c2_123 = arith.constant 2 : index
    %c1_124 = arith.constant 1 : index
    %c0_125 = arith.constant 0 : index
    %129 = vector.load %arg6[%c2_123, %c1_124, %c0_125] : memref<10x10x128xbf16, #tpu.memory_space<vmem>>, vector<8x8x128xbf16>
    %130 = vector.shape_cast %129 : vector<8x8x128xbf16> to vector<64x128xbf16>
    %c11 = arith.constant 11 : index
    %c0_126 = arith.constant 0 : index
    %c0_127 = arith.constant 0 : index
    %131 = vector.load %arg3[%c11, %c0_126, %c0_127] : memref<16x128x128xbf16, #tpu.memory_space<vmem>>, vector<1x128x128xbf16>
    %132 = vector.shape_cast %131 : vector<1x128x128xbf16> to vector<128x128xbf16>
    %cst_128 = arith.constant dense<0.000000e+00> : vector<64x128xf32>
    %133 = tpu.matmul %130, %132, %cst_128 {dimension_numbers = #tpu.dot_dimension_numbers<[1], [0], [0], [1], [0, 0, 1, 1], [], []>} : vector<64x128xbf16>, vector<128x128xbf16>, vector<64x128xf32> -> vector<64x128xf32>
    %134 = arith.addf %128, %133 : vector<64x128xf32>
    %135 = arith.truncf %134 : vector<64x128xf32> to vector<64x128xbf16>
    %c0_129 = arith.constant 0 : index
    %c2_130 = arith.constant 2 : index
    %c0_131 = arith.constant 0 : index
    %c0_132 = arith.constant 0 : index
    %136 = vector.load %arg4[%c0_129, %c2_130, %c0_131, %c0_132] : memref<1x4x64x128xbf16, #tpu.memory_space<vmem>>, vector<1x1x64x128xbf16>
    %137 = vector.shape_cast %136 : vector<1x1x64x128xbf16> to vector<64x128xbf16>
    %138 = vector.shape_cast %135 : vector<64x128xbf16> to vector<1x1x64x128xbf16>
    tpu.vector_store %arg4[%c0_129, %c2_130, %c0_131, %c0_132], %138 {strides = array<i32>} : memref<1x4x64x128xbf16, #tpu.memory_space<vmem>>, vector<1x1x64x128xbf16>,
    %cst_133 = arith.constant dense<0.000000e+00> : vector<128xf32>
    %139 = vector.multi_reduction <add>, %134, %cst_133 [0] : vector<64x128xf32> to vector<128xf32>
    %140 = vector.shape_cast %139 : vector<128xf32> to vector<1x128xf32>
    %141 = arith.addf %105, %140 : vector<1x128xf32>
    %142 = arith.mulf %134, %134 : vector<64x128xf32>
    %cst_134 = arith.constant dense<0.000000e+00> : vector<128xf32>
    %143 = vector.multi_reduction <add>, %142, %cst_134 [0] : vector<64x128xf32> to vector<128xf32>
    %144 = vector.shape_cast %143 : vector<128xf32> to vector<1x128xf32>
    %145 = arith.addf %109, %144 : vector<1x128xf32>
    %cst_135 = arith.constant 0.000000e+00 : f32
    %146 = vector.broadcast %cst_135 : f32 to vector<64x128xf32>
    %c1_136 = arith.constant 1 : index
    %c1_137 = arith.constant 1 : index
    %c0_138 = arith.constant 0 : index
    %147 = vector.load %arg6[%c1_136, %c1_137, %c0_138] : memref<10x10x128xbf16, #tpu.memory_space<vmem>>, vector<8x8x128xbf16>
    %148 = vector.shape_cast %147 : vector<8x8x128xbf16> to vector<64x128xbf16>
    %c12 = arith.constant 12 : index
    %c0_139 = arith.constant 0 : index
    %c0_140 = arith.constant 0 : index
    %149 = vector.load %arg3[%c12, %c0_139, %c0_140] : memref<16x128x128xbf16, #tpu.memory_space<vmem>>, vector<1x128x128xbf16>
    %150 = vector.shape_cast %149 : vector<1x128x128xbf16> to vector<128x128xbf16>
    %cst_141 = arith.constant dense<0.000000e+00> : vector<64x128xf32>
    %151 = tpu.matmul %148, %150, %cst_141 {dimension_numbers = #tpu.dot_dimension_numbers<[1], [0], [0], [1], [0, 0, 1, 1], [], []>} : vector<64x128xbf16>, vector<128x128xbf16>, vector<64x128xf32> -> vector<64x128xf32>
    %152 = arith.addf %146, %151 : vector<64x128xf32>
    %c1_142 = arith.constant 1 : index
    %c2_143 = arith.constant 2 : index
    %c0_144 = arith.constant 0 : index
    %153 = vector.load %arg6[%c1_142, %c2_143, %c0_144] : memref<10x10x128xbf16, #tpu.memory_space<vmem>>, vector<8x8x128xbf16>
    %154 = vector.shape_cast %153 : vector<8x8x128xbf16> to vector<64x128xbf16>
    %c13 = arith.constant 13 : index
    %c0_145 = arith.constant 0 : index
    %c0_146 = arith.constant 0 : index
    %155 = vector.load %arg3[%c13, %c0_145, %c0_146] : memref<16x128x128xbf16, #tpu.memory_space<vmem>>, vector<1x128x128xbf16>
    %156 = vector.shape_cast %155 : vector<1x128x128xbf16> to vector<128x128xbf16>
    %cst_147 = arith.constant dense<0.000000e+00> : vector<64x128xf32>
    %157 = tpu.matmul %154, %156, %cst_147 {dimension_numbers = #tpu.dot_dimension_numbers<[1], [0], [0], [1], [0, 0, 1, 1], [], []>} : vector<64x128xbf16>, vector<128x128xbf16>, vector<64x128xf32> -> vector<64x128xf32>
    %158 = arith.addf %152, %157 : vector<64x128xf32>
    %c2_148 = arith.constant 2 : index
    %c1_149 = arith.constant 1 : index
    %c0_150 = arith.constant 0 : index
    %159 = vector.load %arg6[%c2_148, %c1_149, %c0_150] : memref<10x10x128xbf16, #tpu.memory_space<vmem>>, vector<8x8x128xbf16>
    %160 = vector.shape_cast %159 : vector<8x8x128xbf16> to vector<64x128xbf16>
    %c14 = arith.constant 14 : index
    %c0_151 = arith.constant 0 : index
    %c0_152 = arith.constant 0 : index
    %161 = vector.load %arg3[%c14, %c0_151, %c0_152] : memref<16x128x128xbf16, #tpu.memory_space<vmem>>, vector<1x128x128xbf16>
    %162 = vector.shape_cast %161 : vector<1x128x128xbf16> to vector<128x128xbf16>
    %cst_153 = arith.constant dense<0.000000e+00> : vector<64x128xf32>
    %163 = tpu.matmul %160, %162, %cst_153 {dimension_numbers = #tpu.dot_dimension_numbers<[1], [0], [0], [1], [0, 0, 1, 1], [], []>} : vector<64x128xbf16>, vector<128x128xbf16>, vector<64x128xf32> -> vector<64x128xf32>
    %164 = arith.addf %158, %163 : vector<64x128xf32>
    %c2_154 = arith.constant 2 : index
    %c2_155 = arith.constant 2 : index
    %c0_156 = arith.constant 0 : index
    %165 = vector.load %arg6[%c2_154, %c2_155, %c0_156] : memref<10x10x128xbf16, #tpu.memory_space<vmem>>, vector<8x8x128xbf16>
    %166 = vector.shape_cast %165 : vector<8x8x128xbf16> to vector<64x128xbf16>
    %c15 = arith.constant 15 : index
    %c0_157 = arith.constant 0 : index
    %c0_158 = arith.constant 0 : index
    %167 = vector.load %arg3[%c15, %c0_157, %c0_158] : memref<16x128x128xbf16, #tpu.memory_space<vmem>>, vector<1x128x128xbf16>
    %168 = vector.shape_cast %167 : vector<1x128x128xbf16> to vector<128x128xbf16>
    %cst_159 = arith.constant dense<0.000000e+00> : vector<64x128xf32>
    %169 = tpu.matmul %166, %168, %cst_159 {dimension_numbers = #tpu.dot_dimension_numbers<[1], [0], [0], [1], [0, 0, 1, 1], [], []>} : vector<64x128xbf16>, vector<128x128xbf16>, vector<64x128xf32> -> vector<64x128xf32>
    %170 = arith.addf %164, %169 : vector<64x128xf32>
    %171 = arith.truncf %170 : vector<64x128xf32> to vector<64x128xbf16>
    %c0_160 = arith.constant 0 : index
    %c3_161 = arith.constant 3 : index
    %c0_162 = arith.constant 0 : index
    %c0_163 = arith.constant 0 : index
    %172 = vector.load %arg4[%c0_160, %c3_161, %c0_162, %c0_163] : memref<1x4x64x128xbf16, #tpu.memory_space<vmem>>, vector<1x1x64x128xbf16>
    %173 = vector.shape_cast %172 : vector<1x1x64x128xbf16> to vector<64x128xbf16>
    %174 = vector.shape_cast %171 : vector<64x128xbf16> to vector<1x1x64x128xbf16>
    tpu.vector_store %arg4[%c0_160, %c3_161, %c0_162, %c0_163], %174 {strides = array<i32>} : memref<1x4x64x128xbf16, #tpu.memory_space<vmem>>, vector<1x1x64x128xbf16>,
    %cst_164 = arith.constant dense<0.000000e+00> : vector<128xf32>
    %175 = vector.multi_reduction <add>, %170, %cst_164 [0] : vector<64x128xf32> to vector<128xf32>
    %176 = vector.shape_cast %175 : vector<128xf32> to vector<1x128xf32>
    %177 = arith.addf %141, %176 : vector<1x128xf32>
    %178 = arith.mulf %170, %170 : vector<64x128xf32>
    %cst_165 = arith.constant dense<0.000000e+00> : vector<128xf32>
    %179 = vector.multi_reduction <add>, %178, %cst_165 [0] : vector<64x128xf32> to vector<128xf32>
    %180 = vector.shape_cast %179 : vector<128xf32> to vector<1x128xf32>
    %181 = arith.addf %145, %180 : vector<1x128xf32>
    %cst_166 = arith.constant 0.000000e+00 : f32
    %182 = vector.broadcast %cst_166 : f32 to vector<8x128xf32>
    %c0_167 = arith.constant 0 : index
    %c0_168 = arith.constant 0 : index
    %c0_169 = arith.constant 0 : index
    %183 = vector.load %arg5[%c0_167, %c0_168, %c0_169] : memref<1x8x128xf32, #tpu.memory_space<vmem>>, vector<1x8x128xf32>
    %184 = vector.shape_cast %183 : vector<1x8x128xf32> to vector<8x128xf32>
    %185 = vector.shape_cast %182 : vector<8x128xf32> to vector<1x8x128xf32>
    tpu.vector_store %arg5[%c0_167, %c0_168, %c0_169], %185 {strides = array<i32>} : memref<1x8x128xf32, #tpu.memory_space<vmem>>, vector<1x8x128xf32>,
    %c0_170 = arith.constant 0 : index
    %c0_171 = arith.constant 0 : index
    %c0_172 = arith.constant 0 : index
    %186 = vector.load %arg5[%c0_170, %c0_171, %c0_172] : memref<1x8x128xf32, #tpu.memory_space<vmem>>, vector<1x1x128xf32>
    %187 = vector.shape_cast %186 : vector<1x1x128xf32> to vector<1x128xf32>
    %188 = vector.shape_cast %177 : vector<1x128xf32> to vector<1x1x128xf32>
    tpu.vector_store %arg5[%c0_170, %c0_171, %c0_172], %188 {strides = array<i32>} : memref<1x8x128xf32, #tpu.memory_space<vmem>>, vector<1x1x128xf32>,
    %c0_173 = arith.constant 0 : index
    %c1_174 = arith.constant 1 : index
    %c0_175 = arith.constant 0 : index
    %189 = vector.load %arg5[%c0_173, %c1_174, %c0_175] : memref<1x8x128xf32, #tpu.memory_space<vmem>>, vector<1x1x128xf32>
    %190 = vector.shape_cast %189 : vector<1x1x128xf32> to vector<1x128xf32>
    %191 = vector.shape_cast %181 : vector<1x128xf32> to vector<1x1x128xf32>
    tpu.vector_store %arg5[%c0_173, %c1_174, %c0_175], %191 {strides = array<i32>} : memref<1x8x128xf32, #tpu.memory_space<vmem>>, vector<1x1x128xf32>,
    return
  }
  func.func @transform_0(%arg0: i32) -> (i32, i32, i32, i32) {
    %c0_i32 = arith.constant 0 : i32
    %c0_i32_0 = arith.constant 0 : i32
    %c0_i32_1 = arith.constant 0 : i32
    %c0_i32_2 = arith.constant 0 : i32
    return %arg0, %c0_i32, %c0_i32_0, %c0_i32_1 : i32, i32, i32, i32
  }
  func.func @transform_1(%arg0: i32) -> (i32, i32, i32) {
    %c0_i32 = arith.constant 0 : i32
    %c0_i32_0 = arith.constant 0 : i32
    %c0_i32_1 = arith.constant 0 : i32
    %c0_i32_2 = arith.constant 0 : i32
    return %c0_i32, %c0_i32_0, %c0_i32_1 : i32, i32, i32
  }
  func.func @transform_2(%arg0: i32) -> (i32, i32, i32) {
    %c0_i32 = arith.constant 0 : i32
    %c0_i32_0 = arith.constant 0 : i32
    %c0_i32_1 = arith.constant 0 : i32
    %c0_i32_2 = arith.constant 0 : i32
    return %c0_i32, %c0_i32_0, %c0_i32_1 : i32, i32, i32
  }
  func.func @transform_3(%arg0: i32) -> (i32, i32, i32, i32) {
    %c0_i32 = arith.constant 0 : i32
    %c0_i32_0 = arith.constant 0 : i32
    %c0_i32_1 = arith.constant 0 : i32
    %c0_i32_2 = arith.constant 0 : i32
    return %arg0, %c0_i32, %c0_i32_0, %c0_i32_1 : i32, i32, i32, i32
  }
  func.func @transform_4(%arg0: i32) -> (i32, i32, i32) {
    %c0_i32 = arith.constant 0 : i32
    %c0_i32_0 = arith.constant 0 : i32
    %c0_i32_1 = arith.constant 0 : i32
    return %arg0, %c0_i32, %c0_i32_0 : i32, i32, i32
  }
}

</mosaic_0001>

<llo_original>
// kernel: unet_innermost_block.1
$region0: #{unet_innermost_block.1}
  #allocation0 [shape = 'u32[]', space=smem, size = 0x4, offset = 0x4, fixed_abs, tag = 'smem constant byte address 0x4 - core index']
  #allocation1 [shape = 'u32[144,128]{1,0:T(1,128)}', space=vmem, size = 0x12000, scoped, tag = 'internal scratch']
  #allocation2 [shape = 'bf16[10,10,128]{2,1,0:T(8,128)(2,1)}', space=vmem, size = 0xa000, scoped, tag = 'scratch operand']
  %s0 = inlined_call_operand.vmem [shape: bf16[2,9,9,128], index: 0, kind: input, shape index: {}]
  %s1 = inlined_call_operand.vmem [shape: bf16[4,128,128], index: 1, kind: input, shape index: {}]
  %s2 = inlined_call_operand.vmem [shape: bf16[16,128,128], index: 2, kind: input, shape index: {}]
  %s3 = inlined_call_operand.vmem [shape: bf16[2,4,64,128], index: 3, kind: output, shape index: {0}]
  %s4 = inlined_call_operand.vmem [shape: f32[2,8,128], index: 4, kind: output, shape index: {1}]
  %5 = xla_tuple %s3, %s4
  %s6 = sld [smem:[#allocation0]]
  $region53: #{unet_innermost_block.1} parent=0
    _
  %s8 = ssub.s32 1, %s6
  %s9 = scalar_select 0, %s8, %s6
  loop: start=0, step=1, limit=4
  $region2: #{unet_innermost_block.1} parent=0 // loop_pre_header
    _
  $region3: #{unet_innermost_block.1} parent=0 // loop_header
    %s11 = sphi 0, %s15
    %p12 = scmp.ge.s32.totalorder %s11, 4
    %s21 = sphi 0, %s23
    %s24 = sphi 0, %s21
    %s25 = sphi 0, %s24
    %s41 = sphi 0, %s25
    %s45 = sphi 0, %s45
    %s47 = sphi 0, %s45
    %s48 = sphi 0, %s47
    %s62 = sphi 0, %s48
    %s66 = sphi 0, %s66
    %s68 = sphi 0, %s66
    %s69 = sphi 0, %s68
    %s83 = sphi 0, %s69
    %s89 = sphi 0, %s91
    %s92 = sphi 0, %s89
    %s93 = sphi 0, %s92
    %s109 = sphi 0, %s93
    %s115 = sphi 0, %s117
    %s118 = sphi 0, %s115
    %s119 = sphi 0, %s118
    %s135 = sphi 0, %s119
  $region4: #{unet_innermost_block.1} parent=0 // loop_header_branch
    %14 = sbr.rel (%p12) target = $region8
  $region5: #{unet_innermost_block.1} parent=0 // loop_body
    %s16 = ssub.s32 %s11, 1
    %s17 = ssub.s32 %s11, 2
    %s18 = sadd.s32 %s11, 1
    %s19 = ssub.s32 %s11, %s18
    %p20 = scmp.eq.s32.totalorder %s19, 0
    %s22 = sadd.s32 %s21, 1
    %s23 = scalar_select %p20, %s21, %s22
    %p26 = pneg %p20
    %p27 = scmp.eq.s32.totalorder %s11, 1
    %p28 = por %p26, %p27
    %p29 = scmp.ne.s32.totalorder %s21, %s24
    %p30 = scmp.eq.s32.totalorder %s11, 0
    %p31 = por %p29, %p30
    %p32 = scmp.ne.s32.totalorder %s21, %s24
    %p33 = scmp.eq.s32.totalorder %s16, 1
    %p34 = por %p32, %p33
    %p35 = scmp.ne.s32.totalorder %s24, %s25
    %p36 = scmp.eq.s32.totalorder %s16, 0
    %p37 = por %p35, %p36
    %p38 = scmp.ne.s32.totalorder %s24, %s25
    %p39 = scmp.eq.s32.totalorder %s17, 1
    %p40 = por %p38, %p39
    %p42 = scmp.ne.s32.totalorder %s25, %s41
    %p43 = scmp.eq.s32.totalorder %s17, 0
    %p44 = por %p42, %p43
    %s46 = sadd.s32 %s45, 1
    %p49 = scmp.eq.s32.totalorder %s11, 1
    %p50 = scmp.ne.s32.totalorder %s45, %s47
    %p51 = scmp.eq.s32.totalorder %s11, 0
    %p52 = por %p50, %p51
    %p53 = scmp.ne.s32.totalorder %s45, %s47
    %p54 = scmp.eq.s32.totalorder %s16, 1
    %p55 = por %p53, %p54
    %p56 = scmp.ne.s32.totalorder %s47, %s48
    %p57 = scmp.eq.s32.totalorder %s16, 0
    %p58 = por %p56, %p57
    %p59 = scmp.ne.s32.totalorder %s47, %s48
    %p60 = scmp.eq.s32.totalorder %s17, 1
    %p61 = por %p59, %p60
    %p63 = scmp.ne.s32.totalorder %s48, %s62
    %p64 = scmp.eq.s32.totalorder %s17, 0
    %p65 = por %p63, %p64
    %s67 = sadd.s32 %s66, 1
    %p70 = scmp.eq.s32.totalorder %s11, 1
    %p71 = scmp.ne.s32.totalorder %s66, %s68
    %p72 = scmp.eq.s32.totalorder %s11, 0
    %p73 = por %p71, %p72
    %p74 = scmp.ne.s32.totalorder %s66, %s68
    %p75 = scmp.eq.s32.totalorder %s16, 1
    %p76 = por %p74, %p75
    %p77 = scmp.ne.s32.totalorder %s68, %s69
    %p78 = scmp.eq.s32.totalorder %s16, 0
    %p79 = por %p77, %p78
    %p80 = scmp.ne.s32.totalorder %s68, %s69
    %p81 = scmp.eq.s32.totalorder %s17, 1
    %p82 = por %p80, %p81
    %p84 = scmp.ne.s32.totalorder %s69, %s83
    %p85 = scmp.eq.s32.totalorder %s17, 0
    %p86 = por %p84, %p85
    %s87 = ssub.s32 %s11, %s18
    %p88 = scmp.eq.s32.totalorder %s87, 0
    %s90 = sadd.s32 %s89, 1
    %s91 = scalar_select %p88, %s89, %s90
    %p94 = pneg %p88
    %p95 = scmp.eq.s32.totalorder %s11, 1
    %p96 = por %p94, %p95
    %p97 = scmp.ne.s32.totalorder %s89, %s92
    %p98 = scmp.eq.s32.totalorder %s11, 0
    %p99 = por %p97, %p98
    %p100 = scmp.ne.s32.totalorder %s89, %s92
    %p101 = scmp.eq.s32.totalorder %s16, 1
    %p102 = por %p100, %p101
    %p103 = scmp.ne.s32.totalorder %s92, %s93
    %p104 = scmp.eq.s32.totalorder %s16, 0
    %p105 = por %p103, %p104
    %p106 = scmp.ne.s32.totalorder %s92, %s93
    %p107 = scmp.eq.s32.totalorder %s17, 1
    %p108 = por %p106, %p107
    %p110 = scmp.ne.s32.totalorder %s93, %s109
    %p111 = scmp.eq.s32.totalorder %s17, 0
    %p112 = por %p110, %p111
    %s113 = ssub.s32 %s11, %s18
    %p114 = scmp.eq.s32.totalorder %s113, 0
    %s116 = sadd.s32 %s115, 1
    %s117 = scalar_select %p114, %s115, %s116
    %p120 = pneg %p114
    %p121 = scmp.eq.s32.totalorder %s11, 1
    %p122 = por %p120, %p121
    %p123 = scmp.ne.s32.totalorder %s115, %s118
    %p124 = scmp.eq.s32.totalorder %s11, 0
    %p125 = por %p123, %p124
    %p126 = scmp.ne.s32.totalorder %s115, %s118
    %p127 = scmp.eq.s32.totalorder %s16, 1
    %p128 = por %p126, %p127
    %p129 = scmp.ne.s32.totalorder %s118, %s119
    %p130 = scmp.eq.s32.totalorder %s16, 0
    %p131 = por %p129, %p130
    %p132 = scmp.ne.s32.totalorder %s118, %s119
    %p133 = scmp.eq.s32.totalorder %s17, 1
    %p134 = por %p132, %p133
    %p136 = scmp.ne.s32.totalorder %s119, %s135
    %p137 = scmp.eq.s32.totalorder %s17, 0
    %p138 = por %p136, %p137
    %p139 = scmp.le.s32.totalorder 1, %s11
    %p140 = scmp.lt.s32.totalorder %s11, 3
    %p141 = pnand %p139, %p140
    %p142 = pneg %p141
    // Predicated region
    $region9: #{unet_innermost_block.1} parent=5 // pred_check
      _
    $region10: #{unet_innermost_block.1} parent=5 // pred_check_branch
      %144 = sbr.rel (%p141) target = $region12
    $region11: #{unet_innermost_block.1} parent=5 // pred_region
      %s145 = ssub.s32 %s11, 1
      // Predicated region
      $region13: #{unet_innermost_block.1} parent=11 // pred_check
        %p146 = pneg %p58
      $region14: #{unet_innermost_block.1} parent=11 // pred_check_branch
        %148 = sbr.rel (%p146) target = $region16
      $region15: #{unet_innermost_block.1} parent=11 // pred_region
        _
      $region16: #{unet_innermost_block.1} parent=11 // pred_fallthru
        _
      // Predicated region
      $region17: #{unet_innermost_block.1} parent=11 // pred_check
        %p149 = pneg %p79
      $region18: #{unet_innermost_block.1} parent=11 // pred_check_branch
        %151 = sbr.rel (%p149) target = $region20
      $region19: #{unet_innermost_block.1} parent=11 // pred_region
        _
      $region20: #{unet_innermost_block.1} parent=11 // pred_fallthru
        _
    $region12: #{unet_innermost_block.1} parent=5 // pred_fallthru
      _
    %p152 = scmp.lt.s32.totalorder %s11, 2
    // Predicated region
    $region21: #{unet_innermost_block.1} parent=5 // pred_check
      %p153 = pneg %p152
    $region22: #{unet_innermost_block.1} parent=5 // pred_check_branch
      %155 = sbr.rel (%p153) target = $region24
    $region23: #{unet_innermost_block.1} parent=5 // pred_region
      // Predicated region
      $region25: #{unet_innermost_block.1} parent=23 // pred_check
        %p156 = pneg %p31
      $region26: #{unet_innermost_block.1} parent=23 // pred_check_branch
        %158 = sbr.rel (%p156) target = $region28
      $region27: #{unet_innermost_block.1} parent=23 // pred_region
        %p159 = scmp.lt.s32.totalorder %s11, 1
        %s160 = scalar_select %p159, %s11, 1
        %s161 = smul.addr %s160, 18
        %s162 = smul.addr %s161, 4
        %s163 = scalar_lea.vmem %s0, %s162
      $region28: #{unet_innermost_block.1} parent=23 // pred_fallthru
        _
    $region24: #{unet_innermost_block.1} parent=5 // pred_fallthru
      _
    %p164 = scmp.le.s32.totalorder 1, %s11
    %p165 = scmp.lt.s32.totalorder %s11, 3
    %p166 = pnand %p164, %p165
    %p167 = pneg %p166
    // Predicated region
    $region29: #{unet_innermost_block.1} parent=5 // pred_check
      _
    $region30: #{unet_innermost_block.1} parent=5 // pred_check_branch
      %169 = sbr.rel (%p166) target = $region32
    $region31: #{unet_innermost_block.1} parent=5 // pred_region
      %s170 = ssub.s32 %s11, 1
      %p171 = scmp.lt.s32.totalorder %s16, 1
      %s172 = scalar_select %p171, %s16, 1
      %s173 = smul.addr %s172, 18
      %s174 = smul.addr %s173, 4
      %s175 = scalar_lea.vmem %s0, %s174
      %p176 = pneg %p37
      %p177 = pneg %p34
      %p178 = pneg %p58
      %p179 = pneg %p55
      %p180 = pneg %p79
      %p181 = pneg %p76
      %p182 = pneg %p105
      %p183 = pneg %p102
      %p184 = scmp.lt.s32.totalorder %s16, 1
      %s185 = scalar_select %p184, %s16, 1
      %s186 = smul.addr %s185, 32
      %s187 = smul.addr %s186, 4
      %s188 = scalar_lea.vmem %s3, %s187
      %p189 = pneg %p131
      %p190 = pneg %p128
      %p191 = scmp.lt.s32.totalorder %s16, 1
      %s192 = scalar_select %p191, %s16, 1
      %s193 = smul.addr %s192, 8
      %s194 = scalar_lea.vmem %s4, %s193
      %p195 = scmp.lt.s32.totalorder %s16, 1
      %s196 = scalar_select %p195, %s16, 1
      %s197 = smul.addr %s196, 18
      %s198 = smul.addr %s197, 4
      %s199 = scalar_lea.vmem %s0, %s198
      %p200 = scmp.lt.s32.totalorder %s16, 1
      %s201 = scalar_select %p200, %s16, 1
      %s202 = smul.addr %s201, 32
      %s203 = smul.addr %s202, 4
      %s204 = scalar_lea.vmem %s3, %s203
      %p205 = scmp.lt.s32.totalorder %s16, 1
      %s206 = scalar_select %p205, %s16, 1
      %s207 = smul.addr %s206, 8
      %s208 = scalar_lea.vmem %s4, %s207
      %v210 = vld [vmem:[%s199] sm:$0xf]
      %v211 = vld [vmem:[%s199 + $0x8] sm:$0xf]
      %v212 = vld [vmem:[%s199 + $0x10] sm:$0xf]
      %v213 = vld [vmem:[%s199 + $0x18] sm:$0xf]
      %v214 = vld [vmem:[%s199 + $0x20] sm:$0xf]
      %v215 = vld [vmem:[%s199 + $0x28] sm:$0xf]
      %v216 = vld [vmem:[%s199 + $0x30] sm:$0xf]
      %v217 = vld [vmem:[%s199 + $0x38] sm:$0xf]
      %v218 = vld [vmem:[%s1] sm:$0xf]
      %v219 = vld [vmem:[%s1 + $0x4] sm:$0xf]
      %v220 = vld [vmem:[%s1 + $0x8] sm:$0xf]
      %v221 = vld [vmem:[%s1 + $0xc] sm:$0xf]
      %v222 = vld [vmem:[%s1 + $0x10] sm:$0xf]
      %v223 = vld [vmem:[%s1 + $0x14] sm:$0xf]
      %v224 = vld [vmem:[%s1 + $0x18] sm:$0xf]
      %v225 = vld [vmem:[%s1 + $0x1c] sm:$0xf]
      %v226 = vld [vmem:[%s1 + $0x20] sm:$0xf]
      %v227 = vld [vmem:[%s1 + $0x24] sm:$0xf]
      %v228 = vld [vmem:[%s1 + $0x28] sm:$0xf]
      %v229 = vld [vmem:[%s1 + $0x2c] sm:$0xf]
      %v230 = vld [vmem:[%s1 + $0x30] sm:$0xf]
      %v231 = vld [vmem:[%s1 + $0x34] sm:$0xf]
      %v232 = vld [vmem:[%s1 + $0x38] sm:$0xf]
      %v233 = vld [vmem:[%s1 + $0x3c] sm:$0xf]
      %v234 = vld [vmem:[%s199 + $0x4] sm:$0x1]
      %v235 = vld [vmem:[%s199 + $0xc] sm:$0x1]
      %v236 = vld [vmem:[%s199 + $0x14] sm:$0x1]
      %v237 = vld [vmem:[%s199 + $0x1c] sm:$0x1]
      %v238 = vld [vmem:[%s199 + $0x24] sm:$0x1]
      %v239 = vld [vmem:[%s199 + $0x2c] sm:$0x1]
      %v240 = vld [vmem:[%s199 + $0x34] sm:$0x1]
      %v241 = vld [vmem:[%s199 + $0x3c] sm:$0x1]
      %vm242 = vsmask.f32 3328
      %vm243 = vsmask.f32 7440
      %vm244 = vmor %vm242, %vm243
      %v246 = vshrl.u32 %v210, 16
      %v248 = vrot.slane %v246, 4
      %v249 = vshll.u32 %v210, 16
      %v251 = vrot.slane %v249, 5
      %v252 = vor.u32 %v248, %v251
      %v253 = vrot.slane %v252, 4
      %v255 = vshll.u32 %v234, 16
      %v257 = vrot.slane %v255, 5
      %v258 = vsel %vm244, %v253, %v257
      %v260 = vshrl.u32 %v211, 16
      %v262 = vrot.slane %v260, 4
      %v263 = vshll.u32 %v211, 16
      %v265 = vrot.slane %v263, 5
      %v266 = vor.u32 %v262, %v265
      %v267 = vrot.slane %v266, 4
      %v269 = vshll.u32 %v235, 16
      %v271 = vrot.slane %v269, 5
      %v272 = vsel %vm244, %v267, %v271
      %v274 = vshrl.u32 %v212, 16
      %v276 = vrot.slane %v274, 4
      %v277 = vshll.u32 %v212, 16
      %v279 = vrot.slane %v277, 5
      %v280 = vor.u32 %v276, %v279
      %v281 = vrot.slane %v280, 4
      %v283 = vshll.u32 %v236, 16
      %v285 = vrot.slane %v283, 5
      %v286 = vsel %vm244, %v281, %v285
      %v288 = vshrl.u32 %v213, 16
      %v290 = vrot.slane %v288, 4
      %v291 = vshll.u32 %v213, 16
      %v293 = vrot.slane %v291, 5
      %v294 = vor.u32 %v290, %v293
      %v295 = vrot.slane %v294, 4
      %v297 = vshll.u32 %v237, 16
      %v299 = vrot.slane %v297, 5
      %v300 = vsel %vm244, %v295, %v299
      %v302 = vshrl.u32 %v214, 16
      %v304 = vrot.slane %v302, 4
      %v305 = vshll.u32 %v214, 16
      %v307 = vrot.slane %v305, 5
      %v308 = vor.u32 %v304, %v307
      %v309 = vrot.slane %v308, 4
      %v311 = vshll.u32 %v238, 16
      %v313 = vrot.slane %v311, 5
      %v314 = vsel %vm244, %v309, %v313
      %v316 = vshrl.u32 %v215, 16
      %v318 = vrot.slane %v316, 4
      %v319 = vshll.u32 %v215, 16
      %v321 = vrot.slane %v319, 5
      %v322 = vor.u32 %v318, %v321
      %v323 = vrot.slane %v322, 4
      %v325 = vshll.u32 %v239, 16
      %v327 = vrot.slane %v325, 5
      %v328 = vsel %vm244, %v323, %v327
      %v330 = vshrl.u32 %v216, 16
      %v332 = vrot.slane %v330, 4
      %v333 = vshll.u32 %v216, 16
      %v335 = vrot.slane %v333, 5
      %v336 = vor.u32 %v332, %v335
      %v337 = vrot.slane %v336, 4
      %v339 = vshll.u32 %v240, 16
      %v341 = vrot.slane %v339, 5
      %v342 = vsel %vm244, %v337, %v341
      %v344 = vshrl.u32 %v217, 16
      %v346 = vrot.slane %v344, 4
      %v347 = vshll.u32 %v217, 16
      %v349 = vrot.slane %v347, 5
      %v350 = vor.u32 %v346, %v349
      %v351 = vrot.slane %v350, 4
      %v353 = vshll.u32 %v241, 16
      %v355 = vrot.slane %v353, 5
      %v356 = vsel %vm244, %v351, %v355
      %s357 = scalar_lea.vmem %s1, 64
      %v358 = vld [vmem:[%s357] sm:$0xf]
      %v359 = vld [vmem:[%s357 + $0x4] sm:$0xf]
      %v360 = vld [vmem:[%s357 + $0x8] sm:$0xf]
      %v361 = vld [vmem:[%s357 + $0xc] sm:$0xf]
      %v362 = vld [vmem:[%s357 + $0x10] sm:$0xf]
      %v363 = vld [vmem:[%s357 + $0x14] sm:$0xf]
      %v364 = vld [vmem:[%s357 + $0x18] sm:$0xf]
      %v365 = vld [vmem:[%s357 + $0x1c] sm:$0xf]
      %v366 = vld [vmem:[%s357 + $0x20] sm:$0xf]
      %v367 = vld [vmem:[%s357 + $0x24] sm:$0xf]
      %v368 = vld [vmem:[%s357 + $0x28] sm:$0xf]
      %v369 = vld [vmem:[%s357 + $0x2c] sm:$0xf]
      %v370 = vld [vmem:[%s357 + $0x30] sm:$0xf]
      %v371 = vld [vmem:[%s357 + $0x34] sm:$0xf]
      %v372 = vld [vmem:[%s357 + $0x38] sm:$0xf]
      %v373 = vld [vmem:[%s357 + $0x3c] sm:$0xf]
      %v374 = vunpack.c.l.b16 %v258
      %v375 = vunpack.c.l.b16 %v272
      %v376 = vunpack.c.l.b16 %v286
      %v377 = vunpack.c.l.b16 %v300
      %v378 = vunpack.c.l.b16 %v314
      %v379 = vunpack.c.l.b16 %v328
      %v380 = vunpack.c.l.b16 %v342
      %v381 = vunpack.c.l.b16 %v356
      %v382 = vpack.c.b16 %v375, %v374
      %v383 = vpack.c.b16 %v377, %v376
      %v384 = vpack.c.b16 %v379, %v378
      %v385 = vpack.c.b16 %v381, %v380
      %v406 = vunpack.c.l.b16 %v358
      %v407 = vunpack.c.l.b16 %v359
      %v408 = vunpack.c.l.b16 %v360
      %v409 = vunpack.c.l.b16 %v361
      %v410 = vunpack.c.l.b16 %v362
      %v411 = vunpack.c.l.b16 %v363
      %v412 = vunpack.c.l.b16 %v364
      %v413 = vunpack.c.l.b16 %v365
      %v414 = vunpack.c.l.b16 %v366
      %v415 = vunpack.c.l.b16 %v367
      %v416 = vunpack.c.l.b16 %v368
      %v417 = vunpack.c.l.b16 %v369
      %v418 = vunpack.c.l.b16 %v370
      %v419 = vunpack.c.l.b16 %v371
      %v420 = vunpack.c.l.b16 %v372
      %v421 = vunpack.c.l.b16 %v373
      %v422 = vpack.c.b16 %v407, %v406
      %v423 = vpack.c.b16 %v409, %v408
      %v424 = vpack.c.b16 %v411, %v410
      %v425 = vpack.c.b16 %v413, %v412
      %v426 = vpack.c.b16 %v415, %v414
      %v427 = vpack.c.b16 %v417, %v416
      %v428 = vpack.c.b16 %v419, %v418
      %v429 = vpack.c.b16 %v421, %v420
      %438 = vmatprep.subr.bf16.mxu0 0
      %439 = vmatpush1.bf16.msra.mxu0 %v422
      %440 = vmatprep.subr.bf16.mxu0 0
      %441 = vmatpush1.bf16.msra.mxu0 %v423
      %442 = vmatprep.subr.bf16.mxu0 0
      %443 = vmatpush1.bf16.msra.mxu0 %v424
      %444 = vmatprep.subr.bf16.mxu0 0
      %445 = vmatpush1.bf16.msra.mxu0 %v425
      %446 = vmatprep.subr.bf16.mxu0 0
      %447 = vmatpush1.bf16.msra.mxu0 %v426
      %448 = vmatprep.subr.bf16.mxu0 0
      %449 = vmatpush1.bf16.msra.mxu0 %v427
      %450 = vmatprep.subr.bf16.mxu0 0
      %451 = vmatpush1.bf16.msra.mxu0 %v428
      %452 = vmatprep.subr.bf16.mxu0 0
      %453 = vmatpush1.bf16.msra.mxu0 %v429
      %454 = vmatprep.subr.bf16.mxu0 0
      %455 = vmatpush1.bf16.msra.mxu0 0
      %456 = vmatprep.subr.bf16.mxu0 0
      %457 = vmatpush1.bf16.msra.mxu0 0
      %458 = vmatprep.subr.bf16.mxu0 0
      %459 = vmatpush1.bf16.msra.mxu0 0
      %460 = vmatprep.subr.bf16.mxu0 0
      %461 = vmatpush1.bf16.msra.mxu0 0
      %462 = vmatprep.subr.bf16.mxu0 0
      %463 = vmatpush1.bf16.msra.mxu0 0
      %464 = vmatprep.subr.bf16.mxu0 0
      %465 = vmatpush1.bf16.msra.mxu0 0
      %466 = vmatprep.subr.bf16.mxu0 0
      %467 = vmatpush1.bf16.msra.mxu0 0
      %468 = vmatprep.subr.bf16.mxu0 0
      %469 = vmatpush1.bf16.msra.mxu0 0
      %470 = vmatprep.mubr.bf16.mxu0 0
      %471 = vmatmul.mubr.bf16.gmra.mrb[0].mxu0 %v382
      %v472 = vpop.f32.mrb[0].mxu0
      %v473 = vadd.f32 0.0, %v472
      %v474 = vpop.f32.mrb[0].mxu0
      %v475 = vpop.f32.mrb[0].mxu0
      %v476 = vadd.f32 0.0, %v475
      %v477 = vpop.f32.mrb[0].mxu0
      %478 = vmatprep.mubr.bf16.mxu0 0
      %479 = vmatmul.mubr.bf16.gmra.mrb[0].mxu0 %v383
      %v480 = vpop.f32.mrb[0].mxu0
      %v481 = vadd.f32 0.0, %v480
      %v482 = vpop.f32.mrb[0].mxu0
      %v483 = vpop.f32.mrb[0].mxu0
      %v484 = vadd.f32 0.0, %v483
      %v485 = vpop.f32.mrb[0].mxu0
      %486 = vmatprep.mubr.bf16.mxu0 0
      %487 = vmatmul.mubr.bf16.gmra.mrb[0].mxu0 %v384
      %v488 = vpop.f32.mrb[0].mxu0
      %v489 = vadd.f32 0.0, %v488
      %v490 = vpop.f32.mrb[0].mxu0
      %v491 = vpop.f32.mrb[0].mxu0
      %v492 = vadd.f32 0.0, %v491
      %v493 = vpop.f32.mrb[0].mxu0
      %494 = vmatprep.mubr.bf16.mxu0 0
      %495 = vmatmul.mubr.bf16.gmra.mrb[0].mxu0 %v385
      %v496 = vpop.f32.mrb[0].mxu0
      %v497 = vadd.f32 0.0, %v496
      %v498 = vpop.f32.mrb[0].mxu0
      %v499 = vpop.f32.mrb[0].mxu0
      %v500 = vadd.f32 0.0, %v499
      %v501 = vpop.f32.mrb[0].mxu0
      %502 = vdwg.mxu0
      %v511 = vunpack.c.l.b16 %v210
      %v512 = vunpack.c.l.b16 %v211
      %v513 = vunpack.c.l.b16 %v212
      %v514 = vunpack.c.l.b16 %v213
      %v515 = vunpack.c.l.b16 %v214
      %v516 = vunpack.c.l.b16 %v215
      %v517 = vunpack.c.l.b16 %v216
      %v518 = vunpack.c.l.b16 %v217
      %v519 = vpack.c.b16 %v512, %v511
      %v520 = vpack.c.b16 %v514, %v513
      %v521 = vpack.c.b16 %v516, %v515
      %v522 = vpack.c.b16 %v518, %v517
      %v543 = vunpack.c.l.b16 %v218
      %v544 = vunpack.c.l.b16 %v219
      %v545 = vunpack.c.l.b16 %v220
      %v546 = vunpack.c.l.b16 %v221
      %v547 = vunpack.c.l.b16 %v222
      %v548 = vunpack.c.l.b16 %v223
      %v549 = vunpack.c.l.b16 %v224
      %v550 = vunpack.c.l.b16 %v225
      %v551 = vunpack.c.l.b16 %v226
      %v552 = vunpack.c.l.b16 %v227
      %v553 = vunpack.c.l.b16 %v228
      %v554 = vunpack.c.l.b16 %v229
      %v555 = vunpack.c.l.b16 %v230
      %v556 = vunpack.c.l.b16 %v231
      %v557 = vunpack.c.l.b16 %v232
      %v558 = vunpack.c.l.b16 %v233
      %v559 = vpack.c.b16 %v544, %v543
      %v560 = vpack.c.b16 %v546, %v545
      %v561 = vpack.c.b16 %v548, %v547
      %v562 = vpack.c.b16 %v550, %v549
      %v563 = vpack.c.b16 %v552, %v551
      %v564 = vpack.c.b16 %v554, %v553
      %v565 = vpack.c.b16 %v556, %v555
      %v566 = vpack.c.b16 %v558, %v557
      %575 = vmatprep.subr.bf16.mxu0 0
      %576 = vmatpush1.bf16.msra.mxu0 %v559
      %577 = vmatprep.subr.bf16.mxu0 0
      %578 = vmatpush1.bf16.msra.mxu0 %v560
      %579 = vmatprep.subr.bf16.mxu0 0
      %580 = vmatpush1.bf16.msra.mxu0 %v561
      %581 = vmatprep.subr.bf16.mxu0 0
      %582 = vmatpush1.bf16.msra.mxu0 %v562
      %583 = vmatprep.subr.bf16.mxu0 0
      %584 = vmatpush1.bf16.msra.mxu0 %v563
      %585 = vmatprep.subr.bf16.mxu0 0
      %586 = vmatpush1.bf16.msra.mxu0 %v564
      %587 = vmatprep.subr.bf16.mxu0 0
      %588 = vmatpush1.bf16.msra.mxu0 %v565
      %589 = vmatprep.subr.bf16.mxu0 0
      %590 = vmatpush1.bf16.msra.mxu0 %v566
      %591 = vmatprep.subr.bf16.mxu0 0
      %592 = vmatpush1.bf16.msra.mxu0 0
      %593 = vmatprep.subr.bf16.mxu0 0
      %594 = vmatpush1.bf16.msra.mxu0 0
      %595 = vmatprep.subr.bf16.mxu0 0
      %596 = vmatpush1.bf16.msra.mxu0 0
      %597 = vmatprep.subr.bf16.mxu0 0
      %598 = vmatpush1.bf16.msra.mxu0 0
      %599 = vmatprep.subr.bf16.mxu0 0
      %600 = vmatpush1.bf16.msra.mxu0 0
      %601 = vmatprep.subr.bf16.mxu0 0
      %602 = vmatpush1.bf16.msra.mxu0 0
      %603 = vmatprep.subr.bf16.mxu0 0
      %604 = vmatpush1.bf16.msra.mxu0 0
      %605 = vmatprep.subr.bf16.mxu0 0
      %606 = vmatpush1.bf16.msra.mxu0 0
      %607 = vmatprep.mubr.bf16.mxu0 0
      %608 = vmatmul.mubr.bf16.gmra.mrb[0].mxu0 %v519
      %v609 = vpop.f32.mrb[0].mxu0
      %v610 = vadd.f32 %v473, %v609
      %v611 = vpop.f32.mrb[0].mxu0
      %v612 = vpop.f32.mrb[0].mxu0
      %v613 = vadd.f32 %v476, %v612
      %v614 = vpop.f32.mrb[0].mxu0
      %615 = vmatprep.mubr.bf16.mxu0 0
      %616 = vmatmul.mubr.bf16.gmra.mrb[0].mxu0 %v520
      %v617 = vpop.f32.mrb[0].mxu0
      %v618 = vadd.f32 %v481, %v617
      %v619 = vpop.f32.mrb[0].mxu0
      %v620 = vpop.f32.mrb[0].mxu0
      %v621 = vadd.f32 %v484, %v620
      %v622 = vpop.f32.mrb[0].mxu0
      %623 = vmatprep.mubr.bf16.mxu0 0
      %624 = vmatmul.mubr.bf16.gmra.mrb[0].mxu0 %v521
      %v625 = vpop.f32.mrb[0].mxu0
      %v626 = vadd.f32 %v489, %v625
      %v627 = vpop.f32.mrb[0].mxu0
      %v628 = vpop.f32.mrb[0].mxu0
      %v629 = vadd.f32 %v492, %v628
      %v630 = vpop.f32.mrb[0].mxu0
      %631 = vmatprep.mubr.bf16.mxu0 0
      %632 = vmatmul.mubr.bf16.gmra.mrb[0].mxu0 %v522
      %v633 = vpop.f32.mrb[0].mxu0
      %v634 = vadd.f32 %v497, %v633
      %v635 = vpop.f32.mrb[0].mxu0
      %v636 = vpop.f32.mrb[0].mxu0
      %v637 = vadd.f32 %v500, %v636
      %v638 = vpop.f32.mrb[0].mxu0
      %639 = vdwg.mxu0
      %s640 = scalar_lea.vmem %s199, 8
      %v641 = vld [vmem:[%s640] sm:$0xf]
      %v642 = vld [vmem:[%s640 + $0x8] sm:$0xf]
      %v643 = vld [vmem:[%s640 + $0x10] sm:$0xf]
      %v644 = vld [vmem:[%s640 + $0x18] sm:$0xf]
      %v645 = vld [vmem:[%s640 + $0x20] sm:$0xf]
      %v646 = vld [vmem:[%s640 + $0x28] sm:$0xf]
      %v647 = vld [vmem:[%s640 + $0x30] sm:$0xf]
      %v648 = vld [vmem:[%s640 + $0x38] sm:$0xf]
      %s649 = scalar_lea.vmem %s1, 128
      %v650 = vld [vmem:[%s649] sm:$0xf]
      %v651 = vld [vmem:[%s649 + $0x4] sm:$0xf]
      %v652 = vld [vmem:[%s649 + $0x8] sm:$0xf]
      %v653 = vld [vmem:[%s649 + $0xc] sm:$0xf]
      %v654 = vld [vmem:[%s649 + $0x10] sm:$0xf]
      %v655 = vld [vmem:[%s649 + $0x14] sm:$0xf]
      %v656 = vld [vmem:[%s649 + $0x18] sm:$0xf]
      %v657 = vld [vmem:[%s649 + $0x1c] sm:$0xf]
      %v658 = vld [vmem:[%s649 + $0x20] sm:$0xf]
      %v659 = vld [vmem:[%s649 + $0x24] sm:$0xf]
      %v660 = vld [vmem:[%s649 + $0x28] sm:$0xf]
      %v661 = vld [vmem:[%s649 + $0x2c] sm:$0xf]
      %v662 = vld [vmem:[%s649 + $0x30] sm:$0xf]
      %v663 = vld [vmem:[%s649 + $0x34] sm:$0xf]
      %v664 = vld [vmem:[%s649 + $0x38] sm:$0xf]
      %v665 = vld [vmem:[%s649 + $0x3c] sm:$0xf]
      %v674 = vunpack.c.l.b16 %v641
      %v675 = vunpack.c.l.b16 %v642
      %v676 = vunpack.c.l.b16 %v643
      %v677 = vunpack.c.l.b16 %v644
      %v678 = vunpack.c.l.b16 %v645
      %v679 = vunpack.c.l.b16 %v646
      %v680 = vunpack.c.l.b16 %v647
      %v681 = vunpack.c.l.b16 %v648
      %v682 = vpack.c.b16 %v675, %v674
      %v683 = vpack.c.b16 %v677, %v676
      %v684 = vpack.c.b16 %v679, %v678
      %v685 = vpack.c.b16 %v681, %v680
      %v706 = vunpack.c.l.b16 %v650
      %v707 = vunpack.c.l.b16 %v651
      %v708 = vunpack.c.l.b16 %v652
      %v709 = vunpack.c.l.b16 %v653
      %v710 = vunpack.c.l.b16 %v654
      %v711 = vunpack.c.l.b16 %v655
      %v712 = vunpack.c.l.b16 %v656
      %v713 = vunpack.c.l.b16 %v657
      %v714 = vunpack.c.l.b16 %v658
      %v715 = vunpack.c.l.b16 %v659
      %v716 = vunpack.c.l.b16 %v660
      %v717 = vunpack.c.l.b16 %v661
      %v718 = vunpack.c.l.b16 %v662
      %v719 = vunpack.c.l.b16 %v663
      %v720 = vunpack.c.l.b16 %v664
      %v721 = vunpack.c.l.b16 %v665
      %v722 = vpack.c.b16 %v707, %v706
      %v723 = vpack.c.b16 %v709, %v708
      %v724 = vpack.c.b16 %v711, %v710
      %v725 = vpack.c.b16 %v713, %v712
      %v726 = vpack.c.b16 %v715, %v714
      %v727 = vpack.c.b16 %v717, %v716
      %v728 = vpack.c.b16 %v719, %v718
      %v729 = vpack.c.b16 %v721, %v720
      %738 = vmatprep.subr.bf16.mxu0 0
      %739 = vmatpush1.bf16.msra.mxu0 %v722
      %740 = vmatprep.subr.bf16.mxu0 0
      %741 = vmatpush1.bf16.msra.mxu0 %v723
      %742 = vmatprep.subr.bf16.mxu0 0
      %743 = vmatpush1.bf16.msra.mxu0 %v724
      %744 = vmatprep.subr.bf16.mxu0 0
      %745 = vmatpush1.bf16.msra.mxu0 %v725
      %746 = vmatprep.subr.bf16.mxu0 0
      %747 = vmatpush1.bf16.msra.mxu0 %v726
      %748 = vmatprep.subr.bf16.mxu0 0
      %749 = vmatpush1.bf16.msra.mxu0 %v727
      %750 = vmatprep.subr.bf16.mxu0 0
      %751 = vmatpush1.bf16.msra.mxu0 %v728
      %752 = vmatprep.subr.bf16.mxu0 0
      %753 = vmatpush1.bf16.msra.mxu0 %v729
      %754 = vmatprep.subr.bf16.mxu0 0
      %755 = vmatpush1.bf16.msra.mxu0 0
      %756 = vmatprep.subr.bf16.mxu0 0
      %757 = vmatpush1.bf16.msra.mxu0 0
      %758 = vmatprep.subr.bf16.mxu0 0
      %759 = vmatpush1.bf16.msra.mxu0 0
      %760 = vmatprep.subr.bf16.mxu0 0
      %761 = vmatpush1.bf16.msra.mxu0 0
      %762 = vmatprep.subr.bf16.mxu0 0
      %763 = vmatpush1.bf16.msra.mxu0 0
      %764 = vmatprep.subr.bf16.mxu0 0
      %765 = vmatpush1.bf16.msra.mxu0 0
      %766 = vmatprep.subr.bf16.mxu0 0
      %767 = vmatpush1.bf16.msra.mxu0 0
      %768 = vmatprep.subr.bf16.mxu0 0
      %769 = vmatpush1.bf16.msra.mxu0 0
      %770 = vmatprep.mubr.bf16.mxu0 0
      %771 = vmatmul.mubr.bf16.gmra.mrb[0].mxu0 %v682
      %v772 = vpop.f32.mrb[0].mxu0
      %v773 = vadd.f32 0.0, %v772
      %v774 = vpop.f32.mrb[0].mxu0
      %v775 = vpop.f32.mrb[0].mxu0
      %v776 = vadd.f32 0.0, %v775
      %v777 = vpop.f32.mrb[0].mxu0
      %778 = vmatprep.mubr.bf16.mxu0 0
      %779 = vmatmul.mubr.bf16.gmra.mrb[0].mxu0 %v683
      %v780 = vpop.f32.mrb[0].mxu0
      %v781 = vadd.f32 0.0, %v780
      %v782 = vpop.f32.mrb[0].mxu0
      %v783 = vpop.f32.mrb[0].mxu0
      %v784 = vadd.f32 0.0, %v783
      %v785 = vpop.f32.mrb[0].mxu0
      %786 = vmatprep.mubr.bf16.mxu0 0
      %787 = vmatmul.mubr.bf16.gmra.mrb[0].mxu0 %v684
      %v788 = vpop.f32.mrb[0].mxu0
      %v789 = vadd.f32 0.0, %v788
      %v790 = vpop.f32.mrb[0].mxu0
      %v791 = vpop.f32.mrb[0].mxu0
      %v792 = vadd.f32 0.0, %v791
      %v793 = vpop.f32.mrb[0].mxu0
      %794 = vmatprep.mubr.bf16.mxu0 0
      %795 = vmatmul.mubr.bf16.gmra.mrb[0].mxu0 %v685
      %v796 = vpop.f32.mrb[0].mxu0
      %v797 = vadd.f32 0.0, %v796
      %v798 = vpop.f32.mrb[0].mxu0
      %v799 = vpop.f32.mrb[0].mxu0
      %v800 = vadd.f32 0.0, %v799
      %v801 = vpop.f32.mrb[0].mxu0
      %802 = vdwg.mxu0
      %v803 = vadd.f32 %v610, %v773
      %v804 = vadd.f32 %v613, %v776
      %v805 = vadd.f32 %v618, %v781
      %v806 = vadd.f32 %v621, %v784
      %v807 = vadd.f32 %v626, %v789
      %v808 = vadd.f32 %v629, %v792
      %v809 = vadd.f32 %v634, %v797
      %v810 = vadd.f32 %v637, %v800
      %v811 = vld [vmem:[%s640] sm:$0xf]
      %v812 = vld [vmem:[%s640 + $0x4] sm:$0x1]
      %v813 = vld [vmem:[%s640 + $0x8] sm:$0xf]
      %v814 = vld [vmem:[%s640 + $0xc] sm:$0x1]
      %v815 = vld [vmem:[%s640 + $0x10] sm:$0xf]
      %v816 = vld [vmem:[%s640 + $0x14] sm:$0x1]
      %v817 = vld [vmem:[%s640 + $0x18] sm:$0xf]
      %v818 = vld [vmem:[%s640 + $0x1c] sm:$0x1]
      %v819 = vld [vmem:[%s640 + $0x20] sm:$0xf]
      %v820 = vld [vmem:[%s640 + $0x24] sm:$0x1]
      %v821 = vld [vmem:[%s640 + $0x28] sm:$0xf]
      %v822 = vld [vmem:[%s640 + $0x2c] sm:$0x1]
      %v823 = vld [vmem:[%s640 + $0x30] sm:$0xf]
      %v824 = vld [vmem:[%s640 + $0x34] sm:$0x1]
      %v825 = vld [vmem:[%s640 + $0x38] sm:$0xf]
      %v826 = vld [vmem:[%s640 + $0x3c] sm:$0x1]
      %v828 = vshrl.u32 %v811, 16
      %v830 = vrot.slane %v828, 4
      %v831 = vshll.u32 %v811, 16
      %v833 = vrot.slane %v831, 5
      %v834 = vor.u32 %v830, %v833
      %v835 = vrot.slane %v834, 4
      %v837 = vshll.u32 %v812, 16
      %v839 = vrot.slane %v837, 5
      %v840 = vsel %vm244, %v835, %v839
      %v842 = vshrl.u32 %v813, 16
      %v844 = vrot.slane %v842, 4
      %v845 = vshll.u32 %v813, 16
      %v847 = vrot.slane %v845, 5
      %v848 = vor.u32 %v844, %v847
      %v849 = vrot.slane %v848, 4
      %v851 = vshll.u32 %v814, 16
      %v853 = vrot.slane %v851, 5
      %v854 = vsel %vm244, %v849, %v853
      %v856 = vshrl.u32 %v815, 16
      %v858 = vrot.slane %v856, 4
      %v859 = vshll.u32 %v815, 16
      %v861 = vrot.slane %v859, 5
      %v862 = vor.u32 %v858, %v861
      %v863 = vrot.slane %v862, 4
      %v865 = vshll.u32 %v816, 16
      %v867 = vrot.slane %v865, 5
      %v868 = vsel %vm244, %v863, %v867
      %v870 = vshrl.u32 %v817, 16
      %v872 = vrot.slane %v870, 4
      %v873 = vshll.u32 %v817, 16
      %v875 = vrot.slane %v873, 5
      %v876 = vor.u32 %v872, %v875
      %v877 = vrot.slane %v876, 4
      %v879 = vshll.u32 %v818, 16
      %v881 = vrot.slane %v879, 5
      %v882 = vsel %vm244, %v877, %v881
      %v884 = vshrl.u32 %v819, 16
      %v886 = vrot.slane %v884, 4
      %v887 = vshll.u32 %v819, 16
      %v889 = vrot.slane %v887, 5
      %v890 = vor.u32 %v886, %v889
      %v891 = vrot.slane %v890, 4
      %v893 = vshll.u32 %v820, 16
      %v895 = vrot.slane %v893, 5
      %v896 = vsel %vm244, %v891, %v895
      %v898 = vshrl.u32 %v821, 16
      %v900 = vrot.slane %v898, 4
      %v901 = vshll.u32 %v821, 16
      %v903 = vrot.slane %v901, 5
      %v904 = vor.u32 %v900, %v903
      %v905 = vrot.slane %v904, 4
      %v907 = vshll.u32 %v822, 16
      %v909 = vrot.slane %v907, 5
      %v910 = vsel %vm244, %v905, %v909
      %v912 = vshrl.u32 %v823, 16
      %v914 = vrot.slane %v912, 4
      %v915 = vshll.u32 %v823, 16
      %v917 = vrot.slane %v915, 5
      %v918 = vor.u32 %v914, %v917
      %v919 = vrot.slane %v918, 4
      %v921 = vshll.u32 %v824, 16
      %v923 = vrot.slane %v921, 5
      %v924 = vsel %vm244, %v919, %v923
      %v926 = vshrl.u32 %v825, 16
      %v928 = vrot.slane %v926, 4
      %v929 = vshll.u32 %v825, 16
      %v931 = vrot.slane %v929, 5
      %v932 = vor.u32 %v928, %v931
      %v933 = vrot.slane %v932, 4
      %v935 = vshll.u32 %v826, 16
      %v937 = vrot.slane %v935, 5
      %v938 = vsel %vm244, %v933, %v937
      %s939 = scalar_lea.vmem %s1, 192
      %v940 = vld [vmem:[%s939] sm:$0xf]
      %v941 = vld [vmem:[%s939 + $0x4] sm:$0xf]
      %v942 = vld [vmem:[%s939 + $0x8] sm:$0xf]
      %v943 = vld [vmem:[%s939 + $0xc] sm:$0xf]
      %v944 = vld [vmem:[%s939 + $0x10] sm:$0xf]
      %v945 = vld [vmem:[%s939 + $0x14] sm:$0xf]
      %v946 = vld [vmem:[%s939 + $0x18] sm:$0xf]
      %v947 = vld [vmem:[%s939 + $0x1c] sm:$0xf]
      %v948 = vld [vmem:[%s939 + $0x20] sm:$0xf]
      %v949 = vld [vmem:[%s939 + $0x24] sm:$0xf]
      %v950 = vld [vmem:[%s939 + $0x28] sm:$0xf]
      %v951 = vld [vmem:[%s939 + $0x2c] sm:$0xf]
      %v952 = vld [vmem:[%s939 + $0x30] sm:$0xf]
      %v953 = vld [vmem:[%s939 + $0x34] sm:$0xf]
      %v954 = vld [vmem:[%s939 + $0x38] sm:$0xf]
      %v955 = vld [vmem:[%s939 + $0x3c] sm:$0xf]
      %v956 = vunpack.c.l.b16 %v840
      %v957 = vunpack.c.l.b16 %v854
      %v958 = vunpack.c.l.b16 %v868
      %v959 = vunpack.c.l.b16 %v882
      %v960 = vunpack.c.l.b16 %v896
      %v961 = vunpack.c.l.b16 %v910
      %v962 = vunpack.c.l.b16 %v924
      %v963 = vunpack.c.l.b16 %v938
      %v964 = vpack.c.b16 %v957, %v956
      %v965 = vpack.c.b16 %v959, %v958
      %v966 = vpack.c.b16 %v961, %v960
      %v967 = vpack.c.b16 %v963, %v962
      %v988 = vunpack.c.l.b16 %v940
      %v989 = vunpack.c.l.b16 %v941
      %v990 = vunpack.c.l.b16 %v942
      %v991 = vunpack.c.l.b16 %v943
      %v992 = vunpack.c.l.b16 %v944
      %v993 = vunpack.c.l.b16 %v945
      %v994 = vunpack.c.l.b16 %v946
      %v995 = vunpack.c.l.b16 %v947
      %v996 = vunpack.c.l.b16 %v948
      %v997 = vunpack.c.l.b16 %v949
      %v998 = vunpack.c.l.b16 %v950
      %v999 = vunpack.c.l.b16 %v951
      %v1000 = vunpack.c.l.b16 %v952
      %v1001 = vunpack.c.l.b16 %v953
      %v1002 = vunpack.c.l.b16 %v954
      %v1003 = vunpack.c.l.b16 %v955
      %v1004 = vpack.c.b16 %v989, %v988
      %v1005 = vpack.c.b16 %v991, %v990
      %v1006 = vpack.c.b16 %v993, %v992
      %v1007 = vpack.c.b16 %v995, %v994
      %v1008 = vpack.c.b16 %v997, %v996
      %v1009 = vpack.c.b16 %v999, %v998
      %v1010 = vpack.c.b16 %v1001, %v1000
      %v1011 = vpack.c.b16 %v1003, %v1002
      %1020 = vmatprep.subr.bf16.mxu0 0
      %1021 = vmatpush1.bf16.msra.mxu0 %v1004
      %1022 = vmatprep.subr.bf16.mxu0 0
      %1023 = vmatpush1.bf16.msra.mxu0 %v1005
      %1024 = vmatprep.subr.bf16.mxu0 0
      %1025 = vmatpush1.bf16.msra.mxu0 %v1006
      %1026 = vmatprep.subr.bf16.mxu0 0
      %1027 = vmatpush1.bf16.msra.mxu0 %v1007
      %1028 = vmatprep.subr.bf16.mxu0 0
      %1029 = vmatpush1.bf16.msra.mxu0 %v1008
      %1030 = vmatprep.subr.bf16.mxu0 0
      %1031 = vmatpush1.bf16.msra.mxu0 %v1009
      %1032 = vmatprep.subr.bf16.mxu0 0
      %1033 = vmatpush1.bf16.msra.mxu0 %v1010
      %1034 = vmatprep.subr.bf16.mxu0 0
      %1035 = vmatpush1.bf16.msra.mxu0 %v1011
      %1036 = vmatprep.subr.bf16.mxu0 0
      %1037 = vmatpush1.bf16.msra.mxu0 0
      %1038 = vmatprep.subr.bf16.mxu0 0
      %1039 = vmatpush1.bf16.msra.mxu0 0
      %1040 = vmatprep.subr.bf16.mxu0 0
      %1041 = vmatpush1.bf16.msra.mxu0 0
      %1042 = vmatprep.subr.bf16.mxu0 0
      %1043 = vmatpush1.bf16.msra.mxu0 0
      %1044 = vmatprep.subr.bf16.mxu0 0
      %1045 = vmatpush1.bf16.msra.mxu0 0
      %1046 = vmatprep.subr.bf16.mxu0 0
      %1047 = vmatpush1.bf16.msra.mxu0 0
      %1048 = vmatprep.subr.bf16.mxu0 0
      %1049 = vmatpush1.bf16.msra.mxu0 0
      %1050 = vmatprep.subr.bf16.mxu0 0
      %1051 = vmatpush1.bf16.msra.mxu0 0
      %1052 = vmatprep.mubr.bf16.mxu0 0
      %1053 = vmatmul.mubr.bf16.gmra.mrb[0].mxu0 %v964
      %v1054 = vpop.f32.mrb[0].mxu0
      %v1055 = vadd.f32 0.0, %v1054
      %v1056 = vpop.f32.mrb[0].mxu0
      %v1057 = vpop.f32.mrb[0].mxu0
      %v1058 = vadd.f32 0.0, %v1057
      %v1059 = vpop.f32.mrb[0].mxu0
      %1060 = vmatprep.mubr.bf16.mxu0 0
      %1061 = vmatmul.mubr.bf16.gmra.mrb[0].mxu0 %v965
      %v1062 = vpop.f32.mrb[0].mxu0
      %v1063 = vadd.f32 0.0, %v1062
      %v1064 = vpop.f32.mrb[0].mxu0
      %v1065 = vpop.f32.mrb[0].mxu0
      %v1066 = vadd.f32 0.0, %v1065
      %v1067 = vpop.f32.mrb[0].mxu0
      %1068 = vmatprep.mubr.bf16.mxu0 0
      %1069 = vmatmul.mubr.bf16.gmra.mrb[0].mxu0 %v966
      %v1070 = vpop.f32.mrb[0].mxu0
      %v1071 = vadd.f32 0.0, %v1070
      %v1072 = vpop.f32.mrb[0].mxu0
      %v1073 = vpop.f32.mrb[0].mxu0
      %v1074 = vadd.f32 0.0, %v1073
      %v1075 = vpop.f32.mrb[0].mxu0
      %1076 = vmatprep.mubr.bf16.mxu0 0
      %1077 = vmatmul.mubr.bf16.gmra.mrb[0].mxu0 %v967
      %v1078 = vpop.f32.mrb[0].mxu0
      %v1079 = vadd.f32 0.0, %v1078
      %v1080 = vpop.f32.mrb[0].mxu0
      %v1081 = vpop.f32.mrb[0].mxu0
      %v1082 = vadd.f32 0.0, %v1081
      %v1083 = vpop.f32.mrb[0].mxu0
      %1084 = vdwg.mxu0
      %v1085 = vadd.f32 %v803, %v1055
      %v1086 = vadd.f32 %v804, %v1058
      %v1087 = vadd.f32 %v805, %v1063
      %v1088 = vadd.f32 %v806, %v1066
      %v1089 = vadd.f32 %v807, %v1071
      %v1090 = vadd.f32 %v808, %v1074
      %v1091 = vadd.f32 %v809, %v1079
      %v1092 = vadd.f32 %v810, %v1082
      %v1093 = vmax.f32 %v1085, 0.0
      %v1094 = vmax.f32 %v1086, 0.0
      %v1095 = vmax.f32 %v1087, 0.0
      %v1096 = vmax.f32 %v1088, 0.0
      %v1097 = vmax.f32 %v1089, 0.0
      %v1098 = vmax.f32 %v1090, 0.0
      %v1099 = vmax.f32 %v1091, 0.0
      %v1100 = vmax.f32 %v1092, 0.0
      %v1101 = vpack.c.bf16 %v1094, %v1093
      %v1102 = vpack.c.bf16 %v1096, %v1095
      %v1103 = vpack.c.bf16 %v1098, %v1097
      %v1104 = vpack.c.bf16 %v1100, %v1099
      %1105 = vst [vmem:[#allocation2] sm:$0xf] 0
      %1106 = vst [vmem:[#allocation2 + $0x4] sm:$0x1] 0
      %1107 = vst [vmem:[#allocation2 + $0x8] sm:$0xf] 0
      %1108 = vst [vmem:[#allocation2 + $0xc] sm:$0x1] 0
      %1109 = vst [vmem:[#allocation2 + $0x10] sm:$0xf] 0
      %1110 = vst [vmem:[#allocation2 + $0x14] sm:$0x1] 0
      %1111 = vst [vmem:[#allocation2 + $0x18] sm:$0xf] 0
      %1112 = vst [vmem:[#allocation2 + $0x1c] sm:$0x1] 0
      %1113 = vst [vmem:[#allocation2 + $0x20] sm:$0xf] 0
      %1114 = vst [vmem:[#allocation2 + $0x24] sm:$0x1] 0
      %1115 = vst [vmem:[#allocation2 + $0x28] sm:$0xf] 0
      %1116 = vst [vmem:[#allocation2 + $0x2c] sm:$0x1] 0
      %1117 = vst [vmem:[#allocation2 + $0x30] sm:$0xf] 0
      %1118 = vst [vmem:[#allocation2 + $0x34] sm:$0x1] 0
      %1119 = vst [vmem:[#allocation2 + $0x38] sm:$0xf] 0
      %1120 = vst [vmem:[#allocation2 + $0x3c] sm:$0x1] 0
      %1121 = vst [vmem:[#allocation2 + $0x40] sm:$0xf] 0
      %1122 = vst [vmem:[#allocation2 + $0x44] sm:$0x1] 0
      %1123 = vst [vmem:[#allocation2 + $0x48] sm:$0xf] 0
      %1124 = vst [vmem:[#allocation2 + $0x4c] sm:$0x1] 0
      %v1129 = vunpack.c.l.b16 %v1101
      %v1130 = vunpack.c.h.b16 %v1101
      %v1131 = vunpack.c.l.b16 %v1102
      %v1132 = vunpack.c.h.b16 %v1102
      %v1133 = vunpack.c.l.b16 %v1103
      %v1134 = vunpack.c.h.b16 %v1103
      %v1135 = vunpack.c.l.b16 %v1104
      %v1136 = vunpack.c.h.b16 %v1104
      %v1137 = vpack.c.b16 %v1129, %v1129
      %v1138 = vpack.c.b16 %v1130, %v1130
      %v1139 = vpack.c.b16 %v1131, %v1131
      %v1140 = vpack.c.b16 %v1132, %v1132
      %v1141 = vpack.c.b16 %v1133, %v1133
      %v1142 = vpack.c.b16 %v1134, %v1134
      %v1143 = vpack.c.b16 %v1135, %v1135
      %v1144 = vpack.c.b16 %v1136, %v1136
      %v1146 = vshrl.u32 %v1137, 16
      %v1148 = vrot.slane %v1146, 7
      %v1149 = vshll.u32 %v1137, 16
      %v1151 = vor.u32 %v1148, %v1149
      %v1152 = vrot.slane %v1148, 4
      %v1154 = vshrl.u32 %v1138, 16
      %v1156 = vrot.slane %v1154, 7
      %v1157 = vshll.u32 %v1138, 16
      %v1159 = vor.u32 %v1156, %v1157
      %v1160 = vrot.slane %v1156, 4
      %v1162 = vshrl.u32 %v1139, 16
      %v1164 = vrot.slane %v1162, 7
      %v1165 = vshll.u32 %v1139, 16
      %v1167 = vor.u32 %v1164, %v1165
      %v1168 = vrot.slane %v1164, 4
      %v1170 = vshrl.u32 %v1140, 16
      %v1172 = vrot.slane %v1170, 7
      %v1173 = vshll.u32 %v1140, 16
      %v1175 = vor.u32 %v1172, %v1173
      %v1176 = vrot.slane %v1172, 4
      %v1178 = vshrl.u32 %v1141, 16
      %v1180 = vrot.slane %v1178, 7
      %v1181 = vshll.u32 %v1141, 16
      %v1183 = vor.u32 %v1180, %v1181
      %v1184 = vrot.slane %v1180, 4
      %v1186 = vshrl.u32 %v1142, 16
      %v1188 = vrot.slane %v1186, 7
      %v1189 = vshll.u32 %v1142, 16
      %v1191 = vor.u32 %v1188, %v1189
      %v1192 = vrot.slane %v1188, 4
      %v1194 = vshrl.u32 %v1143, 16
      %v1196 = vrot.slane %v1194, 7
      %v1197 = vshll.u32 %v1143, 16
      %v1199 = vor.u32 %v1196, %v1197
      %v1200 = vrot.slane %v1196, 4
      %v1202 = vshrl.u32 %v1144, 16
      %v1204 = vrot.slane %v1202, 7
      %v1205 = vshll.u32 %v1144, 16
      %v1207 = vor.u32 %v1204, %v1205
      %v1208 = vrot.slane %v1204, 4
      %s1225 = scalar_lea.vmem [#allocation2], 8
      %vm1226 = vcmask 1043456
      %vm1227 = vsmask.f32 7938
      %vm1228 = vmand %vm1226, %vm1227
      %v1229 = vld [vmem:[%s1225] sm:$0xf]
      %v1230 = vsel %vm1228, %v1151, %v1229
      %1231 = vst [vmem:[%s1225] sm:$0xf] %v1230
      %vm1232 = vcmask 1040384
      %vm1233 = vsmask.f32 256
      %vm1234 = vmand %vm1232, %vm1233
      %v1235 = vld [vmem:[%s1225 + $0x4] sm:$0x1]
      %v1236 = vsel %vm1234, %v1152, %v1235
      %1237 = vst [vmem:[%s1225 + $0x4] sm:$0x1] %v1236
      %v1238 = vld [vmem:[%s1225 + $0x8] sm:$0xf]
      %v1239 = vsel %vm1228, %v1159, %v1238
      %1240 = vst [vmem:[%s1225 + $0x8] sm:$0xf] %v1239
      %v1241 = vld [vmem:[%s1225 + $0xc] sm:$0x1]
      %v1242 = vsel %vm1234, %v1160, %v1241
      %1243 = vst [vmem:[%s1225 + $0xc] sm:$0x1] %v1242
      %v1244 = vld [vmem:[%s1225 + $0x10] sm:$0xf]
      %v1245 = vsel %vm1228, %v1167, %v1244
      %1246 = vst [vmem:[%s1225 + $0x10] sm:$0xf] %v1245
      %v1247 = vld [vmem:[%s1225 + $0x14] sm:$0x1]
      %v1248 = vsel %vm1234, %v1168, %v1247
      %1249 = vst [vmem:[%s1225 + $0x14] sm:$0x1] %v1248
      %v1250 = vld [vmem:[%s1225 + $0x18] sm:$0xf]
      %v1251 = vsel %vm1228, %v1175, %v1250
      %1252 = vst [vmem:[%s1225 + $0x18] sm:$0xf] %v1251
      %v1253 = vld [vmem:[%s1225 + $0x1c] sm:$0x1]
      %v1254 = vsel %vm1234, %v1176, %v1253
      %1255 = vst [vmem:[%s1225 + $0x1c] sm:$0x1] %v1254
      %v1256 = vld [vmem:[%s1225 + $0x20] sm:$0xf]
      %v1257 = vsel %vm1228, %v1183, %v1256
      %1258 = vst [vmem:[%s1225 + $0x20] sm:$0xf] %v1257
      %v1259 = vld [vmem:[%s1225 + $0x24] sm:$0x1]
      %v1260 = vsel %vm1234, %v1184, %v1259
      %1261 = vst [vmem:[%s1225 + $0x24] sm:$0x1] %v1260
      %v1262 = vld [vmem:[%s1225 + $0x28] sm:$0xf]
      %v1263 = vsel %vm1228, %v1191, %v1262
      %1264 = vst [vmem:[%s1225 + $0x28] sm:$0xf] %v1263
      %v1265 = vld [vmem:[%s1225 + $0x2c] sm:$0x1]
      %v1266 = vsel %vm1234, %v1192, %v1265
      %1267 = vst [vmem:[%s1225 + $0x2c] sm:$0x1] %v1266
      %v1268 = vld [vmem:[%s1225 + $0x30] sm:$0xf]
      %v1269 = vsel %vm1228, %v1199, %v1268
      %1270 = vst [vmem:[%s1225 + $0x30] sm:$0xf] %v1269
      %v1271 = vld [vmem:[%s1225 + $0x34] sm:$0x1]
      %v1272 = vsel %vm1234, %v1200, %v1271
      %1273 = vst [vmem:[%s1225 + $0x34] sm:$0x1] %v1272
      %v1274 = vld [vmem:[%s1225 + $0x38] sm:$0xf]
      %v1275 = vsel %vm1228, %v1207, %v1274
      %1276 = vst [vmem:[%s1225 + $0x38] sm:$0xf] %v1275
      %v1277 = vld [vmem:[%s1225 + $0x3c] sm:$0x1]
      %v1278 = vsel %vm1234, %v1208, %v1277
      %1279 = vst [vmem:[%s1225 + $0x3c] sm:$0x1] %v1278
      %v1280 = vld [vmem:[#allocation2] sm:$0xf]
      %v1281 = vld [vmem:[#allocation2 + $0x8] sm:$0xf]
      %v1282 = vld [vmem:[#allocation2 + $0x10] sm:$0xf]
      %v1283 = vld [vmem:[#allocation2 + $0x18] sm:$0xf]
      %v1284 = vld [vmem:[#allocation2 + $0x20] sm:$0xf]
      %v1285 = vld [vmem:[#allocation2 + $0x28] sm:$0xf]
      %v1286 = vld [vmem:[#allocation2 + $0x30] sm:$0xf]
      %v1287 = vld [vmem:[#allocation2 + $0x38] sm:$0xf]
      %v1288 = vld [vmem:[%s2] sm:$0xf]
      %v1289 = vld [vmem:[%s2 + $0x4] sm:$0xf]
      %v1290 = vld [vmem:[%s2 + $0x8] sm:$0xf]
      %v1291 = vld [vmem:[%s2 + $0xc] sm:$0xf]
      %v1292 = vld [vmem:[%s2 + $0x10] sm:$0xf]
      %v1293 = vld [vmem:[%s2 + $0x14] sm:$0xf]
      %v1294 = vld [vmem:[%s2 + $0x18] sm:$0xf]
      %v1295 = vld [vmem:[%s2 + $0x1c] sm:$0xf]
      %v1296 = vld [vmem:[%s2 + $0x20] sm:$0xf]
      %v1297 = vld [vmem:[%s2 + $0x24] sm:$0xf]
      %v1298 = vld [vmem:[%s2 + $0x28] sm:$0xf]
      %v1299 = vld [vmem:[%s2 + $0x2c] sm:$0xf]
      %v1300 = vld [vmem:[%s2 + $0x30] sm:$0xf]
      %v1301 = vld [vmem:[%s2 + $0x34] sm:$0xf]
      %v1302 = vld [vmem:[%s2 + $0x38] sm:$0xf]
      %v1303 = vld [vmem:[%s2 + $0x3c] sm:$0xf]
      %v1304 = vld [vmem:[#allocation2 + $0x4] sm:$0x1]
      %v1305 = vld [vmem:[#allocation2 + $0xc] sm:$0x1]
      %v1306 = vld [vmem:[#allocation2 + $0x14] sm:$0x1]
      %v1307 = vld [vmem:[#allocation2 + $0x1c] sm:$0x1]
      %v1308 = vld [vmem:[#allocation2 + $0x24] sm:$0x1]
      %v1309 = vld [vmem:[#allocation2 + $0x2c] sm:$0x1]
      %v1310 = vld [vmem:[#allocation2 + $0x34] sm:$0x1]
      %v1311 = vld [vmem:[#allocation2 + $0x3c] sm:$0x1]
      %v1313 = vshrl.u32 %v1280, 16
      %v1315 = vrot.slane %v1313, 4
      %v1316 = vshll.u32 %v1280, 16
      %v1318 = vrot.slane %v1316, 5
      %v1319 = vor.u32 %v1315, %v1318
      %v1320 = vrot.slane %v1319, 4
      %v1322 = vshll.u32 %v1304, 16
      %v1324 = vrot.slane %v1322, 5
      %v1325 = vsel %vm244, %v1320, %v1324
      %v1327 = vshrl.u32 %v1281, 16
      %v1329 = vrot.slane %v1327, 4
      %v1330 = vshll.u32 %v1281, 16
      %v1332 = vrot.slane %v1330, 5
      %v1333 = vor.u32 %v1329, %v1332
      %v1334 = vrot.slane %v1333, 4
      %v1336 = vshll.u32 %v1305, 16
      %v1338 = vrot.slane %v1336, 5
      %v1339 = vsel %vm244, %v1334, %v1338
      %v1341 = vshrl.u32 %v1282, 16
      %v1343 = vrot.slane %v1341, 4
      %v1344 = vshll.u32 %v1282, 16
      %v1346 = vrot.slane %v1344, 5
      %v1347 = vor.u32 %v1343, %v1346
      %v1348 = vrot.slane %v1347, 4
      %v1350 = vshll.u32 %v1306, 16
      %v1352 = vrot.slane %v1350, 5
      %v1353 = vsel %vm244, %v1348, %v1352
      %v1355 = vshrl.u32 %v1283, 16
      %v1357 = vrot.slane %v1355, 4
      %v1358 = vshll.u32 %v1283, 16
      %v1360 = vrot.slane %v1358, 5
      %v1361 = vor.u32 %v1357, %v1360
      %v1362 = vrot.slane %v1361, 4
      %v1364 = vshll.u32 %v1307, 16
      %v1366 = vrot.slane %v1364, 5
      %v1367 = vsel %vm244, %v1362, %v1366
      %v1369 = vshrl.u32 %v1284, 16
      %v1371 = vrot.slane %v1369, 4
      %v1372 = vshll.u32 %v1284, 16
      %v1374 = vrot.slane %v1372, 5
      %v1375 = vor.u32 %v1371, %v1374
      %v1376 = vrot.slane %v1375, 4
      %v1378 = vshll.u32 %v1308, 16
      %v1380 = vrot.slane %v1378, 5
      %v1381 = vsel %vm244, %v1376, %v1380
      %v1383 = vshrl.u32 %v1285, 16
      %v1385 = vrot.slane %v1383, 4
      %v1386 = vshll.u32 %v1285, 16
      %v1388 = vrot.slane %v1386, 5
      %v1389 = vor.u32 %v1385, %v1388
      %v1390 = vrot.slane %v1389, 4
      %v1392 = vshll.u32 %v1309, 16
      %v1394 = vrot.slane %v1392, 5
      %v1395 = vsel %vm244, %v1390, %v1394
      %v1397 = vshrl.u32 %v1286, 16
      %v1399 = vrot.slane %v1397, 4
      %v1400 = vshll.u32 %v1286, 16
      %v1402 = vrot.slane %v1400, 5
      %v1403 = vor.u32 %v1399, %v1402
      %v1404 = vrot.slane %v1403, 4
      %v1406 = vshll.u32 %v1310, 16
      %v1408 = vrot.slane %v1406, 5
      %v1409 = vsel %vm244, %v1404, %v1408
      %v1411 = vshrl.u32 %v1287, 16
      %v1413 = vrot.slane %v1411, 4
      %v1414 = vshll.u32 %v1287, 16
      %v1416 = vrot.slane %v1414, 5
      %v1417 = vor.u32 %v1413, %v1416
      %v1418 = vrot.slane %v1417, 4
      %v1420 = vshll.u32 %v1311, 16
      %v1422 = vrot.slane %v1420, 5
      %v1423 = vsel %vm244, %v1418, %v1422
      %s1424 = scalar_lea.vmem %s2, 64
      %v1425 = vld [vmem:[%s1424] sm:$0xf]
      %v1426 = vld [vmem:[%s1424 + $0x4] sm:$0xf]
      %v1427 = vld [vmem:[%s1424 + $0x8] sm:$0xf]
      %v1428 = vld [vmem:[%s1424 + $0xc] sm:$0xf]
      %v1429 = vld [vmem:[%s1424 + $0x10] sm:$0xf]
      %v1430 = vld [vmem:[%s1424 + $0x14] sm:$0xf]
      %v1431 = vld [vmem:[%s1424 + $0x18] sm:$0xf]
      %v1432 = vld [vmem:[%s1424 + $0x1c] sm:$0xf]
      %v1433 = vld [vmem:[%s1424 + $0x20] sm:$0xf]
      %v1434 = vld [vmem:[%s1424 + $0x24] sm:$0xf]
      %v1435 = vld [vmem:[%s1424 + $0x28] sm:$0xf]
      %v1436 = vld [vmem:[%s1424 + $0x2c] sm:$0xf]
      %v1437 = vld [vmem:[%s1424 + $0x30] sm:$0xf]
      %v1438 = vld [vmem:[%s1424 + $0x34] sm:$0xf]
      %v1439 = vld [vmem:[%s1424 + $0x38] sm:$0xf]
      %v1440 = vld [vmem:[%s1424 + $0x3c] sm:$0xf]
      %v1441 = vunpack.c.l.b16 %v1325
      %v1442 = vunpack.c.l.b16 %v1339
      %v1443 = vunpack.c.l.b16 %v1353
      %v1444 = vunpack.c.l.b16 %v1367
      %v1445 = vunpack.c.l.b16 %v1381
      %v1446 = vunpack.c.l.b16 %v1395
      %v1447 = vunpack.c.l.b16 %v1409
      %v1448 = vunpack.c.l.b16 %v1423
      %v1449 = vpack.c.b16 %v1442, %v1441
      %v1450 = vpack.c.b16 %v1444, %v1443
      %v1451 = vpack.c.b16 %v1446, %v1445
      %v1452 = vpack.c.b16 %v1448, %v1447
      %v1473 = vunpack.c.l.b16 %v1425
      %v1474 = vunpack.c.l.b16 %v1426
      %v1475 = vunpack.c.l.b16 %v1427
      %v1476 = vunpack.c.l.b16 %v1428
      %v1477 = vunpack.c.l.b16 %v1429
      %v1478 = vunpack.c.l.b16 %v1430
      %v1479 = vunpack.c.l.b16 %v1431
      %v1480 = vunpack.c.l.b16 %v1432
      %v1481 = vunpack.c.l.b16 %v1433
      %v1482 = vunpack.c.l.b16 %v1434
      %v1483 = vunpack.c.l.b16 %v1435
      %v1484 = vunpack.c.l.b16 %v1436
      %v1485 = vunpack.c.l.b16 %v1437
      %v1486 = vunpack.c.l.b16 %v1438
      %v1487 = vunpack.c.l.b16 %v1439
      %v1488 = vunpack.c.l.b16 %v1440
      %v1489 = vpack.c.b16 %v1474, %v1473
      %v1490 = vpack.c.b16 %v1476, %v1475
      %v1491 = vpack.c.b16 %v1478, %v1477
      %v1492 = vpack.c.b16 %v1480, %v1479
      %v1493 = vpack.c.b16 %v1482, %v1481
      %v1494 = vpack.c.b16 %v1484, %v1483
      %v1495 = vpack.c.b16 %v1486, %v1485
      %v1496 = vpack.c.b16 %v1488, %v1487
      %1505 = vmatprep.subr.bf16.mxu0 0
      %1506 = vmatpush1.bf16.msra.mxu0 %v1489
      %1507 = vmatprep.subr.bf16.mxu0 0
      %1508 = vmatpush1.bf16.msra.mxu0 %v1490
      %1509 = vmatprep.subr.bf16.mxu0 0
      %1510 = vmatpush1.bf16.msra.mxu0 %v1491
      %1511 = vmatprep.subr.bf16.mxu0 0
      %1512 = vmatpush1.bf16.msra.mxu0 %v1492
      %1513 = vmatprep.subr.bf16.mxu0 0
      %1514 = vmatpush1.bf16.msra.mxu0 %v1493
      %1515 = vmatprep.subr.bf16.mxu0 0
      %1516 = vmatpush1.bf16.msra.mxu0 %v1494
      %1517 = vmatprep.subr.bf16.mxu0 0
      %1518 = vmatpush1.bf16.msra.mxu0 %v1495
      %1519 = vmatprep.subr.bf16.mxu0 0
      %1520 = vmatpush1.bf16.msra.mxu0 %v1496
      %1521 = vmatprep.subr.bf16.mxu0 0
      %1522 = vmatpush1.bf16.msra.mxu0 0
      %1523 = vmatprep.subr.bf16.mxu0 0
      %1524 = vmatpush1.bf16.msra.mxu0 0
      %1525 = vmatprep.subr.bf16.mxu0 0
      %1526 = vmatpush1.bf16.msra.mxu0 0
      %1527 = vmatprep.subr.bf16.mxu0 0
      %1528 = vmatpush1.bf16.msra.mxu0 0
      %1529 = vmatprep.subr.bf16.mxu0 0
      %1530 = vmatpush1.bf16.msra.mxu0 0
      %1531 = vmatprep.subr.bf16.mxu0 0
      %1532 = vmatpush1.bf16.msra.mxu0 0
      %1533 = vmatprep.subr.bf16.mxu0 0
      %1534 = vmatpush1.bf16.msra.mxu0 0
      %1535 = vmatprep.subr.bf16.mxu0 0
      %1536 = vmatpush1.bf16.msra.mxu0 0
      %1537 = vmatprep.mubr.bf16.mxu0 0
      %1538 = vmatmul.mubr.bf16.gmra.mrb[0].mxu0 %v1449
      %v1539 = vpop.f32.mrb[0].mxu0
      %v1540 = vadd.f32 0.0, %v1539
      %v1541 = vpop.f32.mrb[0].mxu0
      %v1542 = vpop.f32.mrb[0].mxu0
      %v1543 = vadd.f32 0.0, %v1542
      %v1544 = vpop.f32.mrb[0].mxu0
      %1545 = vmatprep.mubr.bf16.mxu0 0
      %1546 = vmatmul.mubr.bf16.gmra.mrb[0].mxu0 %v1450
      %v1547 = vpop.f32.mrb[0].mxu0
      %v1548 = vadd.f32 0.0, %v1547
      %v1549 = vpop.f32.mrb[0].mxu0
      %v1550 = vpop.f32.mrb[0].mxu0
      %v1551 = vadd.f32 0.0, %v1550
      %v1552 = vpop.f32.mrb[0].mxu0
      %1553 = vmatprep.mubr.bf16.mxu0 0
      %1554 = vmatmul.mubr.bf16.gmra.mrb[0].mxu0 %v1451
      %v1555 = vpop.f32.mrb[0].mxu0
      %v1556 = vadd.f32 0.0, %v1555
      %v1557 = vpop.f32.mrb[0].mxu0
      %v1558 = vpop.f32.mrb[0].mxu0
      %v1559 = vadd.f32 0.0, %v1558
      %v1560 = vpop.f32.mrb[0].mxu0
      %1561 = vmatprep.mubr.bf16.mxu0 0
      %1562 = vmatmul.mubr.bf16.gmra.mrb[0].mxu0 %v1452
      %v1563 = vpop.f32.mrb[0].mxu0
      %v1564 = vadd.f32 0.0, %v1563
      %v1565 = vpop.f32.mrb[0].mxu0
      %v1566 = vpop.f32.mrb[0].mxu0
      %v1567 = vadd.f32 0.0, %v1566
      %v1568 = vpop.f32.mrb[0].mxu0
      %1569 = vdwg.mxu0
      %v1578 = vunpack.c.l.b16 %v1280
      %v1579 = vunpack.c.l.b16 %v1281
      %v1580 = vunpack.c.l.b16 %v1282
      %v1581 = vunpack.c.l.b16 %v1283
      %v1582 = vunpack.c.l.b16 %v1284
      %v1583 = vunpack.c.l.b16 %v1285
      %v1584 = vunpack.c.l.b16 %v1286
      %v1585 = vunpack.c.l.b16 %v1287
      %v1586 = vpack.c.b16 %v1579, %v1578
      %v1587 = vpack.c.b16 %v1581, %v1580
      %v1588 = vpack.c.b16 %v1583, %v1582
      %v1589 = vpack.c.b16 %v1585, %v1584
      %v1610 = vunpack.c.l.b16 %v1288
      %v1611 = vunpack.c.l.b16 %v1289
      %v1612 = vunpack.c.l.b16 %v1290
      %v1613 = vunpack.c.l.b16 %v1291
      %v1614 = vunpack.c.l.b16 %v1292
      %v1615 = vunpack.c.l.b16 %v1293
      %v1616 = vunpack.c.l.b16 %v1294
      %v1617 = vunpack.c.l.b16 %v1295
      %v1618 = vunpack.c.l.b16 %v1296
      %v1619 = vunpack.c.l.b16 %v1297
      %v1620 = vunpack.c.l.b16 %v1298
      %v1621 = vunpack.c.l.b16 %v1299
      %v1622 = vunpack.c.l.b16 %v1300
      %v1623 = vunpack.c.l.b16 %v1301
      %v1624 = vunpack.c.l.b16 %v1302
      %v1625 = vunpack.c.l.b16 %v1303
      %v1626 = vpack.c.b16 %v1611, %v1610
      %v1627 = vpack.c.b16 %v1613, %v1612
      %v1628 = vpack.c.b16 %v1615, %v1614
      %v1629 = vpack.c.b16 %v1617, %v1616
      %v1630 = vpack.c.b16 %v1619, %v1618
      %v1631 = vpack.c.b16 %v1621, %v1620
      %v1632 = vpack.c.b16 %v1623, %v1622
      %v1633 = vpack.c.b16 %v1625, %v1624
      %1642 = vmatprep.subr.bf16.mxu0 0
      %1643 = vmatpush1.bf16.msra.mxu0 %v1626
      %1644 = vmatprep.subr.bf16.mxu0 0
      %1645 = vmatpush1.bf16.msra.mxu0 %v1627
      %1646 = vmatprep.subr.bf16.mxu0 0
      %1647 = vmatpush1.bf16.msra.mxu0 %v1628
      %1648 = vmatprep.subr.bf16.mxu0 0
      %1649 = vmatpush1.bf16.msra.mxu0 %v1629
      %1650 = vmatprep.subr.bf16.mxu0 0
      %1651 = vmatpush1.bf16.msra.mxu0 %v1630
      %1652 = vmatprep.subr.bf16.mxu0 0
      %1653 = vmatpush1.bf16.msra.mxu0 %v1631
      %1654 = vmatprep.subr.bf16.mxu0 0
      %1655 = vmatpush1.bf16.msra.mxu0 %v1632
      %1656 = vmatprep.subr.bf16.mxu0 0
      %1657 = vmatpush1.bf16.msra.mxu0 %v1633
      %1658 = vmatprep.subr.bf16.mxu0 0
      %1659 = vmatpush1.bf16.msra.mxu0 0
      %1660 = vmatprep.subr.bf16.mxu0 0
      %1661 = vmatpush1.bf16.msra.mxu0 0
      %1662 = vmatprep.subr.bf16.mxu0 0
      %1663 = vmatpush1.bf16.msra.mxu0 0
      %1664 = vmatprep.subr.bf16.mxu0 0
      %1665 = vmatpush1.bf16.msra.mxu0 0
      %1666 = vmatprep.subr.bf16.mxu0 0
      %1667 = vmatpush1.bf16.msra.mxu0 0
      %1668 = vmatprep.subr.bf16.mxu0 0
      %1669 = vmatpush1.bf16.msra.mxu0 0
      %1670 = vmatprep.subr.bf16.mxu0 0
      %1671 = vmatpush1.bf16.msra.mxu0 0
      %1672 = vmatprep.subr.bf16.mxu0 0
      %1673 = vmatpush1.bf16.msra.mxu0 0
      %1674 = vmatprep.mubr.bf16.mxu0 0
      %1675 = vmatmul.mubr.bf16.gmra.mrb[0].mxu0 %v1586
      %v1676 = vpop.f32.mrb[0].mxu0
      %v1677 = vadd.f32 %v1540, %v1676
      %v1678 = vpop.f32.mrb[0].mxu0
      %v1679 = vpop.f32.mrb[0].mxu0
      %v1680 = vadd.f32 %v1543, %v1679
      %v1681 = vpop.f32.mrb[0].mxu0
      %1682 = vmatprep.mubr.bf16.mxu0 0
      %1683 = vmatmul.mubr.bf16.gmra.mrb[0].mxu0 %v1587
      %v1684 = vpop.f32.mrb[0].mxu0
      %v1685 = vadd.f32 %v1548, %v1684
      %v1686 = vpop.f32.mrb[0].mxu0
      %v1687 = vpop.f32.mrb[0].mxu0
      %v1688 = vadd.f32 %v1551, %v1687
      %v1689 = vpop.f32.mrb[0].mxu0
      %1690 = vmatprep.mubr.bf16.mxu0 0
      %1691 = vmatmul.mubr.bf16.gmra.mrb[0].mxu0 %v1588
      %v1692 = vpop.f32.mrb[0].mxu0
      %v1693 = vadd.f32 %v1556, %v1692
      %v1694 = vpop.f32.mrb[0].mxu0
      %v1695 = vpop.f32.mrb[0].mxu0
      %v1696 = vadd.f32 %v1559, %v1695
      %v1697 = vpop.f32.mrb[0].mxu0
      %1698 = vmatprep.mubr.bf16.mxu0 0
      %1699 = vmatmul.mubr.bf16.gmra.mrb[0].mxu0 %v1589
      %v1700 = vpop.f32.mrb[0].mxu0
      %v1701 = vadd.f32 %v1564, %v1700
      %v1702 = vpop.f32.mrb[0].mxu0
      %v1703 = vpop.f32.mrb[0].mxu0
      %v1704 = vadd.f32 %v1567, %v1703
      %v1705 = vpop.f32.mrb[0].mxu0
      %1706 = vdwg.mxu0
      %v1707 = vld [vmem:[%s1225] sm:$0xf]
      %v1708 = vld [vmem:[%s1225 + $0x8] sm:$0xf]
      %v1709 = vld [vmem:[%s1225 + $0x10] sm:$0xf]
      %v1710 = vld [vmem:[%s1225 + $0x18] sm:$0xf]
      %v1711 = vld [vmem:[%s1225 + $0x20] sm:$0xf]
      %v1712 = vld [vmem:[%s1225 + $0x28] sm:$0xf]
      %v1713 = vld [vmem:[%s1225 + $0x30] sm:$0xf]
      %v1714 = vld [vmem:[%s1225 + $0x38] sm:$0xf]
      %s1715 = scalar_lea.vmem %s2, 128
      %v1716 = vld [vmem:[%s1715] sm:$0xf]
      %v1717 = vld [vmem:[%s1715 + $0x4] sm:$0xf]
      %v1718 = vld [vmem:[%s1715 + $0x8] sm:$0xf]
      %v1719 = vld [vmem:[%s1715 + $0xc] sm:$0xf]
      %v1720 = vld [vmem:[%s1715 + $0x10] sm:$0xf]
      %v1721 = vld [vmem:[%s1715 + $0x14] sm:$0xf]
      %v1722 = vld [vmem:[%s1715 + $0x18] sm:$0xf]
      %v1723 = vld [vmem:[%s1715 + $0x1c] sm:$0xf]
      %v1724 = vld [vmem:[%s1715 + $0x20] sm:$0xf]
      %v1725 = vld [vmem:[%s1715 + $0x24] sm:$0xf]
      %v1726 = vld [vmem:[%s1715 + $0x28] sm:$0xf]
      %v1727 = vld [vmem:[%s1715 + $0x2c] sm:$0xf]
      %v1728 = vld [vmem:[%s1715 + $0x30] sm:$0xf]
      %v1729 = vld [vmem:[%s1715 + $0x34] sm:$0xf]
      %v1730 = vld [vmem:[%s1715 + $0x38] sm:$0xf]
      %v1731 = vld [vmem:[%s1715 + $0x3c] sm:$0xf]
      %v1740 = vunpack.c.l.b16 %v1707
      %v1741 = vunpack.c.l.b16 %v1708
      %v1742 = vunpack.c.l.b16 %v1709
      %v1743 = vunpack.c.l.b16 %v1710
      %v1744 = vunpack.c.l.b16 %v1711
      %v1745 = vunpack.c.l.b16 %v1712
      %v1746 = vunpack.c.l.b16 %v1713
      %v1747 = vunpack.c.l.b16 %v1714
      %v1748 = vpack.c.b16 %v1741, %v1740
      %v1749 = vpack.c.b16 %v1743, %v1742
      %v1750 = vpack.c.b16 %v1745, %v1744
      %v1751 = vpack.c.b16 %v1747, %v1746
      %v1772 = vunpack.c.l.b16 %v1716
      %v1773 = vunpack.c.l.b16 %v1717
      %v1774 = vunpack.c.l.b16 %v1718
      %v1775 = vunpack.c.l.b16 %v1719
      %v1776 = vunpack.c.l.b16 %v1720
      %v1777 = vunpack.c.l.b16 %v1721
      %v1778 = vunpack.c.l.b16 %v1722
      %v1779 = vunpack.c.l.b16 %v1723
      %v1780 = vunpack.c.l.b16 %v1724
      %v1781 = vunpack.c.l.b16 %v1725
      %v1782 = vunpack.c.l.b16 %v1726
      %v1783 = vunpack.c.l.b16 %v1727
      %v1784 = vunpack.c.l.b16 %v1728
      %v1785 = vunpack.c.l.b16 %v1729
      %v1786 = vunpack.c.l.b16 %v1730
      %v1787 = vunpack.c.l.b16 %v1731
      %v1788 = vpack.c.b16 %v1773, %v1772
      %v1789 = vpack.c.b16 %v1775, %v1774
      %v1790 = vpack.c.b16 %v1777, %v1776
      %v1791 = vpack.c.b16 %v1779, %v1778
      %v1792 = vpack.c.b16 %v1781, %v1780
      %v1793 = vpack.c.b16 %v1783, %v1782
      %v1794 = vpack.c.b16 %v1785, %v1784
      %v1795 = vpack.c.b16 %v1787, %v1786
      %1804 = vmatprep.subr.bf16.mxu0 0
      %1805 = vmatpush1.bf16.msra.mxu0 %v1788
      %1806 = vmatprep.subr.bf16.mxu0 0
      %1807 = vmatpush1.bf16.msra.mxu0 %v1789
      %1808 = vmatprep.subr.bf16.mxu0 0
      %1809 = vmatpush1.bf16.msra.mxu0 %v1790
      %1810 = vmatprep.subr.bf16.mxu0 0
      %1811 = vmatpush1.bf16.msra.mxu0 %v1791
      %1812 = vmatprep.subr.bf16.mxu0 0
      %1813 = vmatpush1.bf16.msra.mxu0 %v1792
      %1814 = vmatprep.subr.bf16.mxu0 0
      %1815 = vmatpush1.bf16.msra.mxu0 %v1793
      %1816 = vmatprep.subr.bf16.mxu0 0
      %1817 = vmatpush1.bf16.msra.mxu0 %v1794
      %1818 = vmatprep.subr.bf16.mxu0 0
      %1819 = vmatpush1.bf16.msra.mxu0 %v1795
      %1820 = vmatprep.subr.bf16.mxu0 0
      %1821 = vmatpush1.bf16.msra.mxu0 0
      %1822 = vmatprep.subr.bf16.mxu0 0
      %1823 = vmatpush1.bf16.msra.mxu0 0
      %1824 = vmatprep.subr.bf16.mxu0 0
      %1825 = vmatpush1.bf16.msra.mxu0 0
      %1826 = vmatprep.subr.bf16.mxu0 0
      %1827 = vmatpush1.bf16.msra.mxu0 0
      %1828 = vmatprep.subr.bf16.mxu0 0
      %1829 = vmatpush1.bf16.msra.mxu0 0
      %1830 = vmatprep.subr.bf16.mxu0 0
      %1831 = vmatpush1.bf16.msra.mxu0 0
      %1832 = vmatprep.subr.bf16.mxu0 0
      %1833 = vmatpush1.bf16.msra.mxu0 0
      %1834 = vmatprep.subr.bf16.mxu0 0
      %1835 = vmatpush1.bf16.msra.mxu0 0
      %1836 = vmatprep.mubr.bf16.mxu0 0
      %1837 = vmatmul.mubr.bf16.gmra.mrb[0].mxu0 %v1748
      %v1838 = vpop.f32.mrb[0].mxu0
      %v1839 = vadd.f32 0.0, %v1838
      %v1840 = vpop.f32.mrb[0].mxu0
      %v1841 = vpop.f32.mrb[0].mxu0
      %v1842 = vadd.f32 0.0, %v1841
      %v1843 = vpop.f32.mrb[0].mxu0
      %1844 = vmatprep.mubr.bf16.mxu0 0
      %1845 = vmatmul.mubr.bf16.gmra.mrb[0].mxu0 %v1749
      %v1846 = vpop.f32.mrb[0].mxu0
      %v1847 = vadd.f32 0.0, %v1846
      %v1848 = vpop.f32.mrb[0].mxu0
      %v1849 = vpop.f32.mrb[0].mxu0
      %v1850 = vadd.f32 0.0, %v1849
      %v1851 = vpop.f32.mrb[0].mxu0
      %1852 = vmatprep.mubr.bf16.mxu0 0
      %1853 = vmatmul.mubr.bf16.gmra.mrb[0].mxu0 %v1750
      %v1854 = vpop.f32.mrb[0].mxu0
      %v1855 = vadd.f32 0.0, %v1854
      %v1856 = vpop.f32.mrb[0].mxu0
      %v1857 = vpop.f32.mrb[0].mxu0
      %v1858 = vadd.f32 0.0, %v1857
      %v1859 = vpop.f32.mrb[0].mxu0
      %1860 = vmatprep.mubr.bf16.mxu0 0
      %1861 = vmatmul.mubr.bf16.gmra.mrb[0].mxu0 %v1751
      %v1862 = vpop.f32.mrb[0].mxu0
      %v1863 = vadd.f32 0.0, %v1862
      %v1864 = vpop.f32.mrb[0].mxu0
      %v1865 = vpop.f32.mrb[0].mxu0
      %v1866 = vadd.f32 0.0, %v1865
      %v1867 = vpop.f32.mrb[0].mxu0
      %1868 = vdwg.mxu0
      %v1869 = vadd.f32 %v1677, %v1839
      %v1870 = vadd.f32 %v1680, %v1842
      %v1871 = vadd.f32 %v1685, %v1847
      %v1872 = vadd.f32 %v1688, %v1850
      %v1873 = vadd.f32 %v1693, %v1855
      %v1874 = vadd.f32 %v1696, %v1858
      %v1875 = vadd.f32 %v1701, %v1863
      %v1876 = vadd.f32 %v1704, %v1866
      %v1877 = vld [vmem:[%s1225] sm:$0xf]
      %v1878 = vld [vmem:[%s1225 + $0x4] sm:$0x1]
      %v1879 = vld [vmem:[%s1225 + $0x8] sm:$0xf]
      %v1880 = vld [vmem:[%s1225 + $0xc] sm:$0x1]
      %v1881 = vld [vmem:[%s1225 + $0x10] sm:$0xf]
      %v1882 = vld [vmem:[%s1225 + $0x14] sm:$0x1]
      %v1883 = vld [vmem:[%s1225 + $0x18] sm:$0xf]
      %v1884 = vld [vmem:[%s1225 + $0x1c] sm:$0x1]
      %v1885 = vld [vmem:[%s1225 + $0x20] sm:$0xf]
      %v1886 = vld [vmem:[%s1225 + $0x24] sm:$0x1]
      %v1887 = vld [vmem:[%s1225 + $0x28] sm:$0xf]
      %v1888 = vld [vmem:[%s1225 + $0x2c] sm:$0x1]
      %v1889 = vld [vmem:[%s1225 + $0x30] sm:$0xf]
      %v1890 = vld [vmem:[%s1225 + $0x34] sm:$0x1]
      %v1891 = vld [vmem:[%s1225 + $0x38] sm:$0xf]
      %v1892 = vld [vmem:[%s1225 + $0x3c] sm:$0x1]
      %v1894 = vshrl.u32 %v1877, 16
      %v1896 = vrot.slane %v1894, 4
      %v1897 = vshll.u32 %v1877, 16
      %v1899 = vrot.slane %v1897, 5
      %v1900 = vor.u32 %v1896, %v1899
      %v1901 = vrot.slane %v1900, 4
      %v1903 = vshll.u32 %v1878, 16
      %v1905 = vrot.slane %v1903, 5
      %v1906 = vsel %vm244, %v1901, %v1905
      %v1908 = vshrl.u32 %v1879, 16
      %v1910 = vrot.slane %v1908, 4
      %v1911 = vshll.u32 %v1879, 16
      %v1913 = vrot.slane %v1911, 5
      %v1914 = vor.u32 %v1910, %v1913
      %v1915 = vrot.slane %v1914, 4
      %v1917 = vshll.u32 %v1880, 16
      %v1919 = vrot.slane %v1917, 5
      %v1920 = vsel %vm244, %v1915, %v1919
      %v1922 = vshrl.u32 %v1881, 16
      %v1924 = vrot.slane %v1922, 4
      %v1925 = vshll.u32 %v1881, 16
      %v1927 = vrot.slane %v1925, 5
      %v1928 = vor.u32 %v1924, %v1927
      %v1929 = vrot.slane %v1928, 4
      %v1931 = vshll.u32 %v1882, 16
      %v1933 = vrot.slane %v1931, 5
      %v1934 = vsel %vm244, %v1929, %v1933
      %v1936 = vshrl.u32 %v1883, 16
      %v1938 = vrot.slane %v1936, 4
      %v1939 = vshll.u32 %v1883, 16
      %v1941 = vrot.slane %v1939, 5
      %v1942 = vor.u32 %v1938, %v1941
      %v1943 = vrot.slane %v1942, 4
      %v1945 = vshll.u32 %v1884, 16
      %v1947 = vrot.slane %v1945, 5
      %v1948 = vsel %vm244, %v1943, %v1947
      %v1950 = vshrl.u32 %v1885, 16
      %v1952 = vrot.slane %v1950, 4
      %v1953 = vshll.u32 %v1885, 16
      %v1955 = vrot.slane %v1953, 5
      %v1956 = vor.u32 %v1952, %v1955
      %v1957 = vrot.slane %v1956, 4
      %v1959 = vshll.u32 %v1886, 16
      %v1961 = vrot.slane %v1959, 5
      %v1962 = vsel %vm244, %v1957, %v1961
      %v1964 = vshrl.u32 %v1887, 16
      %v1966 = vrot.slane %v1964, 4
      %v1967 = vshll.u32 %v1887, 16
      %v1969 = vrot.slane %v1967, 5
      %v1970 = vor.u32 %v1966, %v1969
      %v1971 = vrot.slane %v1970, 4
      %v1973 = vshll.u32 %v1888, 16
      %v1975 = vrot.slane %v1973, 5
      %v1976 = vsel %vm244, %v1971, %v1975
      %v1978 = vshrl.u32 %v1889, 16
      %v1980 = vrot.slane %v1978, 4
      %v1981 = vshll.u32 %v1889, 16
      %v1983 = vrot.slane %v1981, 5
      %v1984 = vor.u32 %v1980, %v1983
      %v1985 = vrot.slane %v1984, 4
      %v1987 = vshll.u32 %v1890, 16
      %v1989 = vrot.slane %v1987, 5
      %v1990 = vsel %vm244, %v1985, %v1989
      %v1992 = vshrl.u32 %v1891, 16
      %v1994 = vrot.slane %v1992, 4
      %v1995 = vshll.u32 %v1891, 16
      %v1997 = vrot.slane %v1995, 5
      %v1998 = vor.u32 %v1994, %v1997
      %v1999 = vrot.slane %v1998, 4
      %v2001 = vshll.u32 %v1892, 16
      %v2003 = vrot.slane %v2001, 5
      %v2004 = vsel %vm244, %v1999, %v2003
      %s2005 = scalar_lea.vmem %s2, 192
      %v2006 = vld [vmem:[%s2005] sm:$0xf]
      %v2007 = vld [vmem:[%s2005 + $0x4] sm:$0xf]
      %v2008 = vld [vmem:[%s2005 + $0x8] sm:$0xf]
      %v2009 = vld [vmem:[%s2005 + $0xc] sm:$0xf]
      %v2010 = vld [vmem:[%s2005 + $0x10] sm:$0xf]
      %v2011 = vld [vmem:[%s2005 + $0x14] sm:$0xf]
      %v2012 = vld [vmem:[%s2005 + $0x18] sm:$0xf]
      %v2013 = vld [vmem:[%s2005 + $0x1c] sm:$0xf]
      %v2014 = vld [vmem:[%s2005 + $0x20] sm:$0xf]
      %v2015 = vld [vmem:[%s2005 + $0x24] sm:$0xf]
      %v2016 = vld [vmem:[%s2005 + $0x28] sm:$0xf]
      %v2017 = vld [vmem:[%s2005 + $0x2c] sm:$0xf]
      %v2018 = vld [vmem:[%s2005 + $0x30] sm:$0xf]
      %v2019 = vld [vmem:[%s2005 + $0x34] sm:$0xf]
      %v2020 = vld [vmem:[%s2005 + $0x38] sm:$0xf]
      %v2021 = vld [vmem:[%s2005 + $0x3c] sm:$0xf]
      %v2022 = vunpack.c.l.b16 %v1906
      %v2023 = vunpack.c.l.b16 %v1920
      %v2024 = vunpack.c.l.b16 %v1934
      %v2025 = vunpack.c.l.b16 %v1948
      %v2026 = vunpack.c.l.b16 %v1962
      %v2027 = vunpack.c.l.b16 %v1976
      %v2028 = vunpack.c.l.b16 %v1990
      %v2029 = vunpack.c.l.b16 %v2004
      %v2030 = vpack.c.b16 %v2023, %v2022
      %v2031 = vpack.c.b16 %v2025, %v2024
      %v2032 = vpack.c.b16 %v2027, %v2026
      %v2033 = vpack.c.b16 %v2029, %v2028
      %v2054 = vunpack.c.l.b16 %v2006
      %v2055 = vunpack.c.l.b16 %v2007
      %v2056 = vunpack.c.l.b16 %v2008
      %v2057 = vunpack.c.l.b16 %v2009
      %v2058 = vunpack.c.l.b16 %v2010
      %v2059 = vunpack.c.l.b16 %v2011
      %v2060 = vunpack.c.l.b16 %v2012
      %v2061 = vunpack.c.l.b16 %v2013
      %v2062 = vunpack.c.l.b16 %v2014
      %v2063 = vunpack.c.l.b16 %v2015
      %v2064 = vunpack.c.l.b16 %v2016
      %v2065 = vunpack.c.l.b16 %v2017
      %v2066 = vunpack.c.l.b16 %v2018
      %v2067 = vunpack.c.l.b16 %v2019
      %v2068 = vunpack.c.l.b16 %v2020
      %v2069 = vunpack.c.l.b16 %v2021
      %v2070 = vpack.c.b16 %v2055, %v2054
      %v2071 = vpack.c.b16 %v2057, %v2056
      %v2072 = vpack.c.b16 %v2059, %v2058
      %v2073 = vpack.c.b16 %v2061, %v2060
      %v2074 = vpack.c.b16 %v2063, %v2062
      %v2075 = vpack.c.b16 %v2065, %v2064
      %v2076 = vpack.c.b16 %v2067, %v2066
      %v2077 = vpack.c.b16 %v2069, %v2068
      %2086 = vmatprep.subr.bf16.mxu0 0
      %2087 = vmatpush1.bf16.msra.mxu0 %v2070
      %2088 = vmatprep.subr.bf16.mxu0 0
      %2089 = vmatpush1.bf16.msra.mxu0 %v2071
      %2090 = vmatprep.subr.bf16.mxu0 0
      %2091 = vmatpush1.bf16.msra.mxu0 %v2072
      %2092 = vmatprep.subr.bf16.mxu0 0
      %2093 = vmatpush1.bf16.msra.mxu0 %v2073
      %2094 = vmatprep.subr.bf16.mxu0 0
      %2095 = vmatpush1.bf16.msra.mxu0 %v2074
      %2096 = vmatprep.subr.bf16.mxu0 0
      %2097 = vmatpush1.bf16.msra.mxu0 %v2075
      %2098 = vmatprep.subr.bf16.mxu0 0
      %2099 = vmatpush1.bf16.msra.mxu0 %v2076
      %2100 = vmatprep.subr.bf16.mxu0 0
      %2101 = vmatpush1.bf16.msra.mxu0 %v2077
      %2102 = vmatprep.subr.bf16.mxu0 0
      %2103 = vmatpush1.bf16.msra.mxu0 0
      %2104 = vmatprep.subr.bf16.mxu0 0
      %2105 = vmatpush1.bf16.msra.mxu0 0
      %2106 = vmatprep.subr.bf16.mxu0 0
      %2107 = vmatpush1.bf16.msra.mxu0 0
      %2108 = vmatprep.subr.bf16.mxu0 0
      %2109 = vmatpush1.bf16.msra.mxu0 0
      %2110 = vmatprep.subr.bf16.mxu0 0
      %2111 = vmatpush1.bf16.msra.mxu0 0
      %2112 = vmatprep.subr.bf16.mxu0 0
      %2113 = vmatpush1.bf16.msra.mxu0 0
      %2114 = vmatprep.subr.bf16.mxu0 0
      %2115 = vmatpush1.bf16.msra.mxu0 0
      %2116 = vmatprep.subr.bf16.mxu0 0
      %2117 = vmatpush1.bf16.msra.mxu0 0
      %2118 = vmatprep.mubr.bf16.mxu0 0
      %2119 = vmatmul.mubr.bf16.gmra.mrb[0].mxu0 %v2030
      %v2120 = vpop.f32.mrb[0].mxu0
      %v2121 = vadd.f32 0.0, %v2120
      %v2122 = vpop.f32.mrb[0].mxu0
      %v2123 = vpop.f32.mrb[0].mxu0
      %v2124 = vadd.f32 0.0, %v2123
      %v2125 = vpop.f32.mrb[0].mxu0
      %2126 = vmatprep.mubr.bf16.mxu0 0
      %2127 = vmatmul.mubr.bf16.gmra.mrb[0].mxu0 %v2031
      %v2128 = vpop.f32.mrb[0].mxu0
      %v2129 = vadd.f32 0.0, %v2128
      %v2130 = vpop.f32.mrb[0].mxu0
      %v2131 = vpop.f32.mrb[0].mxu0
      %v2132 = vadd.f32 0.0, %v2131
      %v2133 = vpop.f32.mrb[0].mxu0
      %2134 = vmatprep.mubr.bf16.mxu0 0
      %2135 = vmatmul.mubr.bf16.gmra.mrb[0].mxu0 %v2032
      %v2136 = vpop.f32.mrb[0].mxu0
      %v2137 = vadd.f32 0.0, %v2136
      %v2138 = vpop.f32.mrb[0].mxu0
      %v2139 = vpop.f32.mrb[0].mxu0
      %v2140 = vadd.f32 0.0, %v2139
      %v2141 = vpop.f32.mrb[0].mxu0
      %2142 = vmatprep.mubr.bf16.mxu0 0
      %2143 = vmatmul.mubr.bf16.gmra.mrb[0].mxu0 %v2033
      %v2144 = vpop.f32.mrb[0].mxu0
      %v2145 = vadd.f32 0.0, %v2144
      %v2146 = vpop.f32.mrb[0].mxu0
      %v2147 = vpop.f32.mrb[0].mxu0
      %v2148 = vadd.f32 0.0, %v2147
      %v2149 = vpop.f32.mrb[0].mxu0
      %2150 = vdwg.mxu0
      %v2151 = vadd.f32 %v1869, %v2121
      %v2152 = vadd.f32 %v1870, %v2124
      %v2153 = vadd.f32 %v1871, %v2129
      %v2154 = vadd.f32 %v1872, %v2132
      %v2155 = vadd.f32 %v1873, %v2137
      %v2156 = vadd.f32 %v1874, %v2140
      %v2157 = vadd.f32 %v1875, %v2145
      %v2158 = vadd.f32 %v1876, %v2148
      %v2159 = vpack.c.bf16 %v2152, %v2151
      %v2160 = vpack.c.bf16 %v2154, %v2153
      %v2161 = vpack.c.bf16 %v2156, %v2155
      %v2162 = vpack.c.bf16 %v2158, %v2157
      %v2167 = vunpack.c.l.b16 %v2159
      %v2168 = vunpack.c.h.b16 %v2159
      %v2169 = vunpack.c.l.b16 %v2160
      %v2170 = vunpack.c.h.b16 %v2160
      %v2171 = vunpack.c.l.b16 %v2161
      %v2172 = vunpack.c.h.b16 %v2161
      %v2173 = vunpack.c.l.b16 %v2162
      %v2174 = vunpack.c.h.b16 %v2162
      %v2175 = vpack.c.b16 %v2167, %v2167
      %v2176 = vpack.c.b16 %v2168, %v2168
      %v2177 = vpack.c.b16 %v2169, %v2169
      %v2178 = vpack.c.b16 %v2170, %v2170
      %v2179 = vpack.c.b16 %v2171, %v2171
      %v2180 = vpack.c.b16 %v2172, %v2172
      %v2181 = vpack.c.b16 %v2173, %v2173
      %v2182 = vpack.c.b16 %v2174, %v2174
      %2191 = vst [vmem:[%s204] sm:$0xf] %v2175
      %2192 = vst [vmem:[%s204 + $0x4] sm:$0xf] %v2176
      %2193 = vst [vmem:[%s204 + $0x8] sm:$0xf] %v2177
      %2194 = vst [vmem:[%s204 + $0xc] sm:$0xf] %v2178
      %2195 = vst [vmem:[%s204 + $0x10] sm:$0xf] %v2179
      %2196 = vst [vmem:[%s204 + $0x14] sm:$0xf] %v2180
      %2197 = vst [vmem:[%s204 + $0x18] sm:$0xf] %v2181
      %2198 = vst [vmem:[%s204 + $0x1c] sm:$0xf] %v2182
      %v2199 = vadd.f32 %v2151, %v2152
      %v2200 = vadd.f32 %v2199, %v2153
      %v2201 = vadd.f32 %v2200, %v2154
      %v2202 = vadd.f32 %v2201, %v2155
      %v2203 = vadd.f32 %v2202, %v2156
      %v2204 = vadd.f32 %v2203, %v2157
      %v2205 = vadd.f32 %v2204, %v2158
      %v2206 = vrot.slane %v2205, 4
      %v2207 = vadd.f32 %v2205, %v2206
      %v2208 = vrot.slane %v2207, 2
      %v2209 = vadd.f32 %v2207, %v2208
      %v2210 = vrot.slane %v2209, 1
      %v2211 = vadd.f32 %v2209, %v2210
      %v2212 = vadd.f32 %v2211, 0.0
      %v2213 = vmul.f32 %v2151, %v2151
      %v2214 = vmul.f32 %v2152, %v2152
      %v2215 = vmul.f32 %v2153, %v2153
      %v2216 = vmul.f32 %v2154, %v2154
      %v2217 = vmul.f32 %v2155, %v2155
      %v2218 = vmul.f32 %v2156, %v2156
      %v2219 = vmul.f32 %v2157, %v2157
      %v2220 = vmul.f32 %v2158, %v2158
      %v2221 = vadd.f32 %v2213, %v2214
      %v2222 = vadd.f32 %v2221, %v2215
      %v2223 = vadd.f32 %v2222, %v2216
      %v2224 = vadd.f32 %v2223, %v2217
      %v2225 = vadd.f32 %v2224, %v2218
      %v2226 = vadd.f32 %v2225, %v2219
      %v2227 = vadd.f32 %v2226, %v2220
      %v2228 = vrot.slane %v2227, 4
      %v2229 = vadd.f32 %v2227, %v2228
      %v2230 = vrot.slane %v2229, 2
      %v2231 = vadd.f32 %v2229, %v2230
      %v2232 = vrot.slane %v2231, 1
      %v2233 = vadd.f32 %v2231, %v2232
      %v2234 = vadd.f32 %v2233, 0.0
      %v2235 = vld [vmem:[#allocation2] sm:$0xf]
      %v2236 = vld [vmem:[#allocation2 + $0x4] sm:$0x1]
      %v2237 = vld [vmem:[#allocation2 + $0x8] sm:$0xf]
      %v2238 = vld [vmem:[#allocation2 + $0xc] sm:$0x1]
      %v2239 = vld [vmem:[#allocation2 + $0x10] sm:$0xf]
      %v2240 = vld [vmem:[#allocation2 + $0x14] sm:$0x1]
      %v2241 = vld [vmem:[#allocation2 + $0x18] sm:$0xf]
      %v2242 = vld [vmem:[#allocation2 + $0x1c] sm:$0x1]
      %v2243 = vld [vmem:[#allocation2 + $0x20] sm:$0xf]
      %v2244 = vld [vmem:[#allocation2 + $0x24] sm:$0x1]
      %v2245 = vld [vmem:[#allocation2 + $0x28] sm:$0xf]
      %v2246 = vld [vmem:[#allocation2 + $0x2c] sm:$0x1]
      %v2247 = vld [vmem:[#allocation2 + $0x30] sm:$0xf]
      %v2248 = vld [vmem:[#allocation2 + $0x34] sm:$0x1]
      %v2249 = vld [vmem:[#allocation2 + $0x38] sm:$0xf]
      %v2250 = vld [vmem:[#allocation2 + $0x3c] sm:$0x1]
      %v2252 = vshrl.u32 %v2235, 16
      %v2254 = vrot.slane %v2252, 4
      %v2255 = vshll.u32 %v2235, 16
      %v2257 = vrot.slane %v2255, 5
      %v2258 = vor.u32 %v2254, %v2257
      %v2259 = vrot.slane %v2258, 4
      %v2261 = vshll.u32 %v2236, 16
      %v2263 = vrot.slane %v2261, 5
      %v2264 = vsel %vm244, %v2259, %v2263
      %v2266 = vshrl.u32 %v2237, 16
      %v2268 = vrot.slane %v2266, 4
      %v2269 = vshll.u32 %v2237, 16
      %v2271 = vrot.slane %v2269, 5
      %v2272 = vor.u32 %v2268, %v2271
      %v2273 = vrot.slane %v2272, 4
      %v2275 = vshll.u32 %v2238, 16
      %v2277 = vrot.slane %v2275, 5
      %v2278 = vsel %vm244, %v2273, %v2277
      %v2280 = vshrl.u32 %v2239, 16
      %v2282 = vrot.slane %v2280, 4
      %v2283 = vshll.u32 %v2239, 16
      %v2285 = vrot.slane %v2283, 5
      %v2286 = vor.u32 %v2282, %v2285
      %v2287 = vrot.slane %v2286, 4
      %v2289 = vshll.u32 %v2240, 16
      %v2291 = vrot.slane %v2289, 5
      %v2292 = vsel %vm244, %v2287, %v2291
      %v2294 = vshrl.u32 %v2241, 16
      %v2296 = vrot.slane %v2294, 4
      %v2297 = vshll.u32 %v2241, 16
      %v2299 = vrot.slane %v2297, 5
      %v2300 = vor.u32 %v2296, %v2299
      %v2301 = vrot.slane %v2300, 4
      %v2303 = vshll.u32 %v2242, 16
      %v2305 = vrot.slane %v2303, 5
      %v2306 = vsel %vm244, %v2301, %v2305
      %v2308 = vshrl.u32 %v2243, 16
      %v2310 = vrot.slane %v2308, 4
      %v2311 = vshll.u32 %v2243, 16
      %v2313 = vrot.slane %v2311, 5
      %v2314 = vor.u32 %v2310, %v2313
      %v2315 = vrot.slane %v2314, 4
      %v2317 = vshll.u32 %v2244, 16
      %v2319 = vrot.slane %v2317, 5
      %v2320 = vsel %vm244, %v2315, %v2319
      %v2322 = vshrl.u32 %v2245, 16
      %v2324 = vrot.slane %v2322, 4
      %v2325 = vshll.u32 %v2245, 16
      %v2327 = vrot.slane %v2325, 5
      %v2328 = vor.u32 %v2324, %v2327
      %v2329 = vrot.slane %v2328, 4
      %v2331 = vshll.u32 %v2246, 16
      %v2333 = vrot.slane %v2331, 5
      %v2334 = vsel %vm244, %v2329, %v2333
      %v2336 = vshrl.u32 %v2247, 16
      %v2338 = vrot.slane %v2336, 4
      %v2339 = vshll.u32 %v2247, 16
      %v2341 = vrot.slane %v2339, 5
      %v2342 = vor.u32 %v2338, %v2341
      %v2343 = vrot.slane %v2342, 4
      %v2345 = vshll.u32 %v2248, 16
      %v2347 = vrot.slane %v2345, 5
      %v2348 = vsel %vm244, %v2343, %v2347
      %v2350 = vshrl.u32 %v2249, 16
      %v2352 = vrot.slane %v2350, 4
      %v2353 = vshll.u32 %v2249, 16
      %v2355 = vrot.slane %v2353, 5
      %v2356 = vor.u32 %v2352, %v2355
      %v2357 = vrot.slane %v2356, 4
      %v2359 = vshll.u32 %v2250, 16
      %v2361 = vrot.slane %v2359, 5
      %v2362 = vsel %vm244, %v2357, %v2361
      %s2363 = scalar_lea.vmem %s2, 256
      %v2364 = vld [vmem:[%s2363] sm:$0xf]
      %v2365 = vld [vmem:[%s2363 + $0x4] sm:$0xf]
      %v2366 = vld [vmem:[%s2363 + $0x8] sm:$0xf]
      %v2367 = vld [vmem:[%s2363 + $0xc] sm:$0xf]
      %v2368 = vld [vmem:[%s2363 + $0x10] sm:$0xf]
      %v2369 = vld [vmem:[%s2363 + $0x14] sm:$0xf]
      %v2370 = vld [vmem:[%s2363 + $0x18] sm:$0xf]
      %v2371 = vld [vmem:[%s2363 + $0x1c] sm:$0xf]
      %v2372 = vld [vmem:[%s2363 + $0x20] sm:$0xf]
      %v2373 = vld [vmem:[%s2363 + $0x24] sm:$0xf]
      %v2374 = vld [vmem:[%s2363 + $0x28] sm:$0xf]
      %v2375 = vld [vmem:[%s2363 + $0x2c] sm:$0xf]
      %v2376 = vld [vmem:[%s2363 + $0x30] sm:$0xf]
      %v2377 = vld [vmem:[%s2363 + $0x34] sm:$0xf]
      %v2378 = vld [vmem:[%s2363 + $0x38] sm:$0xf]
      %v2379 = vld [vmem:[%s2363 + $0x3c] sm:$0xf]
      %v2380 = vld [vmem:[#allocation2] sm:$0xe]
      %v2381 = vld [vmem:[#allocation2 + $0x8] sm:$0xe]
      %v2382 = vld [vmem:[#allocation2 + $0x10] sm:$0xe]
      %v2383 = vld [vmem:[#allocation2 + $0x18] sm:$0xe]
      %v2384 = vld [vmem:[#allocation2 + $0x20] sm:$0xe]
      %v2385 = vld [vmem:[#allocation2 + $0x28] sm:$0xe]
      %v2386 = vld [vmem:[#allocation2 + $0x30] sm:$0xe]
      %v2387 = vld [vmem:[#allocation2 + $0x38] sm:$0xe]
      %vm2404 = vcmask 1042432
      %vm2405 = vcmask 1046532
      %vm2406 = vmor %vm2404, %vm2405
      %v2407 = vrot.slane %v2380, 5
      %v2408 = vrot.slane %v2407, 4
      %v2409 = vrot.slane %v2236, 5
      %v2410 = vsel %vm2406, %v2408, %v2409
      %v2411 = vrot.slane %v2381, 5
      %v2412 = vrot.slane %v2411, 4
      %v2413 = vrot.slane %v2238, 5
      %v2414 = vsel %vm2406, %v2412, %v2413
      %v2415 = vrot.slane %v2382, 5
      %v2416 = vrot.slane %v2415, 4
      %v2417 = vrot.slane %v2240, 5
      %v2418 = vsel %vm2406, %v2416, %v2417
      %v2419 = vrot.slane %v2383, 5
      %v2420 = vrot.slane %v2419, 4
      %v2421 = vrot.slane %v2242, 5
      %v2422 = vsel %vm2406, %v2420, %v2421
      %v2423 = vrot.slane %v2384, 5
      %v2424 = vrot.slane %v2423, 4
      %v2425 = vrot.slane %v2244, 5
      %v2426 = vsel %vm2406, %v2424, %v2425
      %v2427 = vrot.slane %v2385, 5
      %v2428 = vrot.slane %v2427, 4
      %v2429 = vrot.slane %v2246, 5
      %v2430 = vsel %vm2406, %v2428, %v2429
      %v2431 = vrot.slane %v2386, 5
      %v2432 = vrot.slane %v2431, 4
      %v2433 = vrot.slane %v2248, 5
      %v2434 = vsel %vm2406, %v2432, %v2433
      %v2435 = vrot.slane %v2387, 5
      %v2436 = vrot.slane %v2435, 4
      %v2437 = vrot.slane %v2250, 5
      %v2438 = vsel %vm2406, %v2436, %v2437
      %s2439 = scalar_lea.vmem %s2, 320
      %v2440 = vld [vmem:[%s2439] sm:$0xf]
      %v2441 = vld [vmem:[%s2439 + $0x4] sm:$0xf]
      %v2442 = vld [vmem:[%s2439 + $0x8] sm:$0xf]
      %v2443 = vld [vmem:[%s2439 + $0xc] sm:$0xf]
      %v2444 = vld [vmem:[%s2439 + $0x10] sm:$0xf]
      %v2445 = vld [vmem:[%s2439 + $0x14] sm:$0xf]
      %v2446 = vld [vmem:[%s2439 + $0x18] sm:$0xf]
      %v2447 = vld [vmem:[%s2439 + $0x1c] sm:$0xf]
      %v2448 = vld [vmem:[%s2439 + $0x20] sm:$0xf]
      %v2449 = vld [vmem:[%s2439 + $0x24] sm:$0xf]
      %v2450 = vld [vmem:[%s2439 + $0x28] sm:$0xf]
      %v2451 = vld [vmem:[%s2439 + $0x2c] sm:$0xf]
      %v2452 = vld [vmem:[%s2439 + $0x30] sm:$0xf]
      %v2453 = vld [vmem:[%s2439 + $0x34] sm:$0xf]
      %v2454 = vld [vmem:[%s2439 + $0x38] sm:$0xf]
      %v2455 = vld [vmem:[%s2439 + $0x3c] sm:$0xf]
      %v2456 = vunpack.c.l.b16 %v2410
      %v2457 = vunpack.c.l.b16 %v2414
      %v2458 = vunpack.c.l.b16 %v2418
      %v2459 = vunpack.c.l.b16 %v2422
      %v2460 = vunpack.c.l.b16 %v2426
      %v2461 = vunpack.c.l.b16 %v2430
      %v2462 = vunpack.c.l.b16 %v2434
      %v2463 = vunpack.c.l.b16 %v2438
      %v2464 = vpack.c.b16 %v2457, %v2456
      %v2465 = vpack.c.b16 %v2459, %v2458
      %v2466 = vpack.c.b16 %v2461, %v2460
      %v2467 = vpack.c.b16 %v2463, %v2462
      %v2488 = vunpack.c.l.b16 %v2440
      %v2489 = vunpack.c.l.b16 %v2441
      %v2490 = vunpack.c.l.b16 %v2442
      %v2491 = vunpack.c.l.b16 %v2443
      %v2492 = vunpack.c.l.b16 %v2444
      %v2493 = vunpack.c.l.b16 %v2445
      %v2494 = vunpack.c.l.b16 %v2446
      %v2495 = vunpack.c.l.b16 %v2447
      %v2496 = vunpack.c.l.b16 %v2448
      %v2497 = vunpack.c.l.b16 %v2449
      %v2498 = vunpack.c.l.b16 %v2450
      %v2499 = vunpack.c.l.b16 %v2451
      %v2500 = vunpack.c.l.b16 %v2452
      %v2501 = vunpack.c.l.b16 %v2453
      %v2502 = vunpack.c.l.b16 %v2454
      %v2503 = vunpack.c.l.b16 %v2455
      %v2504 = vpack.c.b16 %v2489, %v2488
      %v2505 = vpack.c.b16 %v2491, %v2490
      %v2506 = vpack.c.b16 %v2493, %v2492
      %v2507 = vpack.c.b16 %v2495, %v2494
      %v2508 = vpack.c.b16 %v2497, %v2496
      %v2509 = vpack.c.b16 %v2499, %v2498
      %v2510 = vpack.c.b16 %v2501, %v2500
      %v2511 = vpack.c.b16 %v2503, %v2502
      %2520 = vmatprep.subr.bf16.mxu0 0
      %2521 = vmatpush1.bf16.msra.mxu0 %v2504
      %2522 = vmatprep.subr.bf16.mxu0 0
      %2523 = vmatpush1.bf16.msra.mxu0 %v2505
      %2524 = vmatprep.subr.bf16.mxu0 0
      %2525 = vmatpush1.bf16.msra.mxu0 %v2506
      %2526 = vmatprep.subr.bf16.mxu0 0
      %2527 = vmatpush1.bf16.msra.mxu0 %v2507
      %2528 = vmatprep.subr.bf16.mxu0 0
      %2529 = vmatpush1.bf16.msra.mxu0 %v2508
      %2530 = vmatprep.subr.bf16.mxu0 0
      %2531 = vmatpush1.bf16.msra.mxu0 %v2509
      %2532 = vmatprep.subr.bf16.mxu0 0
      %2533 = vmatpush1.bf16.msra.mxu0 %v2510
      %2534 = vmatprep.subr.bf16.mxu0 0
      %2535 = vmatpush1.bf16.msra.mxu0 %v2511
      %2536 = vmatprep.subr.bf16.mxu0 0
      %2537 = vmatpush1.bf16.msra.mxu0 0
      %2538 = vmatprep.subr.bf16.mxu0 0
      %2539 = vmatpush1.bf16.msra.mxu0 0
      %2540 = vmatprep.subr.bf16.mxu0 0
      %2541 = vmatpush1.bf16.msra.mxu0 0
      %2542 = vmatprep.subr.bf16.mxu0 0
      %2543 = vmatpush1.bf16.msra.mxu0 0
      %2544 = vmatprep.subr.bf16.mxu0 0
      %2545 = vmatpush1.bf16.msra.mxu0 0
      %2546 = vmatprep.subr.bf16.mxu0 0
      %2547 = vmatpush1.bf16.msra.mxu0 0
      %2548 = vmatprep.subr.bf16.mxu0 0
      %2549 = vmatpush1.bf16.msra.mxu0 0
      %2550 = vmatprep.subr.bf16.mxu0 0
      %2551 = vmatpush1.bf16.msra.mxu0 0
      %2552 = vmatprep.mubr.bf16.mxu0 0
      %2553 = vmatmul.mubr.bf16.gmra.mrb[0].mxu0 %v2464
      %v2554 = vpop.f32.mrb[0].mxu0
      %v2555 = vadd.f32 0.0, %v2554
      %v2556 = vpop.f32.mrb[0].mxu0
      %v2557 = vpop.f32.mrb[0].mxu0
      %v2558 = vadd.f32 0.0, %v2557
      %v2559 = vpop.f32.mrb[0].mxu0
      %2560 = vmatprep.mubr.bf16.mxu0 0
      %2561 = vmatmul.mubr.bf16.gmra.mrb[0].mxu0 %v2465
      %v2562 = vpop.f32.mrb[0].mxu0
      %v2563 = vadd.f32 0.0, %v2562
      %v2564 = vpop.f32.mrb[0].mxu0
      %v2565 = vpop.f32.mrb[0].mxu0
      %v2566 = vadd.f32 0.0, %v2565
      %v2567 = vpop.f32.mrb[0].mxu0
      %2568 = vmatprep.mubr.bf16.mxu0 0
      %2569 = vmatmul.mubr.bf16.gmra.mrb[0].mxu0 %v2466
      %v2570 = vpop.f32.mrb[0].mxu0
      %v2571 = vadd.f32 0.0, %v2570
      %v2572 = vpop.f32.mrb[0].mxu0
      %v2573 = vpop.f32.mrb[0].mxu0
      %v2574 = vadd.f32 0.0, %v2573
      %v2575 = vpop.f32.mrb[0].mxu0
      %2576 = vmatprep.mubr.bf16.mxu0 0
      %2577 = vmatmul.mubr.bf16.gmra.mrb[0].mxu0 %v2467
      %v2578 = vpop.f32.mrb[0].mxu0
      %v2579 = vadd.f32 0.0, %v2578
      %v2580 = vpop.f32.mrb[0].mxu0
      %v2581 = vpop.f32.mrb[0].mxu0
      %v2582 = vadd.f32 0.0, %v2581
      %v2583 = vpop.f32.mrb[0].mxu0
      %2584 = vdwg.mxu0
      %v2585 = vunpack.c.l.b16 %v2264
      %v2586 = vunpack.c.l.b16 %v2278
      %v2587 = vunpack.c.l.b16 %v2292
      %v2588 = vunpack.c.l.b16 %v2306
      %v2589 = vunpack.c.l.b16 %v2320
      %v2590 = vunpack.c.l.b16 %v2334
      %v2591 = vunpack.c.l.b16 %v2348
      %v2592 = vunpack.c.l.b16 %v2362
      %v2593 = vpack.c.b16 %v2586, %v2585
      %v2594 = vpack.c.b16 %v2588, %v2587
      %v2595 = vpack.c.b16 %v2590, %v2589
      %v2596 = vpack.c.b16 %v2592, %v2591
      %v2617 = vunpack.c.l.b16 %v2364
      %v2618 = vunpack.c.l.b16 %v2365
      %v2619 = vunpack.c.l.b16 %v2366
      %v2620 = vunpack.c.l.b16 %v2367
      %v2621 = vunpack.c.l.b16 %v2368
      %v2622 = vunpack.c.l.b16 %v2369
      %v2623 = vunpack.c.l.b16 %v2370
      %v2624 = vunpack.c.l.b16 %v2371
      %v2625 = vunpack.c.l.b16 %v2372
      %v2626 = vunpack.c.l.b16 %v2373
      %v2627 = vunpack.c.l.b16 %v2374
      %v2628 = vunpack.c.l.b16 %v2375
      %v2629 = vunpack.c.l.b16 %v2376
      %v2630 = vunpack.c.l.b16 %v2377
      %v2631 = vunpack.c.l.b16 %v2378
      %v2632 = vunpack.c.l.b16 %v2379
      %v2633 = vpack.c.b16 %v2618, %v2617
      %v2634 = vpack.c.b16 %v2620, %v2619
      %v2635 = vpack.c.b16 %v2622, %v2621
      %v2636 = vpack.c.b16 %v2624, %v2623
      %v2637 = vpack.c.b16 %v2626, %v2625
      %v2638 = vpack.c.b16 %v2628, %v2627
      %v2639 = vpack.c.b16 %v2630, %v2629
      %v2640 = vpack.c.b16 %v2632, %v2631
      %2649 = vmatprep.subr.bf16.mxu0 0
      %2650 = vmatpush1.bf16.msra.mxu0 %v2633
      %2651 = vmatprep.subr.bf16.mxu0 0
      %2652 = vmatpush1.bf16.msra.mxu0 %v2634
      %2653 = vmatprep.subr.bf16.mxu0 0
      %2654 = vmatpush1.bf16.msra.mxu0 %v2635
      %2655 = vmatprep.subr.bf16.mxu0 0
      %2656 = vmatpush1.bf16.msra.mxu0 %v2636
      %2657 = vmatprep.subr.bf16.mxu0 0
      %2658 = vmatpush1.bf16.msra.mxu0 %v2637
      %2659 = vmatprep.subr.bf16.mxu0 0
      %2660 = vmatpush1.bf16.msra.mxu0 %v2638
      %2661 = vmatprep.subr.bf16.mxu0 0
      %2662 = vmatpush1.bf16.msra.mxu0 %v2639
      %2663 = vmatprep.subr.bf16.mxu0 0
      %2664 = vmatpush1.bf16.msra.mxu0 %v2640
      %2665 = vmatprep.subr.bf16.mxu0 0
      %2666 = vmatpush1.bf16.msra.mxu0 0
      %2667 = vmatprep.subr.bf16.mxu0 0
      %2668 = vmatpush1.bf16.msra.mxu0 0
      %2669 = vmatprep.subr.bf16.mxu0 0
      %2670 = vmatpush1.bf16.msra.mxu0 0
      %2671 = vmatprep.subr.bf16.mxu0 0
      %2672 = vmatpush1.bf16.msra.mxu0 0
      %2673 = vmatprep.subr.bf16.mxu0 0
      %2674 = vmatpush1.bf16.msra.mxu0 0
      %2675 = vmatprep.subr.bf16.mxu0 0
      %2676 = vmatpush1.bf16.msra.mxu0 0
      %2677 = vmatprep.subr.bf16.mxu0 0
      %2678 = vmatpush1.bf16.msra.mxu0 0
      %2679 = vmatprep.subr.bf16.mxu0 0
      %2680 = vmatpush1.bf16.msra.mxu0 0
      %2681 = vmatprep.mubr.bf16.mxu0 0
      %2682 = vmatmul.mubr.bf16.gmra.mrb[0].mxu0 %v2593
      %v2683 = vpop.f32.mrb[0].mxu0
      %v2684 = vadd.f32 %v2555, %v2683
      %v2685 = vpop.f32.mrb[0].mxu0
      %v2686 = vpop.f32.mrb[0].mxu0
      %v2687 = vadd.f32 %v2558, %v2686
      %v2688 = vpop.f32.mrb[0].mxu0
      %2689 = vmatprep.mubr.bf16.mxu0 0
      %2690 = vmatmul.mubr.bf16.gmra.mrb[0].mxu0 %v2594
      %v2691 = vpop.f32.mrb[0].mxu0
      %v2692 = vadd.f32 %v2563, %v2691
      %v2693 = vpop.f32.mrb[0].mxu0
      %v2694 = vpop.f32.mrb[0].mxu0
      %v2695 = vadd.f32 %v2566, %v2694
      %v2696 = vpop.f32.mrb[0].mxu0
      %2697 = vmatprep.mubr.bf16.mxu0 0
      %2698 = vmatmul.mubr.bf16.gmra.mrb[0].mxu0 %v2595
      %v2699 = vpop.f32.mrb[0].mxu0
      %v2700 = vadd.f32 %v2571, %v2699
      %v2701 = vpop.f32.mrb[0].mxu0
      %v2702 = vpop.f32.mrb[0].mxu0
      %v2703 = vadd.f32 %v2574, %v2702
      %v2704 = vpop.f32.mrb[0].mxu0
      %2705 = vmatprep.mubr.bf16.mxu0 0
      %2706 = vmatmul.mubr.bf16.gmra.mrb[0].mxu0 %v2596
      %v2707 = vpop.f32.mrb[0].mxu0
      %v2708 = vadd.f32 %v2579, %v2707
      %v2709 = vpop.f32.mrb[0].mxu0
      %v2710 = vpop.f32.mrb[0].mxu0
      %v2711 = vadd.f32 %v2582, %v2710
      %v2712 = vpop.f32.mrb[0].mxu0
      %2713 = vdwg.mxu0
      %v2714 = vld [vmem:[%s1225] sm:$0xf]
      %v2715 = vld [vmem:[%s1225 + $0x4] sm:$0x1]
      %v2716 = vld [vmem:[%s1225 + $0x8] sm:$0xf]
      %v2717 = vld [vmem:[%s1225 + $0xc] sm:$0x1]
      %v2718 = vld [vmem:[%s1225 + $0x10] sm:$0xf]
      %v2719 = vld [vmem:[%s1225 + $0x14] sm:$0x1]
      %v2720 = vld [vmem:[%s1225 + $0x18] sm:$0xf]
      %v2721 = vld [vmem:[%s1225 + $0x1c] sm:$0x1]
      %v2722 = vld [vmem:[%s1225 + $0x20] sm:$0xf]
      %v2723 = vld [vmem:[%s1225 + $0x24] sm:$0x1]
      %v2724 = vld [vmem:[%s1225 + $0x28] sm:$0xf]
      %v2725 = vld [vmem:[%s1225 + $0x2c] sm:$0x1]
      %v2726 = vld [vmem:[%s1225 + $0x30] sm:$0xf]
      %v2727 = vld [vmem:[%s1225 + $0x34] sm:$0x1]
      %v2728 = vld [vmem:[%s1225 + $0x38] sm:$0xf]
      %v2729 = vld [vmem:[%s1225 + $0x3c] sm:$0x1]
      %v2731 = vshrl.u32 %v2714, 16
      %v2733 = vrot.slane %v2731, 4
      %v2734 = vshll.u32 %v2714, 16
      %v2736 = vrot.slane %v2734, 5
      %v2737 = vor.u32 %v2733, %v2736
      %v2738 = vrot.slane %v2737, 4
      %v2740 = vshll.u32 %v2715, 16
      %v2742 = vrot.slane %v2740, 5
      %v2743 = vsel %vm244, %v2738, %v2742
      %v2745 = vshrl.u32 %v2716, 16
      %v2747 = vrot.slane %v2745, 4
      %v2748 = vshll.u32 %v2716, 16
      %v2750 = vrot.slane %v2748, 5
      %v2751 = vor.u32 %v2747, %v2750
      %v2752 = vrot.slane %v2751, 4
      %v2754 = vshll.u32 %v2717, 16
      %v2756 = vrot.slane %v2754, 5
      %v2757 = vsel %vm244, %v2752, %v2756
      %v2759 = vshrl.u32 %v2718, 16
      %v2761 = vrot.slane %v2759, 4
      %v2762 = vshll.u32 %v2718, 16
      %v2764 = vrot.slane %v2762, 5
      %v2765 = vor.u32 %v2761, %v2764
      %v2766 = vrot.slane %v2765, 4
      %v2768 = vshll.u32 %v2719, 16
      %v2770 = vrot.slane %v2768, 5
      %v2771 = vsel %vm244, %v2766, %v2770
      %v2773 = vshrl.u32 %v2720, 16
      %v2775 = vrot.slane %v2773, 4
      %v2776 = vshll.u32 %v2720, 16
      %v2778 = vrot.slane %v2776, 5
      %v2779 = vor.u32 %v2775, %v2778
      %v2780 = vrot.slane %v2779, 4
      %v2782 = vshll.u32 %v2721, 16
      %v2784 = vrot.slane %v2782, 5
      %v2785 = vsel %vm244, %v2780, %v2784
      %v2787 = vshrl.u32 %v2722, 16
      %v2789 = vrot.slane %v2787, 4
      %v2790 = vshll.u32 %v2722, 16
      %v2792 = vrot.slane %v2790, 5
      %v2793 = vor.u32 %v2789, %v2792
      %v2794 = vrot.slane %v2793, 4
      %v2796 = vshll.u32 %v2723, 16
      %v2798 = vrot.slane %v2796, 5
      %v2799 = vsel %vm244, %v2794, %v2798
      %v2801 = vshrl.u32 %v2724, 16
      %v2803 = vrot.slane %v2801, 4
      %v2804 = vshll.u32 %v2724, 16
      %v2806 = vrot.slane %v2804, 5
      %v2807 = vor.u32 %v2803, %v2806
      %v2808 = vrot.slane %v2807, 4
      %v2810 = vshll.u32 %v2725, 16
      %v2812 = vrot.slane %v2810, 5
      %v2813 = vsel %vm244, %v2808, %v2812
      %v2815 = vshrl.u32 %v2726, 16
      %v2817 = vrot.slane %v2815, 4
      %v2818 = vshll.u32 %v2726, 16
      %v2820 = vrot.slane %v2818, 5
      %v2821 = vor.u32 %v2817, %v2820
      %v2822 = vrot.slane %v2821, 4
      %v2824 = vshll.u32 %v2727, 16
      %v2826 = vrot.slane %v2824, 5
      %v2827 = vsel %vm244, %v2822, %v2826
      %v2829 = vshrl.u32 %v2728, 16
      %v2831 = vrot.slane %v2829, 4
      %v2832 = vshll.u32 %v2728, 16
      %v2834 = vrot.slane %v2832, 5
      %v2835 = vor.u32 %v2831, %v2834
      %v2836 = vrot.slane %v2835, 4
      %v2838 = vshll.u32 %v2729, 16
      %v2840 = vrot.slane %v2838, 5
      %v2841 = vsel %vm244, %v2836, %v2840
      %s2842 = scalar_lea.vmem %s2, 384
      %v2843 = vld [vmem:[%s2842] sm:$0xf]
      %v2844 = vld [vmem:[%s2842 + $0x4] sm:$0xf]
      %v2845 = vld [vmem:[%s2842 + $0x8] sm:$0xf]
      %v2846 = vld [vmem:[%s2842 + $0xc] sm:$0xf]
      %v2847 = vld [vmem:[%s2842 + $0x10] sm:$0xf]
      %v2848 = vld [vmem:[%s2842 + $0x14] sm:$0xf]
      %v2849 = vld [vmem:[%s2842 + $0x18] sm:$0xf]
      %v2850 = vld [vmem:[%s2842 + $0x1c] sm:$0xf]
      %v2851 = vld [vmem:[%s2842 + $0x20] sm:$0xf]
      %v2852 = vld [vmem:[%s2842 + $0x24] sm:$0xf]
      %v2853 = vld [vmem:[%s2842 + $0x28] sm:$0xf]
      %v2854 = vld [vmem:[%s2842 + $0x2c] sm:$0xf]
      %v2855 = vld [vmem:[%s2842 + $0x30] sm:$0xf]
      %v2856 = vld [vmem:[%s2842 + $0x34] sm:$0xf]
      %v2857 = vld [vmem:[%s2842 + $0x38] sm:$0xf]
      %v2858 = vld [vmem:[%s2842 + $0x3c] sm:$0xf]
      %v2859 = vunpack.c.l.b16 %v2743
      %v2860 = vunpack.c.l.b16 %v2757
      %v2861 = vunpack.c.l.b16 %v2771
      %v2862 = vunpack.c.l.b16 %v2785
      %v2863 = vunpack.c.l.b16 %v2799
      %v2864 = vunpack.c.l.b16 %v2813
      %v2865 = vunpack.c.l.b16 %v2827
      %v2866 = vunpack.c.l.b16 %v2841
      %v2867 = vpack.c.b16 %v2860, %v2859
      %v2868 = vpack.c.b16 %v2862, %v2861
      %v2869 = vpack.c.b16 %v2864, %v2863
      %v2870 = vpack.c.b16 %v2866, %v2865
      %v2891 = vunpack.c.l.b16 %v2843
      %v2892 = vunpack.c.l.b16 %v2844
      %v2893 = vunpack.c.l.b16 %v2845
      %v2894 = vunpack.c.l.b16 %v2846
      %v2895 = vunpack.c.l.b16 %v2847
      %v2896 = vunpack.c.l.b16 %v2848
      %v2897 = vunpack.c.l.b16 %v2849
      %v2898 = vunpack.c.l.b16 %v2850
      %v2899 = vunpack.c.l.b16 %v2851
      %v2900 = vunpack.c.l.b16 %v2852
      %v2901 = vunpack.c.l.b16 %v2853
      %v2902 = vunpack.c.l.b16 %v2854
      %v2903 = vunpack.c.l.b16 %v2855
      %v2904 = vunpack.c.l.b16 %v2856
      %v2905 = vunpack.c.l.b16 %v2857
      %v2906 = vunpack.c.l.b16 %v2858
      %v2907 = vpack.c.b16 %v2892, %v2891
      %v2908 = vpack.c.b16 %v2894, %v2893
      %v2909 = vpack.c.b16 %v2896, %v2895
      %v2910 = vpack.c.b16 %v2898, %v2897
      %v2911 = vpack.c.b16 %v2900, %v2899
      %v2912 = vpack.c.b16 %v2902, %v2901
      %v2913 = vpack.c.b16 %v2904, %v2903
      %v2914 = vpack.c.b16 %v2906, %v2905
      %2923 = vmatprep.subr.bf16.mxu0 0
      %2924 = vmatpush1.bf16.msra.mxu0 %v2907
      %2925 = vmatprep.subr.bf16.mxu0 0
      %2926 = vmatpush1.bf16.msra.mxu0 %v2908
      %2927 = vmatprep.subr.bf16.mxu0 0
      %2928 = vmatpush1.bf16.msra.mxu0 %v2909
      %2929 = vmatprep.subr.bf16.mxu0 0
      %2930 = vmatpush1.bf16.msra.mxu0 %v2910
      %2931 = vmatprep.subr.bf16.mxu0 0
      %2932 = vmatpush1.bf16.msra.mxu0 %v2911
      %2933 = vmatprep.subr.bf16.mxu0 0
      %2934 = vmatpush1.bf16.msra.mxu0 %v2912
      %2935 = vmatprep.subr.bf16.mxu0 0
      %2936 = vmatpush1.bf16.msra.mxu0 %v2913
      %2937 = vmatprep.subr.bf16.mxu0 0
      %2938 = vmatpush1.bf16.msra.mxu0 %v2914
      %2939 = vmatprep.subr.bf16.mxu0 0
      %2940 = vmatpush1.bf16.msra.mxu0 0
      %2941 = vmatprep.subr.bf16.mxu0 0
      %2942 = vmatpush1.bf16.msra.mxu0 0
      %2943 = vmatprep.subr.bf16.mxu0 0
      %2944 = vmatpush1.bf16.msra.mxu0 0
      %2945 = vmatprep.subr.bf16.mxu0 0
      %2946 = vmatpush1.bf16.msra.mxu0 0
      %2947 = vmatprep.subr.bf16.mxu0 0
      %2948 = vmatpush1.bf16.msra.mxu0 0
      %2949 = vmatprep.subr.bf16.mxu0 0
      %2950 = vmatpush1.bf16.msra.mxu0 0
      %2951 = vmatprep.subr.bf16.mxu0 0
      %2952 = vmatpush1.bf16.msra.mxu0 0
      %2953 = vmatprep.subr.bf16.mxu0 0
      %2954 = vmatpush1.bf16.msra.mxu0 0
      %2955 = vmatprep.mubr.bf16.mxu0 0
      %2956 = vmatmul.mubr.bf16.gmra.mrb[0].mxu0 %v2867
      %v2957 = vpop.f32.mrb[0].mxu0
      %v2958 = vadd.f32 0.0, %v2957
      %v2959 = vpop.f32.mrb[0].mxu0
      %v2960 = vpop.f32.mrb[0].mxu0
      %v2961 = vadd.f32 0.0, %v2960
      %v2962 = vpop.f32.mrb[0].mxu0
      %2963 = vmatprep.mubr.bf16.mxu0 0
      %2964 = vmatmul.mubr.bf16.gmra.mrb[0].mxu0 %v2868
      %v2965 = vpop.f32.mrb[0].mxu0
      %v2966 = vadd.f32 0.0, %v2965
      %v2967 = vpop.f32.mrb[0].mxu0
      %v2968 = vpop.f32.mrb[0].mxu0
      %v2969 = vadd.f32 0.0, %v2968
      %v2970 = vpop.f32.mrb[0].mxu0
      %2971 = vmatprep.mubr.bf16.mxu0 0
      %2972 = vmatmul.mubr.bf16.gmra.mrb[0].mxu0 %v2869
      %v2973 = vpop.f32.mrb[0].mxu0
      %v2974 = vadd.f32 0.0, %v2973
      %v2975 = vpop.f32.mrb[0].mxu0
      %v2976 = vpop.f32.mrb[0].mxu0
      %v2977 = vadd.f32 0.0, %v2976
      %v2978 = vpop.f32.mrb[0].mxu0
      %2979 = vmatprep.mubr.bf16.mxu0 0
      %2980 = vmatmul.mubr.bf16.gmra.mrb[0].mxu0 %v2870
      %v2981 = vpop.f32.mrb[0].mxu0
      %v2982 = vadd.f32 0.0, %v2981
      %v2983 = vpop.f32.mrb[0].mxu0
      %v2984 = vpop.f32.mrb[0].mxu0
      %v2985 = vadd.f32 0.0, %v2984
      %v2986 = vpop.f32.mrb[0].mxu0
      %2987 = vdwg.mxu0
      %v2988 = vadd.f32 %v2684, %v2958
      %v2989 = vadd.f32 %v2687, %v2961
      %v2990 = vadd.f32 %v2692, %v2966
      %v2991 = vadd.f32 %v2695, %v2969
      %v2992 = vadd.f32 %v2700, %v2974
      %v2993 = vadd.f32 %v2703, %v2977
      %v2994 = vadd.f32 %v2708, %v2982
      %v2995 = vadd.f32 %v2711, %v2985
      %v2996 = vld [vmem:[%s1225] sm:$0xe]
      %v2997 = vld [vmem:[%s1225 + $0x8] sm:$0xe]
      %v2998 = vld [vmem:[%s1225 + $0x10] sm:$0xe]
      %v2999 = vld [vmem:[%s1225 + $0x18] sm:$0xe]
      %v3000 = vld [vmem:[%s1225 + $0x20] sm:$0xe]
      %v3001 = vld [vmem:[%s1225 + $0x28] sm:$0xe]
      %v3002 = vld [vmem:[%s1225 + $0x30] sm:$0xe]
      %v3003 = vld [vmem:[%s1225 + $0x38] sm:$0xe]
      %v3020 = vrot.slane %v2996, 5
      %v3021 = vrot.slane %v3020, 4
      %v3022 = vrot.slane %v2715, 5
      %v3023 = vsel %vm2406, %v3021, %v3022
      %v3024 = vrot.slane %v2997, 5
      %v3025 = vrot.slane %v3024, 4
      %v3026 = vrot.slane %v2717, 5
      %v3027 = vsel %vm2406, %v3025, %v3026
      %v3028 = vrot.slane %v2998, 5
      %v3029 = vrot.slane %v3028, 4
      %v3030 = vrot.slane %v2719, 5
      %v3031 = vsel %vm2406, %v3029, %v3030
      %v3032 = vrot.slane %v2999, 5
      %v3033 = vrot.slane %v3032, 4
      %v3034 = vrot.slane %v2721, 5
      %v3035 = vsel %vm2406, %v3033, %v3034
      %v3036 = vrot.slane %v3000, 5
      %v3037 = vrot.slane %v3036, 4
      %v3038 = vrot.slane %v2723, 5
      %v3039 = vsel %vm2406, %v3037, %v3038
      %v3040 = vrot.slane %v3001, 5
      %v3041 = vrot.slane %v3040, 4
      %v3042 = vrot.slane %v2725, 5
      %v3043 = vsel %vm2406, %v3041, %v3042
      %v3044 = vrot.slane %v3002, 5
      %v3045 = vrot.slane %v3044, 4
      %v3046 = vrot.slane %v2727, 5
      %v3047 = vsel %vm2406, %v3045, %v3046
      %v3048 = vrot.slane %v3003, 5
      %v3049 = vrot.slane %v3048, 4
      %v3050 = vrot.slane %v2729, 5
      %v3051 = vsel %vm2406, %v3049, %v3050
      %s3052 = scalar_lea.vmem %s2, 448
      %v3053 = vld [vmem:[%s3052] sm:$0xf]
      %v3054 = vld [vmem:[%s3052 + $0x4] sm:$0xf]
      %v3055 = vld [vmem:[%s3052 + $0x8] sm:$0xf]
      %v3056 = vld [vmem:[%s3052 + $0xc] sm:$0xf]
      %v3057 = vld [vmem:[%s3052 + $0x10] sm:$0xf]
      %v3058 = vld [vmem:[%s3052 + $0x14] sm:$0xf]
      %v3059 = vld [vmem:[%s3052 + $0x18] sm:$0xf]
      %v3060 = vld [vmem:[%s3052 + $0x1c] sm:$0xf]
      %v3061 = vld [vmem:[%s3052 + $0x20] sm:$0xf]
      %v3062 = vld [vmem:[%s3052 + $0x24] sm:$0xf]
      %v3063 = vld [vmem:[%s3052 + $0x28] sm:$0xf]
      %v3064 = vld [vmem:[%s3052 + $0x2c] sm:$0xf]
      %v3065 = vld [vmem:[%s3052 + $0x30] sm:$0xf]
      %v3066 = vld [vmem:[%s3052 + $0x34] sm:$0xf]
      %v3067 = vld [vmem:[%s3052 + $0x38] sm:$0xf]
      %v3068 = vld [vmem:[%s3052 + $0x3c] sm:$0xf]
      %v3069 = vunpack.c.l.b16 %v3023
      %v3070 = vunpack.c.l.b16 %v3027
      %v3071 = vunpack.c.l.b16 %v3031
      %v3072 = vunpack.c.l.b16 %v3035
      %v3073 = vunpack.c.l.b16 %v3039
      %v3074 = vunpack.c.l.b16 %v3043
      %v3075 = vunpack.c.l.b16 %v3047
      %v3076 = vunpack.c.l.b16 %v3051
      %v3077 = vpack.c.b16 %v3070, %v3069
      %v3078 = vpack.c.b16 %v3072, %v3071
      %v3079 = vpack.c.b16 %v3074, %v3073
      %v3080 = vpack.c.b16 %v3076, %v3075
      %v3101 = vunpack.c.l.b16 %v3053
      %v3102 = vunpack.c.l.b16 %v3054
      %v3103 = vunpack.c.l.b16 %v3055
      %v3104 = vunpack.c.l.b16 %v3056
      %v3105 = vunpack.c.l.b16 %v3057
      %v3106 = vunpack.c.l.b16 %v3058
      %v3107 = vunpack.c.l.b16 %v3059
      %v3108 = vunpack.c.l.b16 %v3060
      %v3109 = vunpack.c.l.b16 %v3061
      %v3110 = vunpack.c.l.b16 %v3062
      %v3111 = vunpack.c.l.b16 %v3063
      %v3112 = vunpack.c.l.b16 %v3064
      %v3113 = vunpack.c.l.b16 %v3065
      %v3114 = vunpack.c.l.b16 %v3066
      %v3115 = vunpack.c.l.b16 %v3067
      %v3116 = vunpack.c.l.b16 %v3068
      %v3117 = vpack.c.b16 %v3102, %v3101
      %v3118 = vpack.c.b16 %v3104, %v3103
      %v3119 = vpack.c.b16 %v3106, %v3105
      %v3120 = vpack.c.b16 %v3108, %v3107
      %v3121 = vpack.c.b16 %v3110, %v3109
      %v3122 = vpack.c.b16 %v3112, %v3111
      %v3123 = vpack.c.b16 %v3114, %v3113
      %v3124 = vpack.c.b16 %v3116, %v3115
      %3133 = vmatprep.subr.bf16.mxu0 0
      %3134 = vmatpush1.bf16.msra.mxu0 %v3117
      %3135 = vmatprep.subr.bf16.mxu0 0
      %3136 = vmatpush1.bf16.msra.mxu0 %v3118
      %3137 = vmatprep.subr.bf16.mxu0 0
      %3138 = vmatpush1.bf16.msra.mxu0 %v3119
      %3139 = vmatprep.subr.bf16.mxu0 0
      %3140 = vmatpush1.bf16.msra.mxu0 %v3120
      %3141 = vmatprep.subr.bf16.mxu0 0
      %3142 = vmatpush1.bf16.msra.mxu0 %v3121
      %3143 = vmatprep.subr.bf16.mxu0 0
      %3144 = vmatpush1.bf16.msra.mxu0 %v3122
      %3145 = vmatprep.subr.bf16.mxu0 0
      %3146 = vmatpush1.bf16.msra.mxu0 %v3123
      %3147 = vmatprep.subr.bf16.mxu0 0
      %3148 = vmatpush1.bf16.msra.mxu0 %v3124
      %3149 = vmatprep.subr.bf16.mxu0 0
      %3150 = vmatpush1.bf16.msra.mxu0 0
      %3151 = vmatprep.subr.bf16.mxu0 0
      %3152 = vmatpush1.bf16.msra.mxu0 0
      %3153 = vmatprep.subr.bf16.mxu0 0
      %3154 = vmatpush1.bf16.msra.mxu0 0
      %3155 = vmatprep.subr.bf16.mxu0 0
      %3156 = vmatpush1.bf16.msra.mxu0 0
      %3157 = vmatprep.subr.bf16.mxu0 0
      %3158 = vmatpush1.bf16.msra.mxu0 0
      %3159 = vmatprep.subr.bf16.mxu0 0
      %3160 = vmatpush1.bf16.msra.mxu0 0
      %3161 = vmatprep.subr.bf16.mxu0 0
      %3162 = vmatpush1.bf16.msra.mxu0 0
      %3163 = vmatprep.subr.bf16.mxu0 0
      %3164 = vmatpush1.bf16.msra.mxu0 0
      %3165 = vmatprep.mubr.bf16.mxu0 0
      %3166 = vmatmul.mubr.bf16.gmra.mrb[0].mxu0 %v3077
      %v3167 = vpop.f32.mrb[0].mxu0
      %v3168 = vadd.f32 0.0, %v3167
      %v3169 = vpop.f32.mrb[0].mxu0
      %v3170 = vpop.f32.mrb[0].mxu0
      %v3171 = vadd.f32 0.0, %v3170
      %v3172 = vpop.f32.mrb[0].mxu0
      %3173 = vmatprep.mubr.bf16.mxu0 0
      %3174 = vmatmul.mubr.bf16.gmra.mrb[0].mxu0 %v3078
      %v3175 = vpop.f32.mrb[0].mxu0
      %v3176 = vadd.f32 0.0, %v3175
      %v3177 = vpop.f32.mrb[0].mxu0
      %v3178 = vpop.f32.mrb[0].mxu0
      %v3179 = vadd.f32 0.0, %v3178
      %v3180 = vpop.f32.mrb[0].mxu0
      %3181 = vmatprep.mubr.bf16.mxu0 0
      %3182 = vmatmul.mubr.bf16.gmra.mrb[0].mxu0 %v3079
      %v3183 = vpop.f32.mrb[0].mxu0
      %v3184 = vadd.f32 0.0, %v3183
      %v3185 = vpop.f32.mrb[0].mxu0
      %v3186 = vpop.f32.mrb[0].mxu0
      %v3187 = vadd.f32 0.0, %v3186
      %v3188 = vpop.f32.mrb[0].mxu0
      %3189 = vmatprep.mubr.bf16.mxu0 0
      %3190 = vmatmul.mubr.bf16.gmra.mrb[0].mxu0 %v3080
      %v3191 = vpop.f32.mrb[0].mxu0
      %v3192 = vadd.f32 0.0, %v3191
      %v3193 = vpop.f32.mrb[0].mxu0
      %v3194 = vpop.f32.mrb[0].mxu0
      %v3195 = vadd.f32 0.0, %v3194
      %v3196 = vpop.f32.mrb[0].mxu0
      %3197 = vdwg.mxu0
      %v3198 = vadd.f32 %v2988, %v3168
      %v3199 = vadd.f32 %v2989, %v3171
      %v3200 = vadd.f32 %v2990, %v3176
      %v3201 = vadd.f32 %v2991, %v3179
      %v3202 = vadd.f32 %v2992, %v3184
      %v3203 = vadd.f32 %v2993, %v3187
      %v3204 = vadd.f32 %v2994, %v3192
      %v3205 = vadd.f32 %v2995, %v3195
      %v3206 = vpack.c.bf16 %v3199, %v3198
      %v3207 = vpack.c.bf16 %v3201, %v3200
      %v3208 = vpack.c.bf16 %v3203, %v3202
      %v3209 = vpack.c.bf16 %v3205, %v3204
      %v3214 = vunpack.c.l.b16 %v3206
      %v3215 = vunpack.c.h.b16 %v3206
      %v3216 = vunpack.c.l.b16 %v3207
      %v3217 = vunpack.c.h.b16 %v3207
      %v3218 = vunpack.c.l.b16 %v3208
      %v3219 = vunpack.c.h.b16 %v3208
      %v3220 = vunpack.c.l.b16 %v3209
      %v3221 = vunpack.c.h.b16 %v3209
      %v3222 = vpack.c.b16 %v3214, %v3214
      %v3223 = vpack.c.b16 %v3215, %v3215
      %v3224 = vpack.c.b16 %v3216, %v3216
      %v3225 = vpack.c.b16 %v3217, %v3217
      %v3226 = vpack.c.b16 %v3218, %v3218
      %v3227 = vpack.c.b16 %v3219, %v3219
      %v3228 = vpack.c.b16 %v3220, %v3220
      %v3229 = vpack.c.b16 %v3221, %v3221
      %s3238 = scalar_lea.vmem %s204, 32
      %3239 = vst [vmem:[%s3238] sm:$0xf] %v3222
      %3240 = vst [vmem:[%s3238 + $0x4] sm:$0xf] %v3223
      %3241 = vst [vmem:[%s3238 + $0x8] sm:$0xf] %v3224
      %3242 = vst [vmem:[%s3238 + $0xc] sm:$0xf] %v3225
      %3243 = vst [vmem:[%s3238 + $0x10] sm:$0xf] %v3226
      %3244 = vst [vmem:[%s3238 + $0x14] sm:$0xf] %v3227
      %3245 = vst [vmem:[%s3238 + $0x18] sm:$0xf] %v3228
      %3246 = vst [vmem:[%s3238 + $0x1c] sm:$0xf] %v3229
      %v3247 = vadd.f32 %v3198, %v3199
      %v3248 = vadd.f32 %v3247, %v3200
      %v3249 = vadd.f32 %v3248, %v3201
      %v3250 = vadd.f32 %v3249, %v3202
      %v3251 = vadd.f32 %v3250, %v3203
      %v3252 = vadd.f32 %v3251, %v3204
      %v3253 = vadd.f32 %v3252, %v3205
      %v3254 = vrot.slane %v3253, 4
      %v3255 = vadd.f32 %v3253, %v3254
      %v3256 = vrot.slane %v3255, 2
      %v3257 = vadd.f32 %v3255, %v3256
      %v3258 = vrot.slane %v3257, 1
      %v3259 = vadd.f32 %v3257, %v3258
      %v3260 = vadd.f32 %v2212, %v3259
      %v3261 = vmul.f32 %v3198, %v3198
      %v3262 = vmul.f32 %v3199, %v3199
      %v3263 = vmul.f32 %v3200, %v3200
      %v3264 = vmul.f32 %v3201, %v3201
      %v3265 = vmul.f32 %v3202, %v3202
      %v3266 = vmul.f32 %v3203, %v3203
      %v3267 = vmul.f32 %v3204, %v3204
      %v3268 = vmul.f32 %v3205, %v3205
      %v3269 = vadd.f32 %v3261, %v3262
      %v3270 = vadd.f32 %v3269, %v3263
      %v3271 = vadd.f32 %v3270, %v3264
      %v3272 = vadd.f32 %v3271, %v3265
      %v3273 = vadd.f32 %v3272, %v3266
      %v3274 = vadd.f32 %v3273, %v3267
      %v3275 = vadd.f32 %v3274, %v3268
      %v3276 = vrot.slane %v3275, 4
      %v3277 = vadd.f32 %v3275, %v3276
      %v3278 = vrot.slane %v3277, 2
      %v3279 = vadd.f32 %v3277, %v3278
      %v3280 = vrot.slane %v3279, 1
      %v3281 = vadd.f32 %v3279, %v3280
      %v3282 = vadd.f32 %v2234, %v3281
      %v3283 = vld [vmem:[%s1225] sm:$0xf]
      %v3284 = vld [vmem:[%s1225 + $0x8] sm:$0xf]
      %v3285 = vld [vmem:[%s1225 + $0x10] sm:$0xf]
      %v3286 = vld [vmem:[%s1225 + $0x18] sm:$0xf]
      %v3287 = vld [vmem:[%s1225 + $0x20] sm:$0xf]
      %v3288 = vld [vmem:[%s1225 + $0x28] sm:$0xf]
      %v3289 = vld [vmem:[%s1225 + $0x30] sm:$0xf]
      %v3290 = vld [vmem:[%s1225 + $0x38] sm:$0xf]
      %s3291 = scalar_lea.vmem %s2, 512
      %v3292 = vld [vmem:[%s3291] sm:$0xf]
      %v3293 = vld [vmem:[%s3291 + $0x4] sm:$0xf]
      %v3294 = vld [vmem:[%s3291 + $0x8] sm:$0xf]
      %v3295 = vld [vmem:[%s3291 + $0xc] sm:$0xf]
      %v3296 = vld [vmem:[%s3291 + $0x10] sm:$0xf]
      %v3297 = vld [vmem:[%s3291 + $0x14] sm:$0xf]
      %v3298 = vld [vmem:[%s3291 + $0x18] sm:$0xf]
      %v3299 = vld [vmem:[%s3291 + $0x1c] sm:$0xf]
      %v3300 = vld [vmem:[%s3291 + $0x20] sm:$0xf]
      %v3301 = vld [vmem:[%s3291 + $0x24] sm:$0xf]
      %v3302 = vld [vmem:[%s3291 + $0x28] sm:$0xf]
      %v3303 = vld [vmem:[%s3291 + $0x2c] sm:$0xf]
      %v3304 = vld [vmem:[%s3291 + $0x30] sm:$0xf]
      %v3305 = vld [vmem:[%s3291 + $0x34] sm:$0xf]
      %v3306 = vld [vmem:[%s3291 + $0x38] sm:$0xf]
      %v3307 = vld [vmem:[%s3291 + $0x3c] sm:$0xf]
      %v3308 = vld [vmem:[%s1225 + $0x4] sm:$0x1]
      %v3309 = vld [vmem:[%s1225 + $0xc] sm:$0x1]
      %v3310 = vld [vmem:[%s1225 + $0x14] sm:$0x1]
      %v3311 = vld [vmem:[%s1225 + $0x1c] sm:$0x1]
      %v3312 = vld [vmem:[%s1225 + $0x24] sm:$0x1]
      %v3313 = vld [vmem:[%s1225 + $0x2c] sm:$0x1]
      %v3314 = vld [vmem:[%s1225 + $0x34] sm:$0x1]
      %v3315 = vld [vmem:[%s1225 + $0x3c] sm:$0x1]
      %v3317 = vshrl.u32 %v3283, 16
      %v3319 = vrot.slane %v3317, 4
      %v3320 = vshll.u32 %v3283, 16
      %v3322 = vrot.slane %v3320, 5
      %v3323 = vor.u32 %v3319, %v3322
      %v3324 = vrot.slane %v3323, 4
      %v3326 = vshll.u32 %v3308, 16
      %v3328 = vrot.slane %v3326, 5
      %v3329 = vsel %vm244, %v3324, %v3328
      %v3331 = vshrl.u32 %v3284, 16
      %v3333 = vrot.slane %v3331, 4
      %v3334 = vshll.u32 %v3284, 16
      %v3336 = vrot.slane %v3334, 5
      %v3337 = vor.u32 %v3333, %v3336
      %v3338 = vrot.slane %v3337, 4
      %v3340 = vshll.u32 %v3309, 16
      %v3342 = vrot.slane %v3340, 5
      %v3343 = vsel %vm244, %v3338, %v3342
      %v3345 = vshrl.u32 %v3285, 16
      %v3347 = vrot.slane %v3345, 4
      %v3348 = vshll.u32 %v3285, 16
      %v3350 = vrot.slane %v3348, 5
      %v3351 = vor.u32 %v3347, %v3350
      %v3352 = vrot.slane %v3351, 4
      %v3354 = vshll.u32 %v3310, 16
      %v3356 = vrot.slane %v3354, 5
      %v3357 = vsel %vm244, %v3352, %v3356
      %v3359 = vshrl.u32 %v3286, 16
      %v3361 = vrot.slane %v3359, 4
      %v3362 = vshll.u32 %v3286, 16
      %v3364 = vrot.slane %v3362, 5
      %v3365 = vor.u32 %v3361, %v3364
      %v3366 = vrot.slane %v3365, 4
      %v3368 = vshll.u32 %v3311, 16
      %v3370 = vrot.slane %v3368, 5
      %v3371 = vsel %vm244, %v3366, %v3370
      %v3373 = vshrl.u32 %v3287, 16
      %v3375 = vrot.slane %v3373, 4
      %v3376 = vshll.u32 %v3287, 16
      %v3378 = vrot.slane %v3376, 5
      %v3379 = vor.u32 %v3375, %v3378
      %v3380 = vrot.slane %v3379, 4
      %v3382 = vshll.u32 %v3312, 16
      %v3384 = vrot.slane %v3382, 5
      %v3385 = vsel %vm244, %v3380, %v3384
      %v3387 = vshrl.u32 %v3288, 16
      %v3389 = vrot.slane %v3387, 4
      %v3390 = vshll.u32 %v3288, 16
      %v3392 = vrot.slane %v3390, 5
      %v3393 = vor.u32 %v3389, %v3392
      %v3394 = vrot.slane %v3393, 4
      %v3396 = vshll.u32 %v3313, 16
      %v3398 = vrot.slane %v3396, 5
      %v3399 = vsel %vm244, %v3394, %v3398
      %v3401 = vshrl.u32 %v3289, 16
      %v3403 = vrot.slane %v3401, 4
      %v3404 = vshll.u32 %v3289, 16
      %v3406 = vrot.slane %v3404, 5
      %v3407 = vor.u32 %v3403, %v3406
      %v3408 = vrot.slane %v3407, 4
      %v3410 = vshll.u32 %v3314, 16
      %v3412 = vrot.slane %v3410, 5
      %v3413 = vsel %vm244, %v3408, %v3412
      %v3415 = vshrl.u32 %v3290, 16
      %v3417 = vrot.slane %v3415, 4
      %v3418 = vshll.u32 %v3290, 16
      %v3420 = vrot.slane %v3418, 5
      %v3421 = vor.u32 %v3417, %v3420
      %v3422 = vrot.slane %v3421, 4
      %v3424 = vshll.u32 %v3315, 16
      %v3426 = vrot.slane %v3424, 5
      %v3427 = vsel %vm244, %v3422, %v3426
      %s3428 = scalar_lea.vmem %s2, 576
      %v3429 = vld [vmem:[%s3428] sm:$0xf]
      %v3430 = vld [vmem:[%s3428 + $0x4] sm:$0xf]
      %v3431 = vld [vmem:[%s3428 + $0x8] sm:$0xf]
      %v3432 = vld [vmem:[%s3428 + $0xc] sm:$0xf]
      %v3433 = vld [vmem:[%s3428 + $0x10] sm:$0xf]
      %v3434 = vld [vmem:[%s3428 + $0x14] sm:$0xf]
      %v3435 = vld [vmem:[%s3428 + $0x18] sm:$0xf]
      %v3436 = vld [vmem:[%s3428 + $0x1c] sm:$0xf]
      %v3437 = vld [vmem:[%s3428 + $0x20] sm:$0xf]
      %v3438 = vld [vmem:[%s3428 + $0x24] sm:$0xf]
      %v3439 = vld [vmem:[%s3428 + $0x28] sm:$0xf]
      %v3440 = vld [vmem:[%s3428 + $0x2c] sm:$0xf]
      %v3441 = vld [vmem:[%s3428 + $0x30] sm:$0xf]
      %v3442 = vld [vmem:[%s3428 + $0x34] sm:$0xf]
      %v3443 = vld [vmem:[%s3428 + $0x38] sm:$0xf]
      %v3444 = vld [vmem:[%s3428 + $0x3c] sm:$0xf]
      %v3445 = vunpack.c.l.b16 %v3329
      %v3446 = vunpack.c.l.b16 %v3343
      %v3447 = vunpack.c.l.b16 %v3357
      %v3448 = vunpack.c.l.b16 %v3371
      %v3449 = vunpack.c.l.b16 %v3385
      %v3450 = vunpack.c.l.b16 %v3399
      %v3451 = vunpack.c.l.b16 %v3413
      %v3452 = vunpack.c.l.b16 %v3427
      %v3453 = vpack.c.b16 %v3446, %v3445
      %v3454 = vpack.c.b16 %v3448, %v3447
      %v3455 = vpack.c.b16 %v3450, %v3449
      %v3456 = vpack.c.b16 %v3452, %v3451
      %v3477 = vunpack.c.l.b16 %v3429
      %v3478 = vunpack.c.l.b16 %v3430
      %v3479 = vunpack.c.l.b16 %v3431
      %v3480 = vunpack.c.l.b16 %v3432
      %v3481 = vunpack.c.l.b16 %v3433
      %v3482 = vunpack.c.l.b16 %v3434
      %v3483 = vunpack.c.l.b16 %v3435
      %v3484 = vunpack.c.l.b16 %v3436
      %v3485 = vunpack.c.l.b16 %v3437
      %v3486 = vunpack.c.l.b16 %v3438
      %v3487 = vunpack.c.l.b16 %v3439
      %v3488 = vunpack.c.l.b16 %v3440
      %v3489 = vunpack.c.l.b16 %v3441
      %v3490 = vunpack.c.l.b16 %v3442
      %v3491 = vunpack.c.l.b16 %v3443
      %v3492 = vunpack.c.l.b16 %v3444
      %v3493 = vpack.c.b16 %v3478, %v3477
      %v3494 = vpack.c.b16 %v3480, %v3479
      %v3495 = vpack.c.b16 %v3482, %v3481
      %v3496 = vpack.c.b16 %v3484, %v3483
      %v3497 = vpack.c.b16 %v3486, %v3485
      %v3498 = vpack.c.b16 %v3488, %v3487
      %v3499 = vpack.c.b16 %v3490, %v3489
      %v3500 = vpack.c.b16 %v3492, %v3491
      %3509 = vmatprep.subr.bf16.mxu0 0
      %3510 = vmatpush1.bf16.msra.mxu0 %v3493
      %3511 = vmatprep.subr.bf16.mxu0 0
      %3512 = vmatpush1.bf16.msra.mxu0 %v3494
      %3513 = vmatprep.subr.bf16.mxu0 0
      %3514 = vmatpush1.bf16.msra.mxu0 %v3495
      %3515 = vmatprep.subr.bf16.mxu0 0
      %3516 = vmatpush1.bf16.msra.mxu0 %v3496
      %3517 = vmatprep.subr.bf16.mxu0 0
      %3518 = vmatpush1.bf16.msra.mxu0 %v3497
      %3519 = vmatprep.subr.bf16.mxu0 0
      %3520 = vmatpush1.bf16.msra.mxu0 %v3498
      %3521 = vmatprep.subr.bf16.mxu0 0
      %3522 = vmatpush1.bf16.msra.mxu0 %v3499
      %3523 = vmatprep.subr.bf16.mxu0 0
      %3524 = vmatpush1.bf16.msra.mxu0 %v3500
      %3525 = vmatprep.subr.bf16.mxu0 0
      %3526 = vmatpush1.bf16.msra.mxu0 0
      %3527 = vmatprep.subr.bf16.mxu0 0
      %3528 = vmatpush1.bf16.msra.mxu0 0
      %3529 = vmatprep.subr.bf16.mxu0 0
      %3530 = vmatpush1.bf16.msra.mxu0 0
      %3531 = vmatprep.subr.bf16.mxu0 0
      %3532 = vmatpush1.bf16.msra.mxu0 0
      %3533 = vmatprep.subr.bf16.mxu0 0
      %3534 = vmatpush1.bf16.msra.mxu0 0
      %3535 = vmatprep.subr.bf16.mxu0 0
      %3536 = vmatpush1.bf16.msra.mxu0 0
      %3537 = vmatprep.subr.bf16.mxu0 0
      %3538 = vmatpush1.bf16.msra.mxu0 0
      %3539 = vmatprep.subr.bf16.mxu0 0
      %3540 = vmatpush1.bf16.msra.mxu0 0
      %3541 = vmatprep.mubr.bf16.mxu0 0
      %3542 = vmatmul.mubr.bf16.gmra.mrb[0].mxu0 %v3453
      %v3543 = vpop.f32.mrb[0].mxu0
      %v3544 = vadd.f32 0.0, %v3543
      %v3545 = vpop.f32.mrb[0].mxu0
      %v3546 = vpop.f32.mrb[0].mxu0
      %v3547 = vadd.f32 0.0, %v3546
      %v3548 = vpop.f32.mrb[0].mxu0
      %3549 = vmatprep.mubr.bf16.mxu0 0
      %3550 = vmatmul.mubr.bf16.gmra.mrb[0].mxu0 %v3454
      %v3551 = vpop.f32.mrb[0].mxu0
      %v3552 = vadd.f32 0.0, %v3551
      %v3553 = vpop.f32.mrb[0].mxu0
      %v3554 = vpop.f32.mrb[0].mxu0
      %v3555 = vadd.f32 0.0, %v3554
      %v3556 = vpop.f32.mrb[0].mxu0
      %3557 = vmatprep.mubr.bf16.mxu0 0
      %3558 = vmatmul.mubr.bf16.gmra.mrb[0].mxu0 %v3455
      %v3559 = vpop.f32.mrb[0].mxu0
      %v3560 = vadd.f32 0.0, %v3559
      %v3561 = vpop.f32.mrb[0].mxu0
      %v3562 = vpop.f32.mrb[0].mxu0
      %v3563 = vadd.f32 0.0, %v3562
      %v3564 = vpop.f32.mrb[0].mxu0
      %3565 = vmatprep.mubr.bf16.mxu0 0
      %3566 = vmatmul.mubr.bf16.gmra.mrb[0].mxu0 %v3456
      %v3567 = vpop.f32.mrb[0].mxu0
      %v3568 = vadd.f32 0.0, %v3567
      %v3569 = vpop.f32.mrb[0].mxu0
      %v3570 = vpop.f32.mrb[0].mxu0
      %v3571 = vadd.f32 0.0, %v3570
      %v3572 = vpop.f32.mrb[0].mxu0
      %3573 = vdwg.mxu0
      %v3582 = vunpack.c.l.b16 %v3283
      %v3583 = vunpack.c.l.b16 %v3284
      %v3584 = vunpack.c.l.b16 %v3285
      %v3585 = vunpack.c.l.b16 %v3286
      %v3586 = vunpack.c.l.b16 %v3287
      %v3587 = vunpack.c.l.b16 %v3288
      %v3588 = vunpack.c.l.b16 %v3289
      %v3589 = vunpack.c.l.b16 %v3290
      %v3590 = vpack.c.b16 %v3583, %v3582
      %v3591 = vpack.c.b16 %v3585, %v3584
      %v3592 = vpack.c.b16 %v3587, %v3586
      %v3593 = vpack.c.b16 %v3589, %v3588
      %v3614 = vunpack.c.l.b16 %v3292
      %v3615 = vunpack.c.l.b16 %v3293
      %v3616 = vunpack.c.l.b16 %v3294
      %v3617 = vunpack.c.l.b16 %v3295
      %v3618 = vunpack.c.l.b16 %v3296
      %v3619 = vunpack.c.l.b16 %v3297
      %v3620 = vunpack.c.l.b16 %v3298
      %v3621 = vunpack.c.l.b16 %v3299
      %v3622 = vunpack.c.l.b16 %v3300
      %v3623 = vunpack.c.l.b16 %v3301
      %v3624 = vunpack.c.l.b16 %v3302
      %v3625 = vunpack.c.l.b16 %v3303
      %v3626 = vunpack.c.l.b16 %v3304
      %v3627 = vunpack.c.l.b16 %v3305
      %v3628 = vunpack.c.l.b16 %v3306
      %v3629 = vunpack.c.l.b16 %v3307
      %v3630 = vpack.c.b16 %v3615, %v3614
      %v3631 = vpack.c.b16 %v3617, %v3616
      %v3632 = vpack.c.b16 %v3619, %v3618
      %v3633 = vpack.c.b16 %v3621, %v3620
      %v3634 = vpack.c.b16 %v3623, %v3622
      %v3635 = vpack.c.b16 %v3625, %v3624
      %v3636 = vpack.c.b16 %v3627, %v3626
      %v3637 = vpack.c.b16 %v3629, %v3628
      %3646 = vmatprep.subr.bf16.mxu0 0
      %3647 = vmatpush1.bf16.msra.mxu0 %v3630
      %3648 = vmatprep.subr.bf16.mxu0 0
      %3649 = vmatpush1.bf16.msra.mxu0 %v3631
      %3650 = vmatprep.subr.bf16.mxu0 0
      %3651 = vmatpush1.bf16.msra.mxu0 %v3632
      %3652 = vmatprep.subr.bf16.mxu0 0
      %3653 = vmatpush1.bf16.msra.mxu0 %v3633
      %3654 = vmatprep.subr.bf16.mxu0 0
      %3655 = vmatpush1.bf16.msra.mxu0 %v3634
      %3656 = vmatprep.subr.bf16.mxu0 0
      %3657 = vmatpush1.bf16.msra.mxu0 %v3635
      %3658 = vmatprep.subr.bf16.mxu0 0
      %3659 = vmatpush1.bf16.msra.mxu0 %v3636
      %3660 = vmatprep.subr.bf16.mxu0 0
      %3661 = vmatpush1.bf16.msra.mxu0 %v3637
      %3662 = vmatprep.subr.bf16.mxu0 0
      %3663 = vmatpush1.bf16.msra.mxu0 0
      %3664 = vmatprep.subr.bf16.mxu0 0
      %3665 = vmatpush1.bf16.msra.mxu0 0
      %3666 = vmatprep.subr.bf16.mxu0 0
      %3667 = vmatpush1.bf16.msra.mxu0 0
      %3668 = vmatprep.subr.bf16.mxu0 0
      %3669 = vmatpush1.bf16.msra.mxu0 0
      %3670 = vmatprep.subr.bf16.mxu0 0
      %3671 = vmatpush1.bf16.msra.mxu0 0
      %3672 = vmatprep.subr.bf16.mxu0 0
      %3673 = vmatpush1.bf16.msra.mxu0 0
      %3674 = vmatprep.subr.bf16.mxu0 0
      %3675 = vmatpush1.bf16.msra.mxu0 0
      %3676 = vmatprep.subr.bf16.mxu0 0
      %3677 = vmatpush1.bf16.msra.mxu0 0
      %3678 = vmatprep.mubr.bf16.mxu0 0
      %3679 = vmatmul.mubr.bf16.gmra.mrb[0].mxu0 %v3590
      %v3680 = vpop.f32.mrb[0].mxu0
      %v3681 = vadd.f32 %v3544, %v3680
      %v3682 = vpop.f32.mrb[0].mxu0
      %v3683 = vpop.f32.mrb[0].mxu0
      %v3684 = vadd.f32 %v3547, %v3683
      %v3685 = vpop.f32.mrb[0].mxu0
      %3686 = vmatprep.mubr.bf16.mxu0 0
      %3687 = vmatmul.mubr.bf16.gmra.mrb[0].mxu0 %v3591
      %v3688 = vpop.f32.mrb[0].mxu0
      %v3689 = vadd.f32 %v3552, %v3688
      %v3690 = vpop.f32.mrb[0].mxu0
      %v3691 = vpop.f32.mrb[0].mxu0
      %v3692 = vadd.f32 %v3555, %v3691
      %v3693 = vpop.f32.mrb[0].mxu0
      %3694 = vmatprep.mubr.bf16.mxu0 0
      %3695 = vmatmul.mubr.bf16.gmra.mrb[0].mxu0 %v3592
      %v3696 = vpop.f32.mrb[0].mxu0
      %v3697 = vadd.f32 %v3560, %v3696
      %v3698 = vpop.f32.mrb[0].mxu0
      %v3699 = vpop.f32.mrb[0].mxu0
      %v3700 = vadd.f32 %v3563, %v3699
      %v3701 = vpop.f32.mrb[0].mxu0
      %3702 = vmatprep.mubr.bf16.mxu0 0
      %3703 = vmatmul.mubr.bf16.gmra.mrb[0].mxu0 %v3593
      %v3704 = vpop.f32.mrb[0].mxu0
      %v3705 = vadd.f32 %v3568, %v3704
      %v3706 = vpop.f32.mrb[0].mxu0
      %v3707 = vpop.f32.mrb[0].mxu0
      %v3708 = vadd.f32 %v3571, %v3707
      %v3709 = vpop.f32.mrb[0].mxu0
      %3710 = vdwg.mxu0
      %s3711 = scalar_lea.vmem [#allocation2], 16
      %v3712 = vld [vmem:[%s3711] sm:$0xf]
      %v3713 = vld [vmem:[%s3711 + $0x8] sm:$0xf]
      %v3714 = vld [vmem:[%s3711 + $0x10] sm:$0xf]
      %v3715 = vld [vmem:[%s3711 + $0x18] sm:$0xf]
      %v3716 = vld [vmem:[%s3711 + $0x20] sm:$0xf]
      %v3717 = vld [vmem:[%s3711 + $0x28] sm:$0xf]
      %v3718 = vld [vmem:[%s3711 + $0x30] sm:$0xf]
      %v3719 = vld [vmem:[%s3711 + $0x38] sm:$0xf]
      %s3720 = scalar_lea.vmem %s2, 640
      %v3721 = vld [vmem:[%s3720] sm:$0xf]
      %v3722 = vld [vmem:[%s3720 + $0x4] sm:$0xf]
      %v3723 = vld [vmem:[%s3720 + $0x8] sm:$0xf]
      %v3724 = vld [vmem:[%s3720 + $0xc] sm:$0xf]
      %v3725 = vld [vmem:[%s3720 + $0x10] sm:$0xf]
      %v3726 = vld [vmem:[%s3720 + $0x14] sm:$0xf]
      %v3727 = vld [vmem:[%s3720 + $0x18] sm:$0xf]
      %v3728 = vld [vmem:[%s3720 + $0x1c] sm:$0xf]
      %v3729 = vld [vmem:[%s3720 + $0x20] sm:$0xf]
      %v3730 = vld [vmem:[%s3720 + $0x24] sm:$0xf]
      %v3731 = vld [vmem:[%s3720 + $0x28] sm:$0xf]
      %v3732 = vld [vmem:[%s3720 + $0x2c] sm:$0xf]
      %v3733 = vld [vmem:[%s3720 + $0x30] sm:$0xf]
      %v3734 = vld [vmem:[%s3720 + $0x34] sm:$0xf]
      %v3735 = vld [vmem:[%s3720 + $0x38] sm:$0xf]
      %v3736 = vld [vmem:[%s3720 + $0x3c] sm:$0xf]
      %v3745 = vunpack.c.l.b16 %v3712
      %v3746 = vunpack.c.l.b16 %v3713
      %v3747 = vunpack.c.l.b16 %v3714
      %v3748 = vunpack.c.l.b16 %v3715
      %v3749 = vunpack.c.l.b16 %v3716
      %v3750 = vunpack.c.l.b16 %v3717
      %v3751 = vunpack.c.l.b16 %v3718
      %v3752 = vunpack.c.l.b16 %v3719
      %v3753 = vpack.c.b16 %v3746, %v3745
      %v3754 = vpack.c.b16 %v3748, %v3747
      %v3755 = vpack.c.b16 %v3750, %v3749
      %v3756 = vpack.c.b16 %v3752, %v3751
      %v3777 = vunpack.c.l.b16 %v3721
      %v3778 = vunpack.c.l.b16 %v3722
      %v3779 = vunpack.c.l.b16 %v3723
      %v3780 = vunpack.c.l.b16 %v3724
      %v3781 = vunpack.c.l.b16 %v3725
      %v3782 = vunpack.c.l.b16 %v3726
      %v3783 = vunpack.c.l.b16 %v3727
      %v3784 = vunpack.c.l.b16 %v3728
      %v3785 = vunpack.c.l.b16 %v3729
      %v3786 = vunpack.c.l.b16 %v3730
      %v3787 = vunpack.c.l.b16 %v3731
      %v3788 = vunpack.c.l.b16 %v3732
      %v3789 = vunpack.c.l.b16 %v3733
      %v3790 = vunpack.c.l.b16 %v3734
      %v3791 = vunpack.c.l.b16 %v3735
      %v3792 = vunpack.c.l.b16 %v3736
      %v3793 = vpack.c.b16 %v3778, %v3777
      %v3794 = vpack.c.b16 %v3780, %v3779
      %v3795 = vpack.c.b16 %v3782, %v3781
      %v3796 = vpack.c.b16 %v3784, %v3783
      %v3797 = vpack.c.b16 %v3786, %v3785
      %v3798 = vpack.c.b16 %v3788, %v3787
      %v3799 = vpack.c.b16 %v3790, %v3789
      %v3800 = vpack.c.b16 %v3792, %v3791
      %3809 = vmatprep.subr.bf16.mxu0 0
      %3810 = vmatpush1.bf16.msra.mxu0 %v3793
      %3811 = vmatprep.subr.bf16.mxu0 0
      %3812 = vmatpush1.bf16.msra.mxu0 %v3794
      %3813 = vmatprep.subr.bf16.mxu0 0
      %3814 = vmatpush1.bf16.msra.mxu0 %v3795
      %3815 = vmatprep.subr.bf16.mxu0 0
      %3816 = vmatpush1.bf16.msra.mxu0 %v3796
      %3817 = vmatprep.subr.bf16.mxu0 0
      %3818 = vmatpush1.bf16.msra.mxu0 %v3797
      %3819 = vmatprep.subr.bf16.mxu0 0
      %3820 = vmatpush1.bf16.msra.mxu0 %v3798
      %3821 = vmatprep.subr.bf16.mxu0 0
      %3822 = vmatpush1.bf16.msra.mxu0 %v3799
      %3823 = vmatprep.subr.bf16.mxu0 0
      %3824 = vmatpush1.bf16.msra.mxu0 %v3800
      %3825 = vmatprep.subr.bf16.mxu0 0
      %3826 = vmatpush1.bf16.msra.mxu0 0
      %3827 = vmatprep.subr.bf16.mxu0 0
      %3828 = vmatpush1.bf16.msra.mxu0 0
      %3829 = vmatprep.subr.bf16.mxu0 0
      %3830 = vmatpush1.bf16.msra.mxu0 0
      %3831 = vmatprep.subr.bf16.mxu0 0
      %3832 = vmatpush1.bf16.msra.mxu0 0
      %3833 = vmatprep.subr.bf16.mxu0 0
      %3834 = vmatpush1.bf16.msra.mxu0 0
      %3835 = vmatprep.subr.bf16.mxu0 0
      %3836 = vmatpush1.bf16.msra.mxu0 0
      %3837 = vmatprep.subr.bf16.mxu0 0
      %3838 = vmatpush1.bf16.msra.mxu0 0
      %3839 = vmatprep.subr.bf16.mxu0 0
      %3840 = vmatpush1.bf16.msra.mxu0 0
      %3841 = vmatprep.mubr.bf16.mxu0 0
      %3842 = vmatmul.mubr.bf16.gmra.mrb[0].mxu0 %v3753
      %v3843 = vpop.f32.mrb[0].mxu0
      %v3844 = vadd.f32 0.0, %v3843
      %v3845 = vpop.f32.mrb[0].mxu0
      %v3846 = vpop.f32.mrb[0].mxu0
      %v3847 = vadd.f32 0.0, %v3846
      %v3848 = vpop.f32.mrb[0].mxu0
      %3849 = vmatprep.mubr.bf16.mxu0 0
      %3850 = vmatmul.mubr.bf16.gmra.mrb[0].mxu0 %v3754
      %v3851 = vpop.f32.mrb[0].mxu0
      %v3852 = vadd.f32 0.0, %v3851
      %v3853 = vpop.f32.mrb[0].mxu0
      %v3854 = vpop.f32.mrb[0].mxu0
      %v3855 = vadd.f32 0.0, %v3854
      %v3856 = vpop.f32.mrb[0].mxu0
      %3857 = vmatprep.mubr.bf16.mxu0 0
      %3858 = vmatmul.mubr.bf16.gmra.mrb[0].mxu0 %v3755
      %v3859 = vpop.f32.mrb[0].mxu0
      %v3860 = vadd.f32 0.0, %v3859
      %v3861 = vpop.f32.mrb[0].mxu0
      %v3862 = vpop.f32.mrb[0].mxu0
      %v3863 = vadd.f32 0.0, %v3862
      %v3864 = vpop.f32.mrb[0].mxu0
      %3865 = vmatprep.mubr.bf16.mxu0 0
      %3866 = vmatmul.mubr.bf16.gmra.mrb[0].mxu0 %v3756
      %v3867 = vpop.f32.mrb[0].mxu0
      %v3868 = vadd.f32 0.0, %v3867
      %v3869 = vpop.f32.mrb[0].mxu0
      %v3870 = vpop.f32.mrb[0].mxu0
      %v3871 = vadd.f32 0.0, %v3870
      %v3872 = vpop.f32.mrb[0].mxu0
      %3873 = vdwg.mxu0
      %v3874 = vadd.f32 %v3681, %v3844
      %v3875 = vadd.f32 %v3684, %v3847
      %v3876 = vadd.f32 %v3689, %v3852
      %v3877 = vadd.f32 %v3692, %v3855
      %v3878 = vadd.f32 %v3697, %v3860
      %v3879 = vadd.f32 %v3700, %v3863
      %v3880 = vadd.f32 %v3705, %v3868
      %v3881 = vadd.f32 %v3708, %v3871
      %v3882 = vld [vmem:[%s3711] sm:$0xf]
      %v3883 = vld [vmem:[%s3711 + $0x4] sm:$0x1]
      %v3884 = vld [vmem:[%s3711 + $0x8] sm:$0xf]
      %v3885 = vld [vmem:[%s3711 + $0xc] sm:$0x1]
      %v3886 = vld [vmem:[%s3711 + $0x10] sm:$0xf]
      %v3887 = vld [vmem:[%s3711 + $0x14] sm:$0x1]
      %v3888 = vld [vmem:[%s3711 + $0x18] sm:$0xf]
      %v3889 = vld [vmem:[%s3711 + $0x1c] sm:$0x1]
      %v3890 = vld [vmem:[%s3711 + $0x20] sm:$0xf]
      %v3891 = vld [vmem:[%s3711 + $0x24] sm:$0x1]
      %v3892 = vld [vmem:[%s3711 + $0x28] sm:$0xf]
      %v3893 = vld [vmem:[%s3711 + $0x2c] sm:$0x1]
      %v3894 = vld [vmem:[%s3711 + $0x30] sm:$0xf]
      %v3895 = vld [vmem:[%s3711 + $0x34] sm:$0x1]
      %v3896 = vld [vmem:[%s3711 + $0x38] sm:$0xf]
      %v3897 = vld [vmem:[%s3711 + $0x3c] sm:$0x1]
      %v3899 = vshrl.u32 %v3882, 16
      %v3901 = vrot.slane %v3899, 4
      %v3902 = vshll.u32 %v3882, 16
      %v3904 = vrot.slane %v3902, 5
      %v3905 = vor.u32 %v3901, %v3904
      %v3906 = vrot.slane %v3905, 4
      %v3908 = vshll.u32 %v3883, 16
      %v3910 = vrot.slane %v3908, 5
      %v3911 = vsel %vm244, %v3906, %v3910
      %v3913 = vshrl.u32 %v3884, 16
      %v3915 = vrot.slane %v3913, 4
      %v3916 = vshll.u32 %v3884, 16
      %v3918 = vrot.slane %v3916, 5
      %v3919 = vor.u32 %v3915, %v3918
      %v3920 = vrot.slane %v3919, 4
      %v3922 = vshll.u32 %v3885, 16
      %v3924 = vrot.slane %v3922, 5
      %v3925 = vsel %vm244, %v3920, %v3924
      %v3927 = vshrl.u32 %v3886, 16
      %v3929 = vrot.slane %v3927, 4
      %v3930 = vshll.u32 %v3886, 16
      %v3932 = vrot.slane %v3930, 5
      %v3933 = vor.u32 %v3929, %v3932
      %v3934 = vrot.slane %v3933, 4
      %v3936 = vshll.u32 %v3887, 16
      %v3938 = vrot.slane %v3936, 5
      %v3939 = vsel %vm244, %v3934, %v3938
      %v3941 = vshrl.u32 %v3888, 16
      %v3943 = vrot.slane %v3941, 4
      %v3944 = vshll.u32 %v3888, 16
      %v3946 = vrot.slane %v3944, 5
      %v3947 = vor.u32 %v3943, %v3946
      %v3948 = vrot.slane %v3947, 4
      %v3950 = vshll.u32 %v3889, 16
      %v3952 = vrot.slane %v3950, 5
      %v3953 = vsel %vm244, %v3948, %v3952
      %v3955 = vshrl.u32 %v3890, 16
      %v3957 = vrot.slane %v3955, 4
      %v3958 = vshll.u32 %v3890, 16
      %v3960 = vrot.slane %v3958, 5
      %v3961 = vor.u32 %v3957, %v3960
      %v3962 = vrot.slane %v3961, 4
      %v3964 = vshll.u32 %v3891, 16
      %v3966 = vrot.slane %v3964, 5
      %v3967 = vsel %vm244, %v3962, %v3966
      %v3969 = vshrl.u32 %v3892, 16
      %v3971 = vrot.slane %v3969, 4
      %v3972 = vshll.u32 %v3892, 16
      %v3974 = vrot.slane %v3972, 5
      %v3975 = vor.u32 %v3971, %v3974
      %v3976 = vrot.slane %v3975, 4
      %v3978 = vshll.u32 %v3893, 16
      %v3980 = vrot.slane %v3978, 5
      %v3981 = vsel %vm244, %v3976, %v3980
      %v3983 = vshrl.u32 %v3894, 16
      %v3985 = vrot.slane %v3983, 4
      %v3986 = vshll.u32 %v3894, 16
      %v3988 = vrot.slane %v3986, 5
      %v3989 = vor.u32 %v3985, %v3988
      %v3990 = vrot.slane %v3989, 4
      %v3992 = vshll.u32 %v3895, 16
      %v3994 = vrot.slane %v3992, 5
      %v3995 = vsel %vm244, %v3990, %v3994
      %v3997 = vshrl.u32 %v3896, 16
      %v3999 = vrot.slane %v3997, 4
      %v4000 = vshll.u32 %v3896, 16
      %v4002 = vrot.slane %v4000, 5
      %v4003 = vor.u32 %v3999, %v4002
      %v4004 = vrot.slane %v4003, 4
      %v4006 = vshll.u32 %v3897, 16
      %v4008 = vrot.slane %v4006, 5
      %v4009 = vsel %vm244, %v4004, %v4008
      %s4010 = scalar_lea.vmem %s2, 704
      %v4011 = vld [vmem:[%s4010] sm:$0xf]
      %v4012 = vld [vmem:[%s4010 + $0x4] sm:$0xf]
      %v4013 = vld [vmem:[%s4010 + $0x8] sm:$0xf]
      %v4014 = vld [vmem:[%s4010 + $0xc] sm:$0xf]
      %v4015 = vld [vmem:[%s4010 + $0x10] sm:$0xf]
      %v4016 = vld [vmem:[%s4010 + $0x14] sm:$0xf]
      %v4017 = vld [vmem:[%s4010 + $0x18] sm:$0xf]
      %v4018 = vld [vmem:[%s4010 + $0x1c] sm:$0xf]
      %v4019 = vld [vmem:[%s4010 + $0x20] sm:$0xf]
      %v4020 = vld [vmem:[%s4010 + $0x24] sm:$0xf]
      %v4021 = vld [vmem:[%s4010 + $0x28] sm:$0xf]
      %v4022 = vld [vmem:[%s4010 + $0x2c] sm:$0xf]
      %v4023 = vld [vmem:[%s4010 + $0x30] sm:$0xf]
      %v4024 = vld [vmem:[%s4010 + $0x34] sm:$0xf]
      %v4025 = vld [vmem:[%s4010 + $0x38] sm:$0xf]
      %v4026 = vld [vmem:[%s4010 + $0x3c] sm:$0xf]
      %v4027 = vunpack.c.l.b16 %v3911
      %v4028 = vunpack.c.l.b16 %v3925
      %v4029 = vunpack.c.l.b16 %v3939
      %v4030 = vunpack.c.l.b16 %v3953
      %v4031 = vunpack.c.l.b16 %v3967
      %v4032 = vunpack.c.l.b16 %v3981
      %v4033 = vunpack.c.l.b16 %v3995
      %v4034 = vunpack.c.l.b16 %v4009
      %v4035 = vpack.c.b16 %v4028, %v4027
      %v4036 = vpack.c.b16 %v4030, %v4029
      %v4037 = vpack.c.b16 %v4032, %v4031
      %v4038 = vpack.c.b16 %v4034, %v4033
      %v4059 = vunpack.c.l.b16 %v4011
      %v4060 = vunpack.c.l.b16 %v4012
      %v4061 = vunpack.c.l.b16 %v4013
      %v4062 = vunpack.c.l.b16 %v4014
      %v4063 = vunpack.c.l.b16 %v4015
      %v4064 = vunpack.c.l.b16 %v4016
      %v4065 = vunpack.c.l.b16 %v4017
      %v4066 = vunpack.c.l.b16 %v4018
      %v4067 = vunpack.c.l.b16 %v4019
      %v4068 = vunpack.c.l.b16 %v4020
      %v4069 = vunpack.c.l.b16 %v4021
      %v4070 = vunpack.c.l.b16 %v4022
      %v4071 = vunpack.c.l.b16 %v4023
      %v4072 = vunpack.c.l.b16 %v4024
      %v4073 = vunpack.c.l.b16 %v4025
      %v4074 = vunpack.c.l.b16 %v4026
      %v4075 = vpack.c.b16 %v4060, %v4059
      %v4076 = vpack.c.b16 %v4062, %v4061
      %v4077 = vpack.c.b16 %v4064, %v4063
      %v4078 = vpack.c.b16 %v4066, %v4065
      %v4079 = vpack.c.b16 %v4068, %v4067
      %v4080 = vpack.c.b16 %v4070, %v4069
      %v4081 = vpack.c.b16 %v4072, %v4071
      %v4082 = vpack.c.b16 %v4074, %v4073
      %4091 = vmatprep.subr.bf16.mxu0 0
      %4092 = vmatpush1.bf16.msra.mxu0 %v4075
      %4093 = vmatprep.subr.bf16.mxu0 0
      %4094 = vmatpush1.bf16.msra.mxu0 %v4076
      %4095 = vmatprep.subr.bf16.mxu0 0
      %4096 = vmatpush1.bf16.msra.mxu0 %v4077
      %4097 = vmatprep.subr.bf16.mxu0 0
      %4098 = vmatpush1.bf16.msra.mxu0 %v4078
      %4099 = vmatprep.subr.bf16.mxu0 0
      %4100 = vmatpush1.bf16.msra.mxu0 %v4079
      %4101 = vmatprep.subr.bf16.mxu0 0
      %4102 = vmatpush1.bf16.msra.mxu0 %v4080
      %4103 = vmatprep.subr.bf16.mxu0 0
      %4104 = vmatpush1.bf16.msra.mxu0 %v4081
      %4105 = vmatprep.subr.bf16.mxu0 0
      %4106 = vmatpush1.bf16.msra.mxu0 %v4082
      %4107 = vmatprep.subr.bf16.mxu0 0
      %4108 = vmatpush1.bf16.msra.mxu0 0
      %4109 = vmatprep.subr.bf16.mxu0 0
      %4110 = vmatpush1.bf16.msra.mxu0 0
      %4111 = vmatprep.subr.bf16.mxu0 0
      %4112 = vmatpush1.bf16.msra.mxu0 0
      %4113 = vmatprep.subr.bf16.mxu0 0
      %4114 = vmatpush1.bf16.msra.mxu0 0
      %4115 = vmatprep.subr.bf16.mxu0 0
      %4116 = vmatpush1.bf16.msra.mxu0 0
      %4117 = vmatprep.subr.bf16.mxu0 0
      %4118 = vmatpush1.bf16.msra.mxu0 0
      %4119 = vmatprep.subr.bf16.mxu0 0
      %4120 = vmatpush1.bf16.msra.mxu0 0
      %4121 = vmatprep.subr.bf16.mxu0 0
      %4122 = vmatpush1.bf16.msra.mxu0 0
      %4123 = vmatprep.mubr.bf16.mxu0 0
      %4124 = vmatmul.mubr.bf16.gmra.mrb[0].mxu0 %v4035
      %v4125 = vpop.f32.mrb[0].mxu0
      %v4126 = vadd.f32 0.0, %v4125
      %v4127 = vpop.f32.mrb[0].mxu0
      %v4128 = vpop.f32.mrb[0].mxu0
      %v4129 = vadd.f32 0.0, %v4128
      %v4130 = vpop.f32.mrb[0].mxu0
      %4131 = vmatprep.mubr.bf16.mxu0 0
      %4132 = vmatmul.mubr.bf16.gmra.mrb[0].mxu0 %v4036
      %v4133 = vpop.f32.mrb[0].mxu0
      %v4134 = vadd.f32 0.0, %v4133
      %v4135 = vpop.f32.mrb[0].mxu0
      %v4136 = vpop.f32.mrb[0].mxu0
      %v4137 = vadd.f32 0.0, %v4136
      %v4138 = vpop.f32.mrb[0].mxu0
      %4139 = vmatprep.mubr.bf16.mxu0 0
      %4140 = vmatmul.mubr.bf16.gmra.mrb[0].mxu0 %v4037
      %v4141 = vpop.f32.mrb[0].mxu0
      %v4142 = vadd.f32 0.0, %v4141
      %v4143 = vpop.f32.mrb[0].mxu0
      %v4144 = vpop.f32.mrb[0].mxu0
      %v4145 = vadd.f32 0.0, %v4144
      %v4146 = vpop.f32.mrb[0].mxu0
      %4147 = vmatprep.mubr.bf16.mxu0 0
      %4148 = vmatmul.mubr.bf16.gmra.mrb[0].mxu0 %v4038
      %v4149 = vpop.f32.mrb[0].mxu0
      %v4150 = vadd.f32 0.0, %v4149
      %v4151 = vpop.f32.mrb[0].mxu0
      %v4152 = vpop.f32.mrb[0].mxu0
      %v4153 = vadd.f32 0.0, %v4152
      %v4154 = vpop.f32.mrb[0].mxu0
      %4155 = vdwg.mxu0
      %v4156 = vadd.f32 %v3874, %v4126
      %v4157 = vadd.f32 %v3875, %v4129
      %v4158 = vadd.f32 %v3876, %v4134
      %v4159 = vadd.f32 %v3877, %v4137
      %v4160 = vadd.f32 %v3878, %v4142
      %v4161 = vadd.f32 %v3879, %v4145
      %v4162 = vadd.f32 %v3880, %v4150
      %v4163 = vadd.f32 %v3881, %v4153
      %v4164 = vpack.c.bf16 %v4157, %v4156
      %v4165 = vpack.c.bf16 %v4159, %v4158
      %v4166 = vpack.c.bf16 %v4161, %v4160
      %v4167 = vpack.c.bf16 %v4163, %v4162
      %v4172 = vunpack.c.l.b16 %v4164
      %v4173 = vunpack.c.h.b16 %v4164
      %v4174 = vunpack.c.l.b16 %v4165
      %v4175 = vunpack.c.h.b16 %v4165
      %v4176 = vunpack.c.l.b16 %v4166
      %v4177 = vunpack.c.h.b16 %v4166
      %v4178 = vunpack.c.l.b16 %v4167
      %v4179 = vunpack.c.h.b16 %v4167
      %v4180 = vpack.c.b16 %v4172, %v4172
      %v4181 = vpack.c.b16 %v4173, %v4173
      %v4182 = vpack.c.b16 %v4174, %v4174
      %v4183 = vpack.c.b16 %v4175, %v4175
      %v4184 = vpack.c.b16 %v4176, %v4176
      %v4185 = vpack.c.b16 %v4177, %v4177
      %v4186 = vpack.c.b16 %v4178, %v4178
      %v4187 = vpack.c.b16 %v4179, %v4179
      %s4196 = scalar_lea.vmem %s204, 64
      %4197 = vst [vmem:[%s4196] sm:$0xf] %v4180
      %4198 = vst [vmem:[%s4196 + $0x4] sm:$0xf] %v4181
      %4199 = vst [vmem:[%s4196 + $0x8] sm:$0xf] %v4182
      %4200 = vst [vmem:[%s4196 + $0xc] sm:$0xf] %v4183
      %4201 = vst [vmem:[%s4196 + $0x10] sm:$0xf] %v4184
      %4202 = vst [vmem:[%s4196 + $0x14] sm:$0xf] %v4185
      %4203 = vst [vmem:[%s4196 + $0x18] sm:$0xf] %v4186
      %4204 = vst [vmem:[%s4196 + $0x1c] sm:$0xf] %v4187
      %v4205 = vadd.f32 %v4156, %v4157
      %v4206 = vadd.f32 %v4205, %v4158
      %v4207 = vadd.f32 %v4206, %v4159
      %v4208 = vadd.f32 %v4207, %v4160
      %v4209 = vadd.f32 %v4208, %v4161
      %v4210 = vadd.f32 %v4209, %v4162
      %v4211 = vadd.f32 %v4210, %v4163
      %v4212 = vrot.slane %v4211, 4
      %v4213 = vadd.f32 %v4211, %v4212
      %v4214 = vrot.slane %v4213, 2
      %v4215 = vadd.f32 %v4213, %v4214
      %v4216 = vrot.slane %v4215, 1
      %v4217 = vadd.f32 %v4215, %v4216
      %v4218 = vadd.f32 %v3260, %v4217
      %v4219 = vmul.f32 %v4156, %v4156
      %v4220 = vmul.f32 %v4157, %v4157
      %v4221 = vmul.f32 %v4158, %v4158
      %v4222 = vmul.f32 %v4159, %v4159
      %v4223 = vmul.f32 %v4160, %v4160
      %v4224 = vmul.f32 %v4161, %v4161
      %v4225 = vmul.f32 %v4162, %v4162
      %v4226 = vmul.f32 %v4163, %v4163
      %v4227 = vadd.f32 %v4219, %v4220
      %v4228 = vadd.f32 %v4227, %v4221
      %v4229 = vadd.f32 %v4228, %v4222
      %v4230 = vadd.f32 %v4229, %v4223
      %v4231 = vadd.f32 %v4230, %v4224
      %v4232 = vadd.f32 %v4231, %v4225
      %v4233 = vadd.f32 %v4232, %v4226
      %v4234 = vrot.slane %v4233, 4
      %v4235 = vadd.f32 %v4233, %v4234
      %v4236 = vrot.slane %v4235, 2
      %v4237 = vadd.f32 %v4235, %v4236
      %v4238 = vrot.slane %v4237, 1
      %v4239 = vadd.f32 %v4237, %v4238
      %v4240 = vadd.f32 %v3282, %v4239
      %v4241 = vld [vmem:[%s1225] sm:$0xf]
      %v4242 = vld [vmem:[%s1225 + $0x4] sm:$0x1]
      %v4243 = vld [vmem:[%s1225 + $0x8] sm:$0xf]
      %v4244 = vld [vmem:[%s1225 + $0xc] sm:$0x1]
      %v4245 = vld [vmem:[%s1225 + $0x10] sm:$0xf]
      %v4246 = vld [vmem:[%s1225 + $0x14] sm:$0x1]
      %v4247 = vld [vmem:[%s1225 + $0x18] sm:$0xf]
      %v4248 = vld [vmem:[%s1225 + $0x1c] sm:$0x1]
      %v4249 = vld [vmem:[%s1225 + $0x20] sm:$0xf]
      %v4250 = vld [vmem:[%s1225 + $0x24] sm:$0x1]
      %v4251 = vld [vmem:[%s1225 + $0x28] sm:$0xf]
      %v4252 = vld [vmem:[%s1225 + $0x2c] sm:$0x1]
      %v4253 = vld [vmem:[%s1225 + $0x30] sm:$0xf]
      %v4254 = vld [vmem:[%s1225 + $0x34] sm:$0x1]
      %v4255 = vld [vmem:[%s1225 + $0x38] sm:$0xf]
      %v4256 = vld [vmem:[%s1225 + $0x3c] sm:$0x1]
      %v4258 = vshrl.u32 %v4241, 16
      %v4260 = vrot.slane %v4258, 4
      %v4261 = vshll.u32 %v4241, 16
      %v4263 = vrot.slane %v4261, 5
      %v4264 = vor.u32 %v4260, %v4263
      %v4265 = vrot.slane %v4264, 4
      %v4267 = vshll.u32 %v4242, 16
      %v4269 = vrot.slane %v4267, 5
      %v4270 = vsel %vm244, %v4265, %v4269
      %v4272 = vshrl.u32 %v4243, 16
      %v4274 = vrot.slane %v4272, 4
      %v4275 = vshll.u32 %v4243, 16
      %v4277 = vrot.slane %v4275, 5
      %v4278 = vor.u32 %v4274, %v4277
      %v4279 = vrot.slane %v4278, 4
      %v4281 = vshll.u32 %v4244, 16
      %v4283 = vrot.slane %v4281, 5
      %v4284 = vsel %vm244, %v4279, %v4283
      %v4286 = vshrl.u32 %v4245, 16
      %v4288 = vrot.slane %v4286, 4
      %v4289 = vshll.u32 %v4245, 16
      %v4291 = vrot.slane %v4289, 5
      %v4292 = vor.u32 %v4288, %v4291
      %v4293 = vrot.slane %v4292, 4
      %v4295 = vshll.u32 %v4246, 16
      %v4297 = vrot.slane %v4295, 5
      %v4298 = vsel %vm244, %v4293, %v4297
      %v4300 = vshrl.u32 %v4247, 16
      %v4302 = vrot.slane %v4300, 4
      %v4303 = vshll.u32 %v4247, 16
      %v4305 = vrot.slane %v4303, 5
      %v4306 = vor.u32 %v4302, %v4305
      %v4307 = vrot.slane %v4306, 4
      %v4309 = vshll.u32 %v4248, 16
      %v4311 = vrot.slane %v4309, 5
      %v4312 = vsel %vm244, %v4307, %v4311
      %v4314 = vshrl.u32 %v4249, 16
      %v4316 = vrot.slane %v4314, 4
      %v4317 = vshll.u32 %v4249, 16
      %v4319 = vrot.slane %v4317, 5
      %v4320 = vor.u32 %v4316, %v4319
      %v4321 = vrot.slane %v4320, 4
      %v4323 = vshll.u32 %v4250, 16
      %v4325 = vrot.slane %v4323, 5
      %v4326 = vsel %vm244, %v4321, %v4325
      %v4328 = vshrl.u32 %v4251, 16
      %v4330 = vrot.slane %v4328, 4
      %v4331 = vshll.u32 %v4251, 16
      %v4333 = vrot.slane %v4331, 5
      %v4334 = vor.u32 %v4330, %v4333
      %v4335 = vrot.slane %v4334, 4
      %v4337 = vshll.u32 %v4252, 16
      %v4339 = vrot.slane %v4337, 5
      %v4340 = vsel %vm244, %v4335, %v4339
      %v4342 = vshrl.u32 %v4253, 16
      %v4344 = vrot.slane %v4342, 4
      %v4345 = vshll.u32 %v4253, 16
      %v4347 = vrot.slane %v4345, 5
      %v4348 = vor.u32 %v4344, %v4347
      %v4349 = vrot.slane %v4348, 4
      %v4351 = vshll.u32 %v4254, 16
      %v4353 = vrot.slane %v4351, 5
      %v4354 = vsel %vm244, %v4349, %v4353
      %v4356 = vshrl.u32 %v4255, 16
      %v4358 = vrot.slane %v4356, 4
      %v4359 = vshll.u32 %v4255, 16
      %v4361 = vrot.slane %v4359, 5
      %v4362 = vor.u32 %v4358, %v4361
      %v4363 = vrot.slane %v4362, 4
      %v4365 = vshll.u32 %v4256, 16
      %v4367 = vrot.slane %v4365, 5
      %v4368 = vsel %vm244, %v4363, %v4367
      %s4369 = scalar_lea.vmem %s2, 768
      %v4370 = vld [vmem:[%s4369] sm:$0xf]
      %v4371 = vld [vmem:[%s4369 + $0x4] sm:$0xf]
      %v4372 = vld [vmem:[%s4369 + $0x8] sm:$0xf]
      %v4373 = vld [vmem:[%s4369 + $0xc] sm:$0xf]
      %v4374 = vld [vmem:[%s4369 + $0x10] sm:$0xf]
      %v4375 = vld [vmem:[%s4369 + $0x14] sm:$0xf]
      %v4376 = vld [vmem:[%s4369 + $0x18] sm:$0xf]
      %v4377 = vld [vmem:[%s4369 + $0x1c] sm:$0xf]
      %v4378 = vld [vmem:[%s4369 + $0x20] sm:$0xf]
      %v4379 = vld [vmem:[%s4369 + $0x24] sm:$0xf]
      %v4380 = vld [vmem:[%s4369 + $0x28] sm:$0xf]
      %v4381 = vld [vmem:[%s4369 + $0x2c] sm:$0xf]
      %v4382 = vld [vmem:[%s4369 + $0x30] sm:$0xf]
      %v4383 = vld [vmem:[%s4369 + $0x34] sm:$0xf]
      %v4384 = vld [vmem:[%s4369 + $0x38] sm:$0xf]
      %v4385 = vld [vmem:[%s4369 + $0x3c] sm:$0xf]
      %v4386 = vld [vmem:[%s1225] sm:$0xe]
      %v4387 = vld [vmem:[%s1225 + $0x8] sm:$0xe]
      %v4388 = vld [vmem:[%s1225 + $0x10] sm:$0xe]
      %v4389 = vld [vmem:[%s1225 + $0x18] sm:$0xe]
      %v4390 = vld [vmem:[%s1225 + $0x20] sm:$0xe]
      %v4391 = vld [vmem:[%s1225 + $0x28] sm:$0xe]
      %v4392 = vld [vmem:[%s1225 + $0x30] sm:$0xe]
      %v4393 = vld [vmem:[%s1225 + $0x38] sm:$0xe]
      %v4410 = vrot.slane %v4386, 5
      %v4411 = vrot.slane %v4410, 4
      %v4412 = vrot.slane %v4242, 5
      %v4413 = vsel %vm2406, %v4411, %v4412
      %v4414 = vrot.slane %v4387, 5
      %v4415 = vrot.slane %v4414, 4
      %v4416 = vrot.slane %v4244, 5
      %v4417 = vsel %vm2406, %v4415, %v4416
      %v4418 = vrot.slane %v4388, 5
      %v4419 = vrot.slane %v4418, 4
      %v4420 = vrot.slane %v4246, 5
      %v4421 = vsel %vm2406, %v4419, %v4420
      %v4422 = vrot.slane %v4389, 5
      %v4423 = vrot.slane %v4422, 4
      %v4424 = vrot.slane %v4248, 5
      %v4425 = vsel %vm2406, %v4423, %v4424
      %v4426 = vrot.slane %v4390, 5
      %v4427 = vrot.slane %v4426, 4
      %v4428 = vrot.slane %v4250, 5
      %v4429 = vsel %vm2406, %v4427, %v4428
      %v4430 = vrot.slane %v4391, 5
      %v4431 = vrot.slane %v4430, 4
      %v4432 = vrot.slane %v4252, 5
      %v4433 = vsel %vm2406, %v4431, %v4432
      %v4434 = vrot.slane %v4392, 5
      %v4435 = vrot.slane %v4434, 4
      %v4436 = vrot.slane %v4254, 5
      %v4437 = vsel %vm2406, %v4435, %v4436
      %v4438 = vrot.slane %v4393, 5
      %v4439 = vrot.slane %v4438, 4
      %v4440 = vrot.slane %v4256, 5
      %v4441 = vsel %vm2406, %v4439, %v4440
      %s4442 = scalar_lea.vmem %s2, 832
      %v4443 = vld [vmem:[%s4442] sm:$0xf]
      %v4444 = vld [vmem:[%s4442 + $0x4] sm:$0xf]
      %v4445 = vld [vmem:[%s4442 + $0x8] sm:$0xf]
      %v4446 = vld [vmem:[%s4442 + $0xc] sm:$0xf]
      %v4447 = vld [vmem:[%s4442 + $0x10] sm:$0xf]
      %v4448 = vld [vmem:[%s4442 + $0x14] sm:$0xf]
      %v4449 = vld [vmem:[%s4442 + $0x18] sm:$0xf]
      %v4450 = vld [vmem:[%s4442 + $0x1c] sm:$0xf]
      %v4451 = vld [vmem:[%s4442 + $0x20] sm:$0xf]
      %v4452 = vld [vmem:[%s4442 + $0x24] sm:$0xf]
      %v4453 = vld [vmem:[%s4442 + $0x28] sm:$0xf]
      %v4454 = vld [vmem:[%s4442 + $0x2c] sm:$0xf]
      %v4455 = vld [vmem:[%s4442 + $0x30] sm:$0xf]
      %v4456 = vld [vmem:[%s4442 + $0x34] sm:$0xf]
      %v4457 = vld [vmem:[%s4442 + $0x38] sm:$0xf]
      %v4458 = vld [vmem:[%s4442 + $0x3c] sm:$0xf]
      %v4459 = vunpack.c.l.b16 %v4413
      %v4460 = vunpack.c.l.b16 %v4417
      %v4461 = vunpack.c.l.b16 %v4421
      %v4462 = vunpack.c.l.b16 %v4425
      %v4463 = vunpack.c.l.b16 %v4429
      %v4464 = vunpack.c.l.b16 %v4433
      %v4465 = vunpack.c.l.b16 %v4437
      %v4466 = vunpack.c.l.b16 %v4441
      %v4467 = vpack.c.b16 %v4460, %v4459
      %v4468 = vpack.c.b16 %v4462, %v4461
      %v4469 = vpack.c.b16 %v4464, %v4463
      %v4470 = vpack.c.b16 %v4466, %v4465
      %v4491 = vunpack.c.l.b16 %v4443
      %v4492 = vunpack.c.l.b16 %v4444
      %v4493 = vunpack.c.l.b16 %v4445
      %v4494 = vunpack.c.l.b16 %v4446
      %v4495 = vunpack.c.l.b16 %v4447
      %v4496 = vunpack.c.l.b16 %v4448
      %v4497 = vunpack.c.l.b16 %v4449
      %v4498 = vunpack.c.l.b16 %v4450
      %v4499 = vunpack.c.l.b16 %v4451
      %v4500 = vunpack.c.l.b16 %v4452
      %v4501 = vunpack.c.l.b16 %v4453
      %v4502 = vunpack.c.l.b16 %v4454
      %v4503 = vunpack.c.l.b16 %v4455
      %v4504 = vunpack.c.l.b16 %v4456
      %v4505 = vunpack.c.l.b16 %v4457
      %v4506 = vunpack.c.l.b16 %v4458
      %v4507 = vpack.c.b16 %v4492, %v4491
      %v4508 = vpack.c.b16 %v4494, %v4493
      %v4509 = vpack.c.b16 %v4496, %v4495
      %v4510 = vpack.c.b16 %v4498, %v4497
      %v4511 = vpack.c.b16 %v4500, %v4499
      %v4512 = vpack.c.b16 %v4502, %v4501
      %v4513 = vpack.c.b16 %v4504, %v4503
      %v4514 = vpack.c.b16 %v4506, %v4505
      %4523 = vmatprep.subr.bf16.mxu0 0
      %4524 = vmatpush1.bf16.msra.mxu0 %v4507
      %4525 = vmatprep.subr.bf16.mxu0 0
      %4526 = vmatpush1.bf16.msra.mxu0 %v4508
      %4527 = vmatprep.subr.bf16.mxu0 0
      %4528 = vmatpush1.bf16.msra.mxu0 %v4509
      %4529 = vmatprep.subr.bf16.mxu0 0
      %4530 = vmatpush1.bf16.msra.mxu0 %v4510
      %4531 = vmatprep.subr.bf16.mxu0 0
      %4532 = vmatpush1.bf16.msra.mxu0 %v4511
      %4533 = vmatprep.subr.bf16.mxu0 0
      %4534 = vmatpush1.bf16.msra.mxu0 %v4512
      %4535 = vmatprep.subr.bf16.mxu0 0
      %4536 = vmatpush1.bf16.msra.mxu0 %v4513
      %4537 = vmatprep.subr.bf16.mxu0 0
      %4538 = vmatpush1.bf16.msra.mxu0 %v4514
      %4539 = vmatprep.subr.bf16.mxu0 0
      %4540 = vmatpush1.bf16.msra.mxu0 0
      %4541 = vmatprep.subr.bf16.mxu0 0
      %4542 = vmatpush1.bf16.msra.mxu0 0
      %4543 = vmatprep.subr.bf16.mxu0 0
      %4544 = vmatpush1.bf16.msra.mxu0 0
      %4545 = vmatprep.subr.bf16.mxu0 0
      %4546 = vmatpush1.bf16.msra.mxu0 0
      %4547 = vmatprep.subr.bf16.mxu0 0
      %4548 = vmatpush1.bf16.msra.mxu0 0
      %4549 = vmatprep.subr.bf16.mxu0 0
      %4550 = vmatpush1.bf16.msra.mxu0 0
      %4551 = vmatprep.subr.bf16.mxu0 0
      %4552 = vmatpush1.bf16.msra.mxu0 0
      %4553 = vmatprep.subr.bf16.mxu0 0
      %4554 = vmatpush1.bf16.msra.mxu0 0
      %4555 = vmatprep.mubr.bf16.mxu0 0
      %4556 = vmatmul.mubr.bf16.gmra.mrb[0].mxu0 %v4467
      %v4557 = vpop.f32.mrb[0].mxu0
      %v4558 = vadd.f32 0.0, %v4557
      %v4559 = vpop.f32.mrb[0].mxu0
      %v4560 = vpop.f32.mrb[0].mxu0
      %v4561 = vadd.f32 0.0, %v4560
      %v4562 = vpop.f32.mrb[0].mxu0
      %4563 = vmatprep.mubr.bf16.mxu0 0
      %4564 = vmatmul.mubr.bf16.gmra.mrb[0].mxu0 %v4468
      %v4565 = vpop.f32.mrb[0].mxu0
      %v4566 = vadd.f32 0.0, %v4565
      %v4567 = vpop.f32.mrb[0].mxu0
      %v4568 = vpop.f32.mrb[0].mxu0
      %v4569 = vadd.f32 0.0, %v4568
      %v4570 = vpop.f32.mrb[0].mxu0
      %4571 = vmatprep.mubr.bf16.mxu0 0
      %4572 = vmatmul.mubr.bf16.gmra.mrb[0].mxu0 %v4469
      %v4573 = vpop.f32.mrb[0].mxu0
      %v4574 = vadd.f32 0.0, %v4573
      %v4575 = vpop.f32.mrb[0].mxu0
      %v4576 = vpop.f32.mrb[0].mxu0
      %v4577 = vadd.f32 0.0, %v4576
      %v4578 = vpop.f32.mrb[0].mxu0
      %4579 = vmatprep.mubr.bf16.mxu0 0
      %4580 = vmatmul.mubr.bf16.gmra.mrb[0].mxu0 %v4470
      %v4581 = vpop.f32.mrb[0].mxu0
      %v4582 = vadd.f32 0.0, %v4581
      %v4583 = vpop.f32.mrb[0].mxu0
      %v4584 = vpop.f32.mrb[0].mxu0
      %v4585 = vadd.f32 0.0, %v4584
      %v4586 = vpop.f32.mrb[0].mxu0
      %4587 = vdwg.mxu0
      %v4588 = vunpack.c.l.b16 %v4270
      %v4589 = vunpack.c.l.b16 %v4284
      %v4590 = vunpack.c.l.b16 %v4298
      %v4591 = vunpack.c.l.b16 %v4312
      %v4592 = vunpack.c.l.b16 %v4326
      %v4593 = vunpack.c.l.b16 %v4340
      %v4594 = vunpack.c.l.b16 %v4354
      %v4595 = vunpack.c.l.b16 %v4368
      %v4596 = vpack.c.b16 %v4589, %v4588
      %v4597 = vpack.c.b16 %v4591, %v4590
      %v4598 = vpack.c.b16 %v4593, %v4592
      %v4599 = vpack.c.b16 %v4595, %v4594
      %v4620 = vunpack.c.l.b16 %v4370
      %v4621 = vunpack.c.l.b16 %v4371
      %v4622 = vunpack.c.l.b16 %v4372
      %v4623 = vunpack.c.l.b16 %v4373
      %v4624 = vunpack.c.l.b16 %v4374
      %v4625 = vunpack.c.l.b16 %v4375
      %v4626 = vunpack.c.l.b16 %v4376
      %v4627 = vunpack.c.l.b16 %v4377
      %v4628 = vunpack.c.l.b16 %v4378
      %v4629 = vunpack.c.l.b16 %v4379
      %v4630 = vunpack.c.l.b16 %v4380
      %v4631 = vunpack.c.l.b16 %v4381
      %v4632 = vunpack.c.l.b16 %v4382
      %v4633 = vunpack.c.l.b16 %v4383
      %v4634 = vunpack.c.l.b16 %v4384
      %v4635 = vunpack.c.l.b16 %v4385
      %v4636 = vpack.c.b16 %v4621, %v4620
      %v4637 = vpack.c.b16 %v4623, %v4622
      %v4638 = vpack.c.b16 %v4625, %v4624
      %v4639 = vpack.c.b16 %v4627, %v4626
      %v4640 = vpack.c.b16 %v4629, %v4628
      %v4641 = vpack.c.b16 %v4631, %v4630
      %v4642 = vpack.c.b16 %v4633, %v4632
      %v4643 = vpack.c.b16 %v4635, %v4634
      %4652 = vmatprep.subr.bf16.mxu0 0
      %4653 = vmatpush1.bf16.msra.mxu0 %v4636
      %4654 = vmatprep.subr.bf16.mxu0 0
      %4655 = vmatpush1.bf16.msra.mxu0 %v4637
      %4656 = vmatprep.subr.bf16.mxu0 0
      %4657 = vmatpush1.bf16.msra.mxu0 %v4638
      %4658 = vmatprep.subr.bf16.mxu0 0
      %4659 = vmatpush1.bf16.msra.mxu0 %v4639
      %4660 = vmatprep.subr.bf16.mxu0 0
      %4661 = vmatpush1.bf16.msra.mxu0 %v4640
      %4662 = vmatprep.subr.bf16.mxu0 0
      %4663 = vmatpush1.bf16.msra.mxu0 %v4641
      %4664 = vmatprep.subr.bf16.mxu0 0
      %4665 = vmatpush1.bf16.msra.mxu0 %v4642
      %4666 = vmatprep.subr.bf16.mxu0 0
      %4667 = vmatpush1.bf16.msra.mxu0 %v4643
      %4668 = vmatprep.subr.bf16.mxu0 0
      %4669 = vmatpush1.bf16.msra.mxu0 0
      %4670 = vmatprep.subr.bf16.mxu0 0
      %4671 = vmatpush1.bf16.msra.mxu0 0
      %4672 = vmatprep.subr.bf16.mxu0 0
      %4673 = vmatpush1.bf16.msra.mxu0 0
      %4674 = vmatprep.subr.bf16.mxu0 0
      %4675 = vmatpush1.bf16.msra.mxu0 0
      %4676 = vmatprep.subr.bf16.mxu0 0
      %4677 = vmatpush1.bf16.msra.mxu0 0
      %4678 = vmatprep.subr.bf16.mxu0 0
      %4679 = vmatpush1.bf16.msra.mxu0 0
      %4680 = vmatprep.subr.bf16.mxu0 0
      %4681 = vmatpush1.bf16.msra.mxu0 0
      %4682 = vmatprep.subr.bf16.mxu0 0
      %4683 = vmatpush1.bf16.msra.mxu0 0
      %4684 = vmatprep.mubr.bf16.mxu0 0
      %4685 = vmatmul.mubr.bf16.gmra.mrb[0].mxu0 %v4596
      %v4686 = vpop.f32.mrb[0].mxu0
      %v4687 = vadd.f32 %v4558, %v4686
      %v4688 = vpop.f32.mrb[0].mxu0
      %v4689 = vpop.f32.mrb[0].mxu0
      %v4690 = vadd.f32 %v4561, %v4689
      %v4691 = vpop.f32.mrb[0].mxu0
      %4692 = vmatprep.mubr.bf16.mxu0 0
      %4693 = vmatmul.mubr.bf16.gmra.mrb[0].mxu0 %v4597
      %v4694 = vpop.f32.mrb[0].mxu0
      %v4695 = vadd.f32 %v4566, %v4694
      %v4696 = vpop.f32.mrb[0].mxu0
      %v4697 = vpop.f32.mrb[0].mxu0
      %v4698 = vadd.f32 %v4569, %v4697
      %v4699 = vpop.f32.mrb[0].mxu0
      %4700 = vmatprep.mubr.bf16.mxu0 0
      %4701 = vmatmul.mubr.bf16.gmra.mrb[0].mxu0 %v4598
      %v4702 = vpop.f32.mrb[0].mxu0
      %v4703 = vadd.f32 %v4574, %v4702
      %v4704 = vpop.f32.mrb[0].mxu0
      %v4705 = vpop.f32.mrb[0].mxu0
      %v4706 = vadd.f32 %v4577, %v4705
      %v4707 = vpop.f32.mrb[0].mxu0
      %4708 = vmatprep.mubr.bf16.mxu0 0
      %4709 = vmatmul.mubr.bf16.gmra.mrb[0].mxu0 %v4599
      %v4710 = vpop.f32.mrb[0].mxu0
      %v4711 = vadd.f32 %v4582, %v4710
      %v4712 = vpop.f32.mrb[0].mxu0
      %v4713 = vpop.f32.mrb[0].mxu0
      %v4714 = vadd.f32 %v4585, %v4713
      %v4715 = vpop.f32.mrb[0].mxu0
      %4716 = vdwg.mxu0
      %v4717 = vld [vmem:[%s3711] sm:$0xf]
      %v4718 = vld [vmem:[%s3711 + $0x4] sm:$0x1]
      %v4719 = vld [vmem:[%s3711 + $0x8] sm:$0xf]
      %v4720 = vld [vmem:[%s3711 + $0xc] sm:$0x1]
      %v4721 = vld [vmem:[%s3711 + $0x10] sm:$0xf]
      %v4722 = vld [vmem:[%s3711 + $0x14] sm:$0x1]
      %v4723 = vld [vmem:[%s3711 + $0x18] sm:$0xf]
      %v4724 = vld [vmem:[%s3711 + $0x1c] sm:$0x1]
      %v4725 = vld [vmem:[%s3711 + $0x20] sm:$0xf]
      %v4726 = vld [vmem:[%s3711 + $0x24] sm:$0x1]
      %v4727 = vld [vmem:[%s3711 + $0x28] sm:$0xf]
      %v4728 = vld [vmem:[%s3711 + $0x2c] sm:$0x1]
      %v4729 = vld [vmem:[%s3711 + $0x30] sm:$0xf]
      %v4730 = vld [vmem:[%s3711 + $0x34] sm:$0x1]
      %v4731 = vld [vmem:[%s3711 + $0x38] sm:$0xf]
      %v4732 = vld [vmem:[%s3711 + $0x3c] sm:$0x1]
      %v4734 = vshrl.u32 %v4717, 16
      %v4736 = vrot.slane %v4734, 4
      %v4737 = vshll.u32 %v4717, 16
      %v4739 = vrot.slane %v4737, 5
      %v4740 = vor.u32 %v4736, %v4739
      %v4741 = vrot.slane %v4740, 4
      %v4743 = vshll.u32 %v4718, 16
      %v4745 = vrot.slane %v4743, 5
      %v4746 = vsel %vm244, %v4741, %v4745
      %v4748 = vshrl.u32 %v4719, 16
      %v4750 = vrot.slane %v4748, 4
      %v4751 = vshll.u32 %v4719, 16
      %v4753 = vrot.slane %v4751, 5
      %v4754 = vor.u32 %v4750, %v4753
      %v4755 = vrot.slane %v4754, 4
      %v4757 = vshll.u32 %v4720, 16
      %v4759 = vrot.slane %v4757, 5
      %v4760 = vsel %vm244, %v4755, %v4759
      %v4762 = vshrl.u32 %v4721, 16
      %v4764 = vrot.slane %v4762, 4
      %v4765 = vshll.u32 %v4721, 16
      %v4767 = vrot.slane %v4765, 5
      %v4768 = vor.u32 %v4764, %v4767
      %v4769 = vrot.slane %v4768, 4
      %v4771 = vshll.u32 %v4722, 16
      %v4773 = vrot.slane %v4771, 5
      %v4774 = vsel %vm244, %v4769, %v4773
      %v4776 = vshrl.u32 %v4723, 16
      %v4778 = vrot.slane %v4776, 4
      %v4779 = vshll.u32 %v4723, 16
      %v4781 = vrot.slane %v4779, 5
      %v4782 = vor.u32 %v4778, %v4781
      %v4783 = vrot.slane %v4782, 4
      %v4785 = vshll.u32 %v4724, 16
      %v4787 = vrot.slane %v4785, 5
      %v4788 = vsel %vm244, %v4783, %v4787
      %v4790 = vshrl.u32 %v4725, 16
      %v4792 = vrot.slane %v4790, 4
      %v4793 = vshll.u32 %v4725, 16
      %v4795 = vrot.slane %v4793, 5
      %v4796 = vor.u32 %v4792, %v4795
      %v4797 = vrot.slane %v4796, 4
      %v4799 = vshll.u32 %v4726, 16
      %v4801 = vrot.slane %v4799, 5
      %v4802 = vsel %vm244, %v4797, %v4801
      %v4804 = vshrl.u32 %v4727, 16
      %v4806 = vrot.slane %v4804, 4
      %v4807 = vshll.u32 %v4727, 16
      %v4809 = vrot.slane %v4807, 5
      %v4810 = vor.u32 %v4806, %v4809
      %v4811 = vrot.slane %v4810, 4
      %v4813 = vshll.u32 %v4728, 16
      %v4815 = vrot.slane %v4813, 5
      %v4816 = vsel %vm244, %v4811, %v4815
      %v4818 = vshrl.u32 %v4729, 16
      %v4820 = vrot.slane %v4818, 4
      %v4821 = vshll.u32 %v4729, 16
      %v4823 = vrot.slane %v4821, 5
      %v4824 = vor.u32 %v4820, %v4823
      %v4825 = vrot.slane %v4824, 4
      %v4827 = vshll.u32 %v4730, 16
      %v4829 = vrot.slane %v4827, 5
      %v4830 = vsel %vm244, %v4825, %v4829
      %v4832 = vshrl.u32 %v4731, 16
      %v4834 = vrot.slane %v4832, 4
      %v4835 = vshll.u32 %v4731, 16
      %v4837 = vrot.slane %v4835, 5
      %v4838 = vor.u32 %v4834, %v4837
      %v4839 = vrot.slane %v4838, 4
      %v4841 = vshll.u32 %v4732, 16
      %v4843 = vrot.slane %v4841, 5
      %v4844 = vsel %vm244, %v4839, %v4843
      %s4845 = scalar_lea.vmem %s2, 896
      %v4846 = vld [vmem:[%s4845] sm:$0xf]
      %v4847 = vld [vmem:[%s4845 + $0x4] sm:$0xf]
      %v4848 = vld [vmem:[%s4845 + $0x8] sm:$0xf]
      %v4849 = vld [vmem:[%s4845 + $0xc] sm:$0xf]
      %v4850 = vld [vmem:[%s4845 + $0x10] sm:$0xf]
      %v4851 = vld [vmem:[%s4845 + $0x14] sm:$0xf]
      %v4852 = vld [vmem:[%s4845 + $0x18] sm:$0xf]
      %v4853 = vld [vmem:[%s4845 + $0x1c] sm:$0xf]
      %v4854 = vld [vmem:[%s4845 + $0x20] sm:$0xf]
      %v4855 = vld [vmem:[%s4845 + $0x24] sm:$0xf]
      %v4856 = vld [vmem:[%s4845 + $0x28] sm:$0xf]
      %v4857 = vld [vmem:[%s4845 + $0x2c] sm:$0xf]
      %v4858 = vld [vmem:[%s4845 + $0x30] sm:$0xf]
      %v4859 = vld [vmem:[%s4845 + $0x34] sm:$0xf]
      %v4860 = vld [vmem:[%s4845 + $0x38] sm:$0xf]
      %v4861 = vld [vmem:[%s4845 + $0x3c] sm:$0xf]
      %v4862 = vunpack.c.l.b16 %v4746
      %v4863 = vunpack.c.l.b16 %v4760
      %v4864 = vunpack.c.l.b16 %v4774
      %v4865 = vunpack.c.l.b16 %v4788
      %v4866 = vunpack.c.l.b16 %v4802
      %v4867 = vunpack.c.l.b16 %v4816
      %v4868 = vunpack.c.l.b16 %v4830
      %v4869 = vunpack.c.l.b16 %v4844
      %v4870 = vpack.c.b16 %v4863, %v4862
      %v4871 = vpack.c.b16 %v4865, %v4864
      %v4872 = vpack.c.b16 %v4867, %v4866
      %v4873 = vpack.c.b16 %v4869, %v4868
      %v4894 = vunpack.c.l.b16 %v4846
      %v4895 = vunpack.c.l.b16 %v4847
      %v4896 = vunpack.c.l.b16 %v4848
      %v4897 = vunpack.c.l.b16 %v4849
      %v4898 = vunpack.c.l.b16 %v4850
      %v4899 = vunpack.c.l.b16 %v4851
      %v4900 = vunpack.c.l.b16 %v4852
      %v4901 = vunpack.c.l.b16 %v4853
      %v4902 = vunpack.c.l.b16 %v4854
      %v4903 = vunpack.c.l.b16 %v4855
      %v4904 = vunpack.c.l.b16 %v4856
      %v4905 = vunpack.c.l.b16 %v4857
      %v4906 = vunpack.c.l.b16 %v4858
      %v4907 = vunpack.c.l.b16 %v4859
      %v4908 = vunpack.c.l.b16 %v4860
      %v4909 = vunpack.c.l.b16 %v4861
      %v4910 = vpack.c.b16 %v4895, %v4894
      %v4911 = vpack.c.b16 %v4897, %v4896
      %v4912 = vpack.c.b16 %v4899, %v4898
      %v4913 = vpack.c.b16 %v4901, %v4900
      %v4914 = vpack.c.b16 %v4903, %v4902
      %v4915 = vpack.c.b16 %v4905, %v4904
      %v4916 = vpack.c.b16 %v4907, %v4906
      %v4917 = vpack.c.b16 %v4909, %v4908
      %4926 = vmatprep.subr.bf16.mxu0 0
      %4927 = vmatpush1.bf16.msra.mxu0 %v4910
      %4928 = vmatprep.subr.bf16.mxu0 0
      %4929 = vmatpush1.bf16.msra.mxu0 %v4911
      %4930 = vmatprep.subr.bf16.mxu0 0
      %4931 = vmatpush1.bf16.msra.mxu0 %v4912
      %4932 = vmatprep.subr.bf16.mxu0 0
      %4933 = vmatpush1.bf16.msra.mxu0 %v4913
      %4934 = vmatprep.subr.bf16.mxu0 0
      %4935 = vmatpush1.bf16.msra.mxu0 %v4914
      %4936 = vmatprep.subr.bf16.mxu0 0
      %4937 = vmatpush1.bf16.msra.mxu0 %v4915
      %4938 = vmatprep.subr.bf16.mxu0 0
      %4939 = vmatpush1.bf16.msra.mxu0 %v4916
      %4940 = vmatprep.subr.bf16.mxu0 0
      %4941 = vmatpush1.bf16.msra.mxu0 %v4917
      %4942 = vmatprep.subr.bf16.mxu0 0
      %4943 = vmatpush1.bf16.msra.mxu0 0
      %4944 = vmatprep.subr.bf16.mxu0 0
      %4945 = vmatpush1.bf16.msra.mxu0 0
      %4946 = vmatprep.subr.bf16.mxu0 0
      %4947 = vmatpush1.bf16.msra.mxu0 0
      %4948 = vmatprep.subr.bf16.mxu0 0
      %4949 = vmatpush1.bf16.msra.mxu0 0
      %4950 = vmatprep.subr.bf16.mxu0 0
      %4951 = vmatpush1.bf16.msra.mxu0 0
      %4952 = vmatprep.subr.bf16.mxu0 0
      %4953 = vmatpush1.bf16.msra.mxu0 0
      %4954 = vmatprep.subr.bf16.mxu0 0
      %4955 = vmatpush1.bf16.msra.mxu0 0
      %4956 = vmatprep.subr.bf16.mxu0 0
      %4957 = vmatpush1.bf16.msra.mxu0 0
      %4958 = vmatprep.mubr.bf16.mxu0 0
      %4959 = vmatmul.mubr.bf16.gmra.mrb[0].mxu0 %v4870
      %v4960 = vpop.f32.mrb[0].mxu0
      %v4961 = vadd.f32 0.0, %v4960
      %v4962 = vpop.f32.mrb[0].mxu0
      %v4963 = vpop.f32.mrb[0].mxu0
      %v4964 = vadd.f32 0.0, %v4963
      %v4965 = vpop.f32.mrb[0].mxu0
      %4966 = vmatprep.mubr.bf16.mxu0 0
      %4967 = vmatmul.mubr.bf16.gmra.mrb[0].mxu0 %v4871
      %v4968 = vpop.f32.mrb[0].mxu0
      %v4969 = vadd.f32 0.0, %v4968
      %v4970 = vpop.f32.mrb[0].mxu0
      %v4971 = vpop.f32.mrb[0].mxu0
      %v4972 = vadd.f32 0.0, %v4971
      %v4973 = vpop.f32.mrb[0].mxu0
      %4974 = vmatprep.mubr.bf16.mxu0 0
      %4975 = vmatmul.mubr.bf16.gmra.mrb[0].mxu0 %v4872
      %v4976 = vpop.f32.mrb[0].mxu0
      %v4977 = vadd.f32 0.0, %v4976
      %v4978 = vpop.f32.mrb[0].mxu0
      %v4979 = vpop.f32.mrb[0].mxu0
      %v4980 = vadd.f32 0.0, %v4979
      %v4981 = vpop.f32.mrb[0].mxu0
      %4982 = vmatprep.mubr.bf16.mxu0 0
      %4983 = vmatmul.mubr.bf16.gmra.mrb[0].mxu0 %v4873
      %v4984 = vpop.f32.mrb[0].mxu0
      %v4985 = vadd.f32 0.0, %v4984
      %v4986 = vpop.f32.mrb[0].mxu0
      %v4987 = vpop.f32.mrb[0].mxu0
      %v4988 = vadd.f32 0.0, %v4987
      %v4989 = vpop.f32.mrb[0].mxu0
      %4990 = vdwg.mxu0
      %v4991 = vadd.f32 %v4687, %v4961
      %v4992 = vadd.f32 %v4690, %v4964
      %v4993 = vadd.f32 %v4695, %v4969
      %v4994 = vadd.f32 %v4698, %v4972
      %v4995 = vadd.f32 %v4703, %v4977
      %v4996 = vadd.f32 %v4706, %v4980
      %v4997 = vadd.f32 %v4711, %v4985
      %v4998 = vadd.f32 %v4714, %v4988
      %v4999 = vld [vmem:[%s3711] sm:$0xe]
      %v5000 = vld [vmem:[%s3711 + $0x8] sm:$0xe]
      %v5001 = vld [vmem:[%s3711 + $0x10] sm:$0xe]
      %v5002 = vld [vmem:[%s3711 + $0x18] sm:$0xe]
      %v5003 = vld [vmem:[%s3711 + $0x20] sm:$0xe]
      %v5004 = vld [vmem:[%s3711 + $0x28] sm:$0xe]
      %v5005 = vld [vmem:[%s3711 + $0x30] sm:$0xe]
      %v5006 = vld [vmem:[%s3711 + $0x38] sm:$0xe]
      %v5023 = vrot.slane %v4999, 5
      %v5024 = vrot.slane %v5023, 4
      %v5025 = vrot.slane %v4718, 5
      %v5026 = vsel %vm2406, %v5024, %v5025
      %v5027 = vrot.slane %v5000, 5
      %v5028 = vrot.slane %v5027, 4
      %v5029 = vrot.slane %v4720, 5
      %v5030 = vsel %vm2406, %v5028, %v5029
      %v5031 = vrot.slane %v5001, 5
      %v5032 = vrot.slane %v5031, 4
      %v5033 = vrot.slane %v4722, 5
      %v5034 = vsel %vm2406, %v5032, %v5033
      %v5035 = vrot.slane %v5002, 5
      %v5036 = vrot.slane %v5035, 4
      %v5037 = vrot.slane %v4724, 5
      %v5038 = vsel %vm2406, %v5036, %v5037
      %v5039 = vrot.slane %v5003, 5
      %v5040 = vrot.slane %v5039, 4
      %v5041 = vrot.slane %v4726, 5
      %v5042 = vsel %vm2406, %v5040, %v5041
      %v5043 = vrot.slane %v5004, 5
      %v5044 = vrot.slane %v5043, 4
      %v5045 = vrot.slane %v4728, 5
      %v5046 = vsel %vm2406, %v5044, %v5045
      %v5047 = vrot.slane %v5005, 5
      %v5048 = vrot.slane %v5047, 4
      %v5049 = vrot.slane %v4730, 5
      %v5050 = vsel %vm2406, %v5048, %v5049
      %v5051 = vrot.slane %v5006, 5
      %v5052 = vrot.slane %v5051, 4
      %v5053 = vrot.slane %v4732, 5
      %v5054 = vsel %vm2406, %v5052, %v5053
      %s5055 = scalar_lea.vmem %s2, 960
      %v5056 = vld [vmem:[%s5055] sm:$0xf]
      %v5057 = vld [vmem:[%s5055 + $0x4] sm:$0xf]
      %v5058 = vld [vmem:[%s5055 + $0x8] sm:$0xf]
      %v5059 = vld [vmem:[%s5055 + $0xc] sm:$0xf]
      %v5060 = vld [vmem:[%s5055 + $0x10] sm:$0xf]
      %v5061 = vld [vmem:[%s5055 + $0x14] sm:$0xf]
      %v5062 = vld [vmem:[%s5055 + $0x18] sm:$0xf]
      %v5063 = vld [vmem:[%s5055 + $0x1c] sm:$0xf]
      %v5064 = vld [vmem:[%s5055 + $0x20] sm:$0xf]
      %v5065 = vld [vmem:[%s5055 + $0x24] sm:$0xf]
      %v5066 = vld [vmem:[%s5055 + $0x28] sm:$0xf]
      %v5067 = vld [vmem:[%s5055 + $0x2c] sm:$0xf]
      %v5068 = vld [vmem:[%s5055 + $0x30] sm:$0xf]
      %v5069 = vld [vmem:[%s5055 + $0x34] sm:$0xf]
      %v5070 = vld [vmem:[%s5055 + $0x38] sm:$0xf]
      %v5071 = vld [vmem:[%s5055 + $0x3c] sm:$0xf]
      %v5072 = vunpack.c.l.b16 %v5026
      %v5073 = vunpack.c.l.b16 %v5030
      %v5074 = vunpack.c.l.b16 %v5034
      %v5075 = vunpack.c.l.b16 %v5038
      %v5076 = vunpack.c.l.b16 %v5042
      %v5077 = vunpack.c.l.b16 %v5046
      %v5078 = vunpack.c.l.b16 %v5050
      %v5079 = vunpack.c.l.b16 %v5054
      %v5080 = vpack.c.b16 %v5073, %v5072
      %v5081 = vpack.c.b16 %v5075, %v5074
      %v5082 = vpack.c.b16 %v5077, %v5076
      %v5083 = vpack.c.b16 %v5079, %v5078
      %v5104 = vunpack.c.l.b16 %v5056
      %v5105 = vunpack.c.l.b16 %v5057
      %v5106 = vunpack.c.l.b16 %v5058
      %v5107 = vunpack.c.l.b16 %v5059
      %v5108 = vunpack.c.l.b16 %v5060
      %v5109 = vunpack.c.l.b16 %v5061
      %v5110 = vunpack.c.l.b16 %v5062
      %v5111 = vunpack.c.l.b16 %v5063
      %v5112 = vunpack.c.l.b16 %v5064
      %v5113 = vunpack.c.l.b16 %v5065
      %v5114 = vunpack.c.l.b16 %v5066
      %v5115 = vunpack.c.l.b16 %v5067
      %v5116 = vunpack.c.l.b16 %v5068
      %v5117 = vunpack.c.l.b16 %v5069
      %v5118 = vunpack.c.l.b16 %v5070
      %v5119 = vunpack.c.l.b16 %v5071
      %v5120 = vpack.c.b16 %v5105, %v5104
      %v5121 = vpack.c.b16 %v5107, %v5106
      %v5122 = vpack.c.b16 %v5109, %v5108
      %v5123 = vpack.c.b16 %v5111, %v5110
      %v5124 = vpack.c.b16 %v5113, %v5112
      %v5125 = vpack.c.b16 %v5115, %v5114
      %v5126 = vpack.c.b16 %v5117, %v5116
      %v5127 = vpack.c.b16 %v5119, %v5118
      %5136 = vmatprep.subr.bf16.mxu0 0
      %5137 = vmatpush1.bf16.msra.mxu0 %v5120
      %5138 = vmatprep.subr.bf16.mxu0 0
      %5139 = vmatpush1.bf16.msra.mxu0 %v5121
      %5140 = vmatprep.subr.bf16.mxu0 0
      %5141 = vmatpush1.bf16.msra.mxu0 %v5122
      %5142 = vmatprep.subr.bf16.mxu0 0
      %5143 = vmatpush1.bf16.msra.mxu0 %v5123
      %5144 = vmatprep.subr.bf16.mxu0 0
      %5145 = vmatpush1.bf16.msra.mxu0 %v5124
      %5146 = vmatprep.subr.bf16.mxu0 0
      %5147 = vmatpush1.bf16.msra.mxu0 %v5125
      %5148 = vmatprep.subr.bf16.mxu0 0
      %5149 = vmatpush1.bf16.msra.mxu0 %v5126
      %5150 = vmatprep.subr.bf16.mxu0 0
      %5151 = vmatpush1.bf16.msra.mxu0 %v5127
      %5152 = vmatprep.subr.bf16.mxu0 0
      %5153 = vmatpush1.bf16.msra.mxu0 0
      %5154 = vmatprep.subr.bf16.mxu0 0
      %5155 = vmatpush1.bf16.msra.mxu0 0
      %5156 = vmatprep.subr.bf16.mxu0 0
      %5157 = vmatpush1.bf16.msra.mxu0 0
      %5158 = vmatprep.subr.bf16.mxu0 0
      %5159 = vmatpush1.bf16.msra.mxu0 0
      %5160 = vmatprep.subr.bf16.mxu0 0
      %5161 = vmatpush1.bf16.msra.mxu0 0
      %5162 = vmatprep.subr.bf16.mxu0 0
      %5163 = vmatpush1.bf16.msra.mxu0 0
      %5164 = vmatprep.subr.bf16.mxu0 0
      %5165 = vmatpush1.bf16.msra.mxu0 0
      %5166 = vmatprep.subr.bf16.mxu0 0
      %5167 = vmatpush1.bf16.msra.mxu0 0
      %5168 = vmatprep.mubr.bf16.mxu0 0
      %5169 = vmatmul.mubr.bf16.gmra.mrb[0].mxu0 %v5080
      %v5170 = vpop.f32.mrb[0].mxu0
      %v5171 = vadd.f32 0.0, %v5170
      %v5172 = vpop.f32.mrb[0].mxu0
      %v5173 = vpop.f32.mrb[0].mxu0
      %v5174 = vadd.f32 0.0, %v5173
      %v5175 = vpop.f32.mrb[0].mxu0
      %5176 = vmatprep.mubr.bf16.mxu0 0
      %5177 = vmatmul.mubr.bf16.gmra.mrb[0].mxu0 %v5081
      %v5178 = vpop.f32.mrb[0].mxu0
      %v5179 = vadd.f32 0.0, %v5178
      %v5180 = vpop.f32.mrb[0].mxu0
      %v5181 = vpop.f32.mrb[0].mxu0
      %v5182 = vadd.f32 0.0, %v5181
      %v5183 = vpop.f32.mrb[0].mxu0
      %5184 = vmatprep.mubr.bf16.mxu0 0
      %5185 = vmatmul.mubr.bf16.gmra.mrb[0].mxu0 %v5082
      %v5186 = vpop.f32.mrb[0].mxu0
      %v5187 = vadd.f32 0.0, %v5186
      %v5188 = vpop.f32.mrb[0].mxu0
      %v5189 = vpop.f32.mrb[0].mxu0
      %v5190 = vadd.f32 0.0, %v5189
      %v5191 = vpop.f32.mrb[0].mxu0
      %5192 = vmatprep.mubr.bf16.mxu0 0
      %5193 = vmatmul.mubr.bf16.gmra.mrb[0].mxu0 %v5083
      %v5194 = vpop.f32.mrb[0].mxu0
      %v5195 = vadd.f32 0.0, %v5194
      %v5196 = vpop.f32.mrb[0].mxu0
      %v5197 = vpop.f32.mrb[0].mxu0
      %v5198 = vadd.f32 0.0, %v5197
      %v5199 = vpop.f32.mrb[0].mxu0
      %5200 = vdwg.mxu0
      %v5201 = vadd.f32 %v4991, %v5171
      %v5202 = vadd.f32 %v4992, %v5174
      %v5203 = vadd.f32 %v4993, %v5179
      %v5204 = vadd.f32 %v4994, %v5182
      %v5205 = vadd.f32 %v4995, %v5187
      %v5206 = vadd.f32 %v4996, %v5190
      %v5207 = vadd.f32 %v4997, %v5195
      %v5208 = vadd.f32 %v4998, %v5198
      %v5209 = vpack.c.bf16 %v5202, %v5201
      %v5210 = vpack.c.bf16 %v5204, %v5203
      %v5211 = vpack.c.bf16 %v5206, %v5205
      %v5212 = vpack.c.bf16 %v5208, %v5207
      %v5217 = vunpack.c.l.b16 %v5209
      %v5218 = vunpack.c.h.b16 %v5209
      %v5219 = vunpack.c.l.b16 %v5210
      %v5220 = vunpack.c.h.b16 %v5210
      %v5221 = vunpack.c.l.b16 %v5211
      %v5222 = vunpack.c.h.b16 %v5211
      %v5223 = vunpack.c.l.b16 %v5212
      %v5224 = vunpack.c.h.b16 %v5212
      %v5225 = vpack.c.b16 %v5217, %v5217
      %v5226 = vpack.c.b16 %v5218, %v5218
      %v5227 = vpack.c.b16 %v5219, %v5219
      %v5228 = vpack.c.b16 %v5220, %v5220
      %v5229 = vpack.c.b16 %v5221, %v5221
      %v5230 = vpack.c.b16 %v5222, %v5222
      %v5231 = vpack.c.b16 %v5223, %v5223
      %v5232 = vpack.c.b16 %v5224, %v5224
      %s5241 = scalar_lea.vmem %s204, 96
      %5242 = vst [vmem:[%s5241] sm:$0xf] %v5225
      %5243 = vst [vmem:[%s5241 + $0x4] sm:$0xf] %v5226
      %5244 = vst [vmem:[%s5241 + $0x8] sm:$0xf] %v5227
      %5245 = vst [vmem:[%s5241 + $0xc] sm:$0xf] %v5228
      %5246 = vst [vmem:[%s5241 + $0x10] sm:$0xf] %v5229
      %5247 = vst [vmem:[%s5241 + $0x14] sm:$0xf] %v5230
      %5248 = vst [vmem:[%s5241 + $0x18] sm:$0xf] %v5231
      %5249 = vst [vmem:[%s5241 + $0x1c] sm:$0xf] %v5232
      %v5250 = vadd.f32 %v5201, %v5202
      %v5251 = vadd.f32 %v5250, %v5203
      %v5252 = vadd.f32 %v5251, %v5204
      %v5253 = vadd.f32 %v5252, %v5205
      %v5254 = vadd.f32 %v5253, %v5206
      %v5255 = vadd.f32 %v5254, %v5207
      %v5256 = vadd.f32 %v5255, %v5208
      %v5257 = vrot.slane %v5256, 4
      %v5258 = vadd.f32 %v5256, %v5257
      %v5259 = vrot.slane %v5258, 2
      %v5260 = vadd.f32 %v5258, %v5259
      %v5261 = vrot.slane %v5260, 1
      %v5262 = vadd.f32 %v5260, %v5261
      %v5263 = vadd.f32 %v4218, %v5262
      %v5264 = vmul.f32 %v5201, %v5201
      %v5265 = vmul.f32 %v5202, %v5202
      %v5266 = vmul.f32 %v5203, %v5203
      %v5267 = vmul.f32 %v5204, %v5204
      %v5268 = vmul.f32 %v5205, %v5205
      %v5269 = vmul.f32 %v5206, %v5206
      %v5270 = vmul.f32 %v5207, %v5207
      %v5271 = vmul.f32 %v5208, %v5208
      %v5272 = vadd.f32 %v5264, %v5265
      %v5273 = vadd.f32 %v5272, %v5266
      %v5274 = vadd.f32 %v5273, %v5267
      %v5275 = vadd.f32 %v5274, %v5268
      %v5276 = vadd.f32 %v5275, %v5269
      %v5277 = vadd.f32 %v5276, %v5270
      %v5278 = vadd.f32 %v5277, %v5271
      %v5279 = vrot.slane %v5278, 4
      %v5280 = vadd.f32 %v5278, %v5279
      %v5281 = vrot.slane %v5280, 2
      %v5282 = vadd.f32 %v5280, %v5281
      %v5283 = vrot.slane %v5282, 1
      %v5284 = vadd.f32 %v5282, %v5283
      %v5285 = vadd.f32 %v4240, %v5284
      %5286 = vst [vmem:[%s208] sm:$0xff] 0.0
      %5287 = vst [vmem:[%s208] sm:$0x1] %v5263
      %5288 = vst [vmem:[%s208 + $0x1] sm:$0x1] %v5285
      %p5289 = scmp.lt.s32.totalorder %s16, 1
      %s5290 = scalar_select %p5289, %s16, 1
      %s5291 = smul.addr %s5290, 32
      %s5292 = smul.addr %s5291, 4
      %s5293 = scalar_lea.vmem %s3, %s5292
      %p5294 = scmp.lt.s32.totalorder %s16, 1
      %s5295 = scalar_select %p5294, %s16, 1
      %s5296 = smul.addr %s5295, 8
      %s5297 = scalar_lea.vmem %s4, %s5296
      // Predicated region
      $region33: #{unet_innermost_block.1} parent=31 // pred_check
        %p5298 = pneg %p102
      $region34: #{unet_innermost_block.1} parent=31 // pred_check_branch
        %5300 = sbr.rel (%p5298) target = $region36
      $region35: #{unet_innermost_block.1} parent=31 // pred_region
        _
      $region36: #{unet_innermost_block.1} parent=31 // pred_fallthru
        _
      // Predicated region
      $region37: #{unet_innermost_block.1} parent=31 // pred_check
        %p5301 = pneg %p128
      $region38: #{unet_innermost_block.1} parent=31 // pred_check_branch
        %5303 = sbr.rel (%p5301) target = $region40
      $region39: #{unet_innermost_block.1} parent=31 // pred_region
        _
      $region40: #{unet_innermost_block.1} parent=31 // pred_fallthru
        _
    $region32: #{unet_innermost_block.1} parent=5 // pred_fallthru
      _
    %p5304 = scmp.le.s32.totalorder 2, %s11
    // Predicated region
    $region41: #{unet_innermost_block.1} parent=5 // pred_check
      %p5305 = pneg %p5304
    $region42: #{unet_innermost_block.1} parent=5 // pred_check_branch
      %5307 = sbr.rel (%p5305) target = $region44
    $region43: #{unet_innermost_block.1} parent=5 // pred_region
      %s5308 = ssub.s32 %s11, 2
      // Predicated region
      $region45: #{unet_innermost_block.1} parent=43 // pred_check
        %p5309 = pneg %p108
      $region46: #{unet_innermost_block.1} parent=43 // pred_check_branch
        %5311 = sbr.rel (%p5309) target = $region48
      $region47: #{unet_innermost_block.1} parent=43 // pred_region
        %p5312 = scmp.lt.s32.totalorder %s17, 1
        %s5313 = scalar_select %p5312, %s17, 1
        %s5314 = smul.addr %s5313, 32
        %s5315 = smul.addr %s5314, 4
        %s5316 = scalar_lea.vmem %s3, %s5315
      $region48: #{unet_innermost_block.1} parent=43 // pred_fallthru
        _
      // Predicated region
      $region49: #{unet_innermost_block.1} parent=43 // pred_check
        %p5317 = pneg %p134
      $region50: #{unet_innermost_block.1} parent=43 // pred_check_branch
        %5319 = sbr.rel (%p5317) target = $region52
      $region51: #{unet_innermost_block.1} parent=43 // pred_region
        %p5320 = scmp.lt.s32.totalorder %s17, 1
        %s5321 = scalar_select %p5320, %s17, 1
        %s5322 = smul.addr %s5321, 8
        %s5323 = scalar_lea.vmem %s4, %s5322
      $region52: #{unet_innermost_block.1} parent=43 // pred_fallthru
        _
    $region44: #{unet_innermost_block.1} parent=5 // pred_fallthru
      _
  $region6: #{unet_innermost_block.1} parent=0 // loop_footer
    %s15 = sadd.s32 1, %s11
  $region7: #{unet_innermost_block.1} parent=0 // loop_footer_branch
    %10 = sbr.rel target = $region3
  $region8: #{unet_innermost_block.1} parent=0 // loop_exit
    _

</llo_original>
